<compile_context>
chip_gen: v6e
topology: v6e:2x2x1
jax: 0.10.0
libtpu: 0.0.40
codegen_flags: <defaults>
</compile_context>

<pallas_src>
import jax
import jax.numpy as jnp
from jax.experimental import pallas as pl
from jax.experimental.pallas import tpu as pltpu

# ---------------- model hyper-parameters (consistent with the module) -------
B = 2                 # batch
C, H, W = 4, 16, 16   # image NCHW
IMG_FLAT = C * H * W  # 1024
NUM_DIM = 16          # numeric-feature input dim
FEAT = 128            # img_model / num_model output dim
LSTM_IN = 256         # lstm_input_size
HID = 256             # hidden_size
NUM_HEADS = 4         # attention collapses exactly for seq_len == 1
W_IMG1, W_IMG2, W_IMG3, W_NUM = 0.1, 0.4, 0.5, 0.0
W_SUM = W_IMG1 + W_IMG2 + W_IMG3 + W_NUM
HAS_NUM = (W_NUM != 0.0)   # zero-weighted num branch is skipped entirely
BIAS_W = 3 * HID           # packed-bias row width (widest row: LSTM gates)
N_LSTM = 3                 # LSTM layers


# --------------------------------- kernel -----------------------------------
def fusion_kernel(*refs):
    """Single-invocation fused forward.

    Small operands live in VMEM; the packed LSTM weights stay in HBM and are
    streamed in with manual async copies that overlap the earlier compute.
    """
    f32 = jnp.float32
    bf16 = jnp.bfloat16

    if HAS_NUM:
        (x_img_ref, x_num_ref, w_img_ref, w_num_ref, w_nad_ref, w_emb_ref,
         wih_hbm_ref, bias_ref, out_ref, wih_buf, sem) = refs
    else:
        (x_img_ref, w_img_ref, w_emb_ref,
         wih_hbm_ref, bias_ref, out_ref, wih_buf, sem) = refs
        x_num_ref = w_num_ref = w_nad_ref = None

    # ---- kick off all LSTM weight-slab DMAs now; they run while the image
    #      branch computes, and each layer waits only on its own slab.
    copies = [pltpu.make_async_copy(wih_hbm_ref.at[k], wih_buf.at[k], sem.at[k])
              for k in range(N_LSTM)]
    for cp in copies:
        cp.start()

    def bdot(x, w):
        # native bf16 x bf16 MXU matmul, f32 accumulation
        return jnp.dot(x.astype(bf16), w, preferred_element_type=f32)

    # packed biases / folded head (one operand instead of many tiny ones)
    b_img = bias_ref[0:1, 0:FEAT]
    b_emb = bias_ref[1:2, 0:LSTM_IN]          # pre-scaled by (W1+W2+W3)/W_SUM
    b_lstm = (bias_ref[2:3, :], bias_ref[3:4, :], bias_ref[4:5, :])
    w_head = bias_ref[5:6, 0:HID]             # folded head row (f32)
    b_head = bias_ref[5:6, HID:HID + 1]       # folded head bias (scalar)

    # ---- shared image feature extractor: ONE matmul for all three images ----
    bsz = x_img_ref.shape[0] // 3
    f_img = jnp.maximum(bdot(x_img_ref[...], w_img_ref[...]) + b_img, 0.0)

    # weighted fusion folded in front of the shared embedding matmul (exact:
    # ReLU already applied, embedding_adjustment is linear; 1/W_SUM folded in)
    fw = ((W_IMG1 / W_SUM) * f_img[0 * bsz:1 * bsz]
          + (W_IMG2 / W_SUM) * f_img[1 * bsz:2 * bsz]
          + (W_IMG3 / W_SUM) * f_img[2 * bsz:3 * bsz])                  # (B,128)
    combined = bdot(fw, w_emb_ref[...]) + b_emb                         # (B,256)

    if HAS_NUM:
        b_num = bias_ref[6:7, 0:FEAT]
        b_nad = bias_ref[7:8, 0:LSTM_IN]      # pre-scaled by W_NUM / W_SUM
        f_num = jnp.maximum(bdot(x_num_ref[...], w_num_ref[...]) + b_num, 0.0)
        combined = combined + bdot(f_num, w_nad_ref[...]) + b_nad

    # ---- 3-layer LSTM over a length-1 sequence, zero initial state ----------
    # Forget-gate columns were sliced out in the wrapper (c0 == 0 => dead);
    # remaining gate order is (i, g, o).
    h = combined
    for k in range(N_LSTM):
        copies[k].wait()                       # slab k resident in VMEM
        gates = bdot(h, wih_buf[k]) + b_lstm[k]                         # (B,768)
        i_g = jax.nn.sigmoid(gates[:, 0:HID])
        g_g = jnp.tanh(gates[:, HID:2 * HID])
        o_g = jax.nn.sigmoid(gates[:, 2 * HID:3 * HID])
        h = o_g * jnp.tanh(i_g * g_g)

    # ---- folded head (seq-len-1 attention + dense/BN/dropout): VPU + reduce --
    out_ref[...] = jnp.sum(h * w_head, axis=1, keepdims=True) + b_head  # (B,1)


# ------------------------------ parameters ----------------------------------
def init_params(key):
    """Deterministic synthetic parameters (shapes match the PyTorch module)."""
    keys = jax.random.split(key, 24)
    k = iter(keys)

    def mat(shape, scale=0.05):
        return jax.random.normal(next(k), shape, jnp.float32) * scale

    def vec(n):
        return jax.random.normal(next(k), (1, n), jnp.float32) * 0.05

    def q(x):  # round to bf16-representable values (stored bf16 in HBM)
        return x.astype(jnp.bfloat16).astype(jnp.float32)

    eps = 1e-5
    params = dict(
        w_img=q(mat((IMG_FLAT, FEAT))), b_img=vec(FEAT),
        w_num=q(mat((NUM_DIM, FEAT))),  b_num=vec(FEAT),
        w_emb=q(mat((FEAT, LSTM_IN))),  b_emb=vec(LSTM_IN),
        w_nad=q(mat((FEAT, LSTM_IN))),  b_nad=vec(LSTM_IN),
        # LSTM: b = b_ih + b_hh folded; PyTorch gate order (i, f, g, o)
        w_ih0=q(mat((LSTM_IN, 4 * HID))), b_l0=vec(4 * HID),
        w_ih1=q(mat((HID, 4 * HID))),     b_l1=vec(4 * HID),
        w_ih2=q(mat((HID, 4 * HID))),     b_l2=vec(4 * HID),
        w_v=mat((HID, HID)), b_v=vec(HID),
        w_o=mat((HID, HID)), b_o=vec(HID),
        w_d1=mat((HID, 128)), b_d1=vec(128),
        bn1s=jnp.full((1, 128), 1.0 / jnp.sqrt(1.0 + eps), jnp.float32),
        bn1b=jnp.zeros((1, 128), jnp.float32),
        w_d2=mat((128, 64)), b_d2=vec(64),
        bn2s=jnp.full((1, 64), 1.0 / jnp.sqrt(1.0 + eps), jnp.float32),
        bn2b=jnp.zeros((1, 64), jnp.float32),
        w_d3=mat((64, 1)), b_d3=vec(1),
    )
    return params


def prepare_kernel_params(p):
    """One-time wrapper-side folding / slicing / packing of the parameters."""
    f32 = jnp.float32
    bf16 = jnp.bfloat16

    def pad_row(v):
        v = v.reshape(-1).astype(f32)
        return jnp.pad(v, (0, BIAS_W - v.shape[0]))[None, :]

    # -- LSTM: drop dead forget-gate columns (c0 == 0); keep (i, g, o) --
    def slice_gates(w, b):
        w_igo = jnp.concatenate([w[:, 0:HID], w[:, 2 * HID:4 * HID]], axis=1)
        b_igo = jnp.concatenate([b[:, 0:HID], b[:, 2 * HID:4 * HID]], axis=1)
        return w_igo.astype(bf16), b_igo

    w_ih0, b_l0 = slice_gates(p["w_ih0"], p["b_l0"])
    w_ih1, b_l1 = slice_gates(p["w_ih1"], p["b_l1"])
    w_ih2, b_l2 = slice_gates(p["w_ih2"], p["b_l2"])
    # single contiguous (3, 256, 768) bf16 slab, streamed from HBM in-kernel
    wih_pack = jnp.stack([w_ih0, w_ih1, w_ih2], axis=0)

    # -- fold seq-len-1 attention + dense/BN(eval)/dropout(identity) head into
    #    a single affine map (exact: no nonlinearity after the last LSTM h) --
    w_vo = p["w_v"] @ p["w_o"]
    b_vo = p["b_v"] @ p["w_o"] + p["b_o"]
    wd1s = p["w_d1"] * p["bn1s"]
    w1 = w_vo @ wd1s
    b1 = b_vo @ wd1s + p["b_d1"] * p["bn1s"] + p["bn1b"]
    wd2s = p["w_d2"] * p["bn2s"]
    w2 = w1 @ wd2s
    b2 = b1 @ wd2s + p["b_d2"] * p["bn2s"] + p["bn2b"]
    w_head = (w2 @ p["w_d3"]).astype(f32)                  # (256, 1)
    b_head = (b2 @ p["w_d3"] + p["b_d3"]).astype(f32)      # (1, 1)

    # -- packed bias / head array (kept f32 for accuracy) --
    rows = [
        pad_row(p["b_img"]),
        pad_row(p["b_emb"] * ((W_IMG1 + W_IMG2 + W_IMG3) / W_SUM)),
        pad_row(b_l0), pad_row(b_l1), pad_row(b_l2),
        pad_row(jnp.concatenate([w_head.reshape(-1), b_head.reshape(-1)])),
    ]
    kp = dict(
        w_img=p["w_img"].astype(bf16),
        w_emb=p["w_emb"].astype(bf16),
        wih_pack=wih_pack,
    )
    if HAS_NUM:
        rows.append(pad_row(p["b_num"]))
        rows.append(pad_row(p["b_nad"] * (W_NUM / W_SUM)))
        kp["w_num"] = p["w_num"].astype(bf16)
        kp["w_nad"] = (p["w_nad"] * (W_NUM / W_SUM)).astype(bf16)
    kp["bias_pack"] = jnp.concatenate(rows, axis=0)
    return kp


# --------------------------------- wrapper ----------------------------------
def fusion_forward(kp, img1, img2, img3, num_features):
    b = img1.shape[0]
    # stack the three images -> one shared-extractor matmul; bf16 activations
    x_img = jnp.concatenate(
        [img1.reshape(b, -1), img2.reshape(b, -1), img3.reshape(b, -1)],
        axis=0).astype(jnp.bfloat16)                        # (3B, C*H*W)

    vmem = pl.BlockSpec(memory_space=pltpu.MemorySpace.VMEM)
    hbm = pl.BlockSpec(memory_space=pl.ANY)   # LSTM slab stays in HBM, manual DMA

    if HAS_NUM:
        args = (x_img, num_features.astype(jnp.bfloat16),
                kp["w_img"], kp["w_num"], kp["w_nad"], kp["w_emb"],
                kp["wih_pack"], kp["bias_pack"])
        in_specs = [vmem, vmem, vmem, vmem, vmem, vmem, hbm, vmem]
    else:
        args = (x_img, kp["w_img"], kp["w_emb"],
                kp["wih_pack"], kp["bias_pack"])
        in_specs = [vmem, vmem, vmem, hbm, vmem]

    # bf16 MXU flop / byte accounting for the scheduler hint
    flops = 2 * (3 * b * IMG_FLAT * FEAT          # stacked image extractor
                 + b * FEAT * LSTM_IN             # shared embedding matmul
                 + 3 * b * HID * (3 * HID)        # 3 LSTM layers, (i,g,o) gates
                 + b * HID)                       # folded head (VPU reduce)
    if HAS_NUM:
        flops += 2 * (b * NUM_DIM * FEAT + b * FEAT * LSTM_IN)
    transcendentals = 3 * b * 4 * HID             # sigmoid/tanh in LSTM layers
    bytes_accessed = sum(int(a.size) * a.dtype.itemsize for a in args) + b * 4

    return pl.pallas_call(
        fusion_kernel,
        out_shape=jax.ShapeDtypeStruct((b, 1), jnp.float32),
        in_specs=in_specs,
        out_specs=vmem,
        scratch_shapes=[
            pltpu.VMEM((N_LSTM, LSTM_IN, 3 * HID), jnp.bfloat16),  # slab buffer
            pltpu.SemaphoreType.DMA((N_LSTM,)),                    # per-slab sems
        ],
        cost_estimate=pl.CostEstimate(
            flops=flops, transcendentals=transcendentals,
            bytes_accessed=bytes_accessed),
    )(*args)


# ------------------------- pure-JAX reference (sanity) ----------------------
def fusion_reference(params, img1, img2, img3, num_features):
    """Unfolded eval-mode forward matching the PyTorch module structure."""
    p = params
    b = img1.shape[0]

    def dense(x, w, bias):
        return x @ w + bias

    f1 = jax.nn.relu(dense(img1.reshape(b, -1), p["w_img"], p["b_img"]))
    f2 = jax.nn.relu(dense(img2.reshape(b, -1), p["w_img"], p["b_img"]))
    f3 = jax.nn.relu(dense(img3.reshape(b, -1), p["w_img"], p["b_img"]))
    fn = jax.nn.relu(dense(num_features, p["w_num"], p["b_num"]))

    combined = (dense(f1, p["w_emb"], p["b_emb"]) * W_IMG1
                + dense(f2, p["w_emb"], p["b_emb"]) * W_IMG2
                + dense(f3, p["w_emb"], p["b_emb"]) * W_IMG3
                + dense(fn, p["w_nad"], p["b_nad"]) * W_NUM) / W_SUM

    h = combined
    for wih, bl in ((p["w_ih0"], p["b_l0"]),
                    (p["w_ih1"], p["b_l1"]),
                    (p["w_ih2"], p["b_l2"])):
        gates = h @ wih + bl                      # gate order i, f, g, o; c0 = 0
        i_g = jax.nn.sigmoid(gates[:, 0 * HID:1 * HID])
        g_g = jnp.tanh(gates[:, 2 * HID:3 * HID])
        o_g = jax.nn.sigmoid(gates[:, 3 * HID:4 * HID])
        h = o_g * jnp.tanh(i_g * g_g)

    v = dense(h, p["w_v"], p["b_v"])              # seq_len == 1 -> attn == Wo(Wv h)
    a = dense(v, p["w_o"], p["b_o"])

    d1 = dense(a, p["w_d1"], p["b_d1"]) * p["bn1s"] + p["bn1b"]
    d2 = dense(d1, p["w_d2"], p["b_d2"]) * p["bn2s"] + p["bn2b"]
    return dense(d2, p["w_d3"], p["b_d3"])


if __name__ == "__main__":
    key = jax.random.PRNGKey(0)
    k_params, k1, k2, k3, k4 = jax.random.split(key, 5)

    params = init_params(k_params)
    kparams = prepare_kernel_params(params)

    img1 = jax.random.normal(k1, (B, C, H, W), jnp.float32)
    img2 = jax.random.normal(k2, (B, C, H, W), jnp.float32)
    img3 = jax.random.normal(k3, (B, C, H, W), jnp.float32)
    num_features = jax.random.normal(k4, (B, NUM_DIM), jnp.float32)

    out = fusion_forward(kparams, img1, img2, img3, num_features)
    out = jax.block_until_ready(out)

    ref = fusion_reference(params, img1, img2, img3, num_features)
    assert out.shape == (B, 1)
    # bf16 activations + bf16 weights (f32 accumulate) vs f32 reference
    assert jnp.allclose(out, ref, atol=1e-2, rtol=1e-2), (out, ref)

    print("KERNEL_OK")
</pallas_src>

<mosaic_0001>
module attributes {stable_mosaic.version = 11 : i64} {
  func.func @fusion_kernel(%arg0: memref<6x1024xbf16, #tpu.memory_space<vmem>>, %arg1: memref<1024x128xbf16, #tpu.memory_space<vmem>>, %arg2: memref<128x256xbf16, #tpu.memory_space<vmem>>, %arg3: memref<3x256x768xbf16, #tpu.memory_space<any>>, %arg4: memref<6x768xf32, #tpu.memory_space<vmem>>, %arg5: memref<2x1xf32, #tpu.memory_space<vmem>>, %arg6: memref<3x256x768xbf16, #tpu.memory_space<vmem>>, %arg7: memref<3x!tpu.dma_semaphore, #tpu.memory_space<semaphore_mem>>) attributes {dimension_semantics = [], scalar_prefetch = 0 : i64, scratch_operands = 2 : i64, tpu.core_type = #tpu.core_type<tc>} {
    %c0_i32 = arith.constant 0 : i32
    %c0_i32_0 = arith.constant 0 : i32
    %c0_i32_1 = arith.constant 0 : i32
    %c0_i32_2 = arith.constant 0 : i32
    %c0_i32_3 = arith.constant 0 : i32
    %0 = tpu.memref_slice %arg3[%c0_i32, %c0_i32_2, %c0_i32_3] : memref<3x256x768xbf16, #tpu.memory_space<any>> -> memref<1x256x768xbf16, #tpu.memory_space<any>>
    %1 = tpu.memref_squeeze %0 : memref<1x256x768xbf16, #tpu.memory_space<any>> -> memref<256x768xbf16, #tpu.memory_space<any>>
    %c0_i32_4 = arith.constant 0 : i32
    %c0_i32_5 = arith.constant 0 : i32
    %2 = tpu.memref_slice %arg6[%c0_i32_0, %c0_i32_4, %c0_i32_5] : memref<3x256x768xbf16, #tpu.memory_space<vmem>> -> memref<1x256x768xbf16, #tpu.memory_space<vmem>>
    %3 = tpu.memref_squeeze %2 : memref<1x256x768xbf16, #tpu.memory_space<vmem>> -> memref<256x768xbf16, #tpu.memory_space<vmem>>
    %4 = tpu.memref_slice %arg7[%c0_i32_1] : memref<3x!tpu.dma_semaphore, #tpu.memory_space<semaphore_mem>> -> memref<1x!tpu.dma_semaphore, #tpu.memory_space<semaphore_mem>>
    %5 = tpu.memref_squeeze %4 : memref<1x!tpu.dma_semaphore, #tpu.memory_space<semaphore_mem>> -> memref<!tpu.dma_semaphore, #tpu.memory_space<semaphore_mem>>
    tpu.enqueue_dma source(%1 : memref<256x768xbf16, #tpu.memory_space<any>>) target(%3 : memref<256x768xbf16, #tpu.memory_space<vmem>>) target_semaphore(%5 : memref<!tpu.dma_semaphore, #tpu.memory_space<semaphore_mem>>)
    %c1_i32 = arith.constant 1 : i32
    %c1_i32_6 = arith.constant 1 : i32
    %c1_i32_7 = arith.constant 1 : i32
    %c0_i32_8 = arith.constant 0 : i32
    %c0_i32_9 = arith.constant 0 : i32
    %6 = tpu.memref_slice %arg3[%c1_i32, %c0_i32_8, %c0_i32_9] : memref<3x256x768xbf16, #tpu.memory_space<any>> -> memref<1x256x768xbf16, #tpu.memory_space<any>>
    %7 = tpu.memref_squeeze %6 : memref<1x256x768xbf16, #tpu.memory_space<any>> -> memref<256x768xbf16, #tpu.memory_space<any>>
    %c0_i32_10 = arith.constant 0 : i32
    %c0_i32_11 = arith.constant 0 : i32
    %8 = tpu.memref_slice %arg6[%c1_i32_6, %c0_i32_10, %c0_i32_11] : memref<3x256x768xbf16, #tpu.memory_space<vmem>> -> memref<1x256x768xbf16, #tpu.memory_space<vmem>>
    %9 = tpu.memref_squeeze %8 : memref<1x256x768xbf16, #tpu.memory_space<vmem>> -> memref<256x768xbf16, #tpu.memory_space<vmem>>
    %10 = tpu.memref_slice %arg7[%c1_i32_7] : memref<3x!tpu.dma_semaphore, #tpu.memory_space<semaphore_mem>> -> memref<1x!tpu.dma_semaphore, #tpu.memory_space<semaphore_mem>>
    %11 = tpu.memref_squeeze %10 : memref<1x!tpu.dma_semaphore, #tpu.memory_space<semaphore_mem>> -> memref<!tpu.dma_semaphore, #tpu.memory_space<semaphore_mem>>
    tpu.enqueue_dma source(%7 : memref<256x768xbf16, #tpu.memory_space<any>>) target(%9 : memref<256x768xbf16, #tpu.memory_space<vmem>>) target_semaphore(%11 : memref<!tpu.dma_semaphore, #tpu.memory_space<semaphore_mem>>)
    %c2_i32 = arith.constant 2 : i32
    %c2_i32_12 = arith.constant 2 : i32
    %c2_i32_13 = arith.constant 2 : i32
    %c0_i32_14 = arith.constant 0 : i32
    %c0_i32_15 = arith.constant 0 : i32
    %12 = tpu.memref_slice %arg3[%c2_i32, %c0_i32_14, %c0_i32_15] : memref<3x256x768xbf16, #tpu.memory_space<any>> -> memref<1x256x768xbf16, #tpu.memory_space<any>>
    %13 = tpu.memref_squeeze %12 : memref<1x256x768xbf16, #tpu.memory_space<any>> -> memref<256x768xbf16, #tpu.memory_space<any>>
    %c0_i32_16 = arith.constant 0 : i32
    %c0_i32_17 = arith.constant 0 : i32
    %14 = tpu.memref_slice %arg6[%c2_i32_12, %c0_i32_16, %c0_i32_17] : memref<3x256x768xbf16, #tpu.memory_space<vmem>> -> memref<1x256x768xbf16, #tpu.memory_space<vmem>>
    %15 = tpu.memref_squeeze %14 : memref<1x256x768xbf16, #tpu.memory_space<vmem>> -> memref<256x768xbf16, #tpu.memory_space<vmem>>
    %16 = tpu.memref_slice %arg7[%c2_i32_13] : memref<3x!tpu.dma_semaphore, #tpu.memory_space<semaphore_mem>> -> memref<1x!tpu.dma_semaphore, #tpu.memory_space<semaphore_mem>>
    %17 = tpu.memref_squeeze %16 : memref<1x!tpu.dma_semaphore, #tpu.memory_space<semaphore_mem>> -> memref<!tpu.dma_semaphore, #tpu.memory_space<semaphore_mem>>
    tpu.enqueue_dma source(%13 : memref<256x768xbf16, #tpu.memory_space<any>>) target(%15 : memref<256x768xbf16, #tpu.memory_space<vmem>>) target_semaphore(%17 : memref<!tpu.dma_semaphore, #tpu.memory_space<semaphore_mem>>)
    %c0 = arith.constant 0 : index
    %c0_18 = arith.constant 0 : index
    %18 = vector.load %arg4[%c0, %c0_18] : memref<6x768xf32, #tpu.memory_space<vmem>>, vector<1x128xf32>
    %c1 = arith.constant 1 : index
    %c0_19 = arith.constant 0 : index
    %19 = vector.load %arg4[%c1, %c0_19] : memref<6x768xf32, #tpu.memory_space<vmem>>, vector<1x256xf32>
    %c2 = arith.constant 2 : index
    %c0_20 = arith.constant 0 : index
    %20 = vector.load %arg4[%c2, %c0_20] : memref<6x768xf32, #tpu.memory_space<vmem>>, vector<1x768xf32>
    %c3 = arith.constant 3 : index
    %c0_21 = arith.constant 0 : index
    %21 = vector.load %arg4[%c3, %c0_21] : memref<6x768xf32, #tpu.memory_space<vmem>>, vector<1x768xf32>
    %c4 = arith.constant 4 : index
    %c0_22 = arith.constant 0 : index
    %22 = vector.load %arg4[%c4, %c0_22] : memref<6x768xf32, #tpu.memory_space<vmem>>, vector<1x768xf32>
    %c5 = arith.constant 5 : index
    %c0_23 = arith.constant 0 : index
    %23 = vector.load %arg4[%c5, %c0_23] : memref<6x768xf32, #tpu.memory_space<vmem>>, vector<1x256xf32>
    %c5_24 = arith.constant 5 : index
    %c256 = arith.constant 256 : index
    %24 = vector.load %arg4[%c5_24, %c256] : memref<6x768xf32, #tpu.memory_space<vmem>>, vector<1x1xf32>
    %c0_25 = arith.constant 0 : index
    %c0_26 = arith.constant 0 : index
    %25 = vector.load %arg0[%c0_25, %c0_26] : memref<6x1024xbf16, #tpu.memory_space<vmem>>, vector<6x1024xbf16>
    %c0_27 = arith.constant 0 : index
    %c0_28 = arith.constant 0 : index
    %26 = vector.load %arg1[%c0_27, %c0_28] : memref<1024x128xbf16, #tpu.memory_space<vmem>>, vector<1024x128xbf16>
    %cst = arith.constant dense<0.000000e+00> : vector<6x128xf32>
    %27 = tpu.matmul %25, %26, %cst {dimension_numbers = #tpu.dot_dimension_numbers<[1], [0], [0], [1], [0, 0, 1, 1], [], []>} : vector<6x1024xbf16>, vector<1024x128xbf16>, vector<6x128xf32> -> vector<6x128xf32>
    %28 = vector.broadcast %18 : vector<1x128xf32> to vector<6x128xf32>
    %29 = arith.addf %27, %28 : vector<6x128xf32>
    %cst_29 = arith.constant 0.000000e+00 : f32
    %30 = vector.broadcast %cst_29 : f32 to vector<6x128xf32>
    %31 = arith.maximumf %29, %30 : vector<6x128xf32>
    %32 = vector.extract_strided_slice %31 {offsets = [0, 0], sizes = [2, 128], strides = [1, 1]} : vector<6x128xf32> to vector<2x128xf32>
    %cst_30 = arith.constant 1.000000e-01 : f32
    %33 = vector.broadcast %cst_30 : f32 to vector<2x128xf32>
    %34 = arith.mulf %33, %32 : vector<2x128xf32>
    %35 = vector.extract_strided_slice %31 {offsets = [2, 0], sizes = [2, 128], strides = [1, 1]} : vector<6x128xf32> to vector<2x128xf32>
    %cst_31 = arith.constant 4.000000e-01 : f32
    %36 = vector.broadcast %cst_31 : f32 to vector<2x128xf32>
    %37 = arith.mulf %36, %35 : vector<2x128xf32>
    %38 = arith.addf %34, %37 : vector<2x128xf32>
    %39 = vector.extract_strided_slice %31 {offsets = [4, 0], sizes = [2, 128], strides = [1, 1]} : vector<6x128xf32> to vector<2x128xf32>
    %cst_32 = arith.constant 5.000000e-01 : f32
    %40 = vector.broadcast %cst_32 : f32 to vector<2x128xf32>
    %41 = arith.mulf %40, %39 : vector<2x128xf32>
    %42 = arith.addf %38, %41 : vector<2x128xf32>
    %c0_33 = arith.constant 0 : index
    %c0_34 = arith.constant 0 : index
    %43 = vector.load %arg2[%c0_33, %c0_34] : memref<128x256xbf16, #tpu.memory_space<vmem>>, vector<128x256xbf16>
    %44 = arith.truncf %42 : vector<2x128xf32> to vector<2x128xbf16>
    %cst_35 = arith.constant dense<0.000000e+00> : vector<2x256xf32>
    %45 = tpu.matmul %44, %43, %cst_35 {dimension_numbers = #tpu.dot_dimension_numbers<[1], [0], [0], [1], [0, 0, 1, 1], [], []>} : vector<2x128xbf16>, vector<128x256xbf16>, vector<2x256xf32> -> vector<2x256xf32>
    %46 = vector.broadcast %19 : vector<1x256xf32> to vector<2x256xf32>
    %47 = arith.addf %45, %46 : vector<2x256xf32>
    %c0_i32_36 = arith.constant 0 : i32
    %c0_i32_37 = arith.constant 0 : i32
    %c0_i32_38 = arith.constant 0 : i32
    %c0_i32_39 = arith.constant 0 : i32
    %c0_i32_40 = arith.constant 0 : i32
    %48 = tpu.memref_slice %arg3[%c0_i32_36, %c0_i32_39, %c0_i32_40] : memref<3x256x768xbf16, #tpu.memory_space<any>> -> memref<1x256x768xbf16, #tpu.memory_space<any>>
    %49 = tpu.memref_squeeze %48 : memref<1x256x768xbf16, #tpu.memory_space<any>> -> memref<256x768xbf16, #tpu.memory_space<any>>
    %c0_i32_41 = arith.constant 0 : i32
    %c0_i32_42 = arith.constant 0 : i32
    %50 = tpu.memref_slice %arg6[%c0_i32_37, %c0_i32_41, %c0_i32_42] : memref<3x256x768xbf16, #tpu.memory_space<vmem>> -> memref<1x256x768xbf16, #tpu.memory_space<vmem>>
    %51 = tpu.memref_squeeze %50 : memref<1x256x768xbf16, #tpu.memory_space<vmem>> -> memref<256x768xbf16, #tpu.memory_space<vmem>>
    %52 = tpu.memref_slice %arg7[%c0_i32_38] : memref<3x!tpu.dma_semaphore, #tpu.memory_space<semaphore_mem>> -> memref<1x!tpu.dma_semaphore, #tpu.memory_space<semaphore_mem>>
    %53 = tpu.memref_squeeze %52 : memref<1x!tpu.dma_semaphore, #tpu.memory_space<semaphore_mem>> -> memref<!tpu.dma_semaphore, #tpu.memory_space<semaphore_mem>>
    tpu.wait_dma2 semaphore(%53 : memref<!tpu.dma_semaphore, #tpu.memory_space<semaphore_mem>>) src(%49 : memref<256x768xbf16, #tpu.memory_space<any>>) dst(%51 : memref<256x768xbf16, #tpu.memory_space<vmem>>)
    %c0_43 = arith.constant 0 : index
    %c0_44 = arith.constant 0 : index
    %c0_45 = arith.constant 0 : index
    %54 = vector.load %arg6[%c0_43, %c0_44, %c0_45] : memref<3x256x768xbf16, #tpu.memory_space<vmem>>, vector<1x256x768xbf16>
    %55 = vector.shape_cast %54 : vector<1x256x768xbf16> to vector<256x768xbf16>
    %56 = arith.truncf %47 : vector<2x256xf32> to vector<2x256xbf16>
    %cst_46 = arith.constant dense<0.000000e+00> : vector<2x768xf32>
    %57 = tpu.matmul %56, %55, %cst_46 {dimension_numbers = #tpu.dot_dimension_numbers<[1], [0], [0], [1], [0, 0, 1, 1], [], []>} : vector<2x256xbf16>, vector<256x768xbf16>, vector<2x768xf32> -> vector<2x768xf32>
    %58 = vector.broadcast %20 : vector<1x768xf32> to vector<2x768xf32>
    %59 = arith.addf %57, %58 : vector<2x768xf32>
    %60 = vector.extract_strided_slice %59 {offsets = [0, 0], sizes = [2, 256], strides = [1, 1]} : vector<2x768xf32> to vector<2x256xf32>
    %61 = arith.negf %60 : vector<2x256xf32>
    %62 = math.exp %61 : vector<2x256xf32>
    %cst_47 = arith.constant 1.000000e+00 : f32
    %63 = vector.broadcast %cst_47 : f32 to vector<2x256xf32>
    %64 = arith.addf %63, %62 : vector<2x256xf32>
    %65 = arith.divf %63, %64 : vector<2x256xf32>
    %66 = vector.extract_strided_slice %59 {offsets = [0, 256], sizes = [2, 256], strides = [1, 1]} : vector<2x768xf32> to vector<2x256xf32>
    %67 = math.tanh %66 : vector<2x256xf32>
    %68 = vector.extract_strided_slice %59 {offsets = [0, 512], sizes = [2, 256], strides = [1, 1]} : vector<2x768xf32> to vector<2x256xf32>
    %69 = arith.negf %68 : vector<2x256xf32>
    %70 = math.exp %69 : vector<2x256xf32>
    %cst_48 = arith.constant 1.000000e+00 : f32
    %71 = vector.broadcast %cst_48 : f32 to vector<2x256xf32>
    %72 = arith.addf %71, %70 : vector<2x256xf32>
    %73 = arith.divf %71, %72 : vector<2x256xf32>
    %74 = arith.mulf %65, %67 : vector<2x256xf32>
    %75 = math.tanh %74 : vector<2x256xf32>
    %76 = arith.mulf %73, %75 : vector<2x256xf32>
    %c1_i32_49 = arith.constant 1 : i32
    %c1_i32_50 = arith.constant 1 : i32
    %c1_i32_51 = arith.constant 1 : i32
    %c0_i32_52 = arith.constant 0 : i32
    %c0_i32_53 = arith.constant 0 : i32
    %77 = tpu.memref_slice %arg3[%c1_i32_49, %c0_i32_52, %c0_i32_53] : memref<3x256x768xbf16, #tpu.memory_space<any>> -> memref<1x256x768xbf16, #tpu.memory_space<any>>
    %78 = tpu.memref_squeeze %77 : memref<1x256x768xbf16, #tpu.memory_space<any>> -> memref<256x768xbf16, #tpu.memory_space<any>>
    %c0_i32_54 = arith.constant 0 : i32
    %c0_i32_55 = arith.constant 0 : i32
    %79 = tpu.memref_slice %arg6[%c1_i32_50, %c0_i32_54, %c0_i32_55] : memref<3x256x768xbf16, #tpu.memory_space<vmem>> -> memref<1x256x768xbf16, #tpu.memory_space<vmem>>
    %80 = tpu.memref_squeeze %79 : memref<1x256x768xbf16, #tpu.memory_space<vmem>> -> memref<256x768xbf16, #tpu.memory_space<vmem>>
    %81 = tpu.memref_slice %arg7[%c1_i32_51] : memref<3x!tpu.dma_semaphore, #tpu.memory_space<semaphore_mem>> -> memref<1x!tpu.dma_semaphore, #tpu.memory_space<semaphore_mem>>
    %82 = tpu.memref_squeeze %81 : memref<1x!tpu.dma_semaphore, #tpu.memory_space<semaphore_mem>> -> memref<!tpu.dma_semaphore, #tpu.memory_space<semaphore_mem>>
    tpu.wait_dma2 semaphore(%82 : memref<!tpu.dma_semaphore, #tpu.memory_space<semaphore_mem>>) src(%78 : memref<256x768xbf16, #tpu.memory_space<any>>) dst(%80 : memref<256x768xbf16, #tpu.memory_space<vmem>>)
    %c1_56 = arith.constant 1 : index
    %c0_57 = arith.constant 0 : index
    %c0_58 = arith.constant 0 : index
    %83 = vector.load %arg6[%c1_56, %c0_57, %c0_58] : memref<3x256x768xbf16, #tpu.memory_space<vmem>>, vector<1x256x768xbf16>
    %84 = vector.shape_cast %83 : vector<1x256x768xbf16> to vector<256x768xbf16>
    %85 = arith.truncf %76 : vector<2x256xf32> to vector<2x256xbf16>
    %cst_59 = arith.constant dense<0.000000e+00> : vector<2x768xf32>
    %86 = tpu.matmul %85, %84, %cst_59 {dimension_numbers = #tpu.dot_dimension_numbers<[1], [0], [0], [1], [0, 0, 1, 1], [], []>} : vector<2x256xbf16>, vector<256x768xbf16>, vector<2x768xf32> -> vector<2x768xf32>
    %87 = vector.broadcast %21 : vector<1x768xf32> to vector<2x768xf32>
    %88 = arith.addf %86, %87 : vector<2x768xf32>
    %89 = vector.extract_strided_slice %88 {offsets = [0, 0], sizes = [2, 256], strides = [1, 1]} : vector<2x768xf32> to vector<2x256xf32>
    %90 = arith.negf %89 : vector<2x256xf32>
    %91 = math.exp %90 : vector<2x256xf32>
    %cst_60 = arith.constant 1.000000e+00 : f32
    %92 = vector.broadcast %cst_60 : f32 to vector<2x256xf32>
    %93 = arith.addf %92, %91 : vector<2x256xf32>
    %94 = arith.divf %92, %93 : vector<2x256xf32>
    %95 = vector.extract_strided_slice %88 {offsets = [0, 256], sizes = [2, 256], strides = [1, 1]} : vector<2x768xf32> to vector<2x256xf32>
    %96 = math.tanh %95 : vector<2x256xf32>
    %97 = vector.extract_strided_slice %88 {offsets = [0, 512], sizes = [2, 256], strides = [1, 1]} : vector<2x768xf32> to vector<2x256xf32>
    %98 = arith.negf %97 : vector<2x256xf32>
    %99 = math.exp %98 : vector<2x256xf32>
    %cst_61 = arith.constant 1.000000e+00 : f32
    %100 = vector.broadcast %cst_61 : f32 to vector<2x256xf32>
    %101 = arith.addf %100, %99 : vector<2x256xf32>
    %102 = arith.divf %100, %101 : vector<2x256xf32>
    %103 = arith.mulf %94, %96 : vector<2x256xf32>
    %104 = math.tanh %103 : vector<2x256xf32>
    %105 = arith.mulf %102, %104 : vector<2x256xf32>
    %c2_i32_62 = arith.constant 2 : i32
    %c2_i32_63 = arith.constant 2 : i32
    %c2_i32_64 = arith.constant 2 : i32
    %c0_i32_65 = arith.constant 0 : i32
    %c0_i32_66 = arith.constant 0 : i32
    %106 = tpu.memref_slice %arg3[%c2_i32_62, %c0_i32_65, %c0_i32_66] : memref<3x256x768xbf16, #tpu.memory_space<any>> -> memref<1x256x768xbf16, #tpu.memory_space<any>>
    %107 = tpu.memref_squeeze %106 : memref<1x256x768xbf16, #tpu.memory_space<any>> -> memref<256x768xbf16, #tpu.memory_space<any>>
    %c0_i32_67 = arith.constant 0 : i32
    %c0_i32_68 = arith.constant 0 : i32
    %108 = tpu.memref_slice %arg6[%c2_i32_63, %c0_i32_67, %c0_i32_68] : memref<3x256x768xbf16, #tpu.memory_space<vmem>> -> memref<1x256x768xbf16, #tpu.memory_space<vmem>>
    %109 = tpu.memref_squeeze %108 : memref<1x256x768xbf16, #tpu.memory_space<vmem>> -> memref<256x768xbf16, #tpu.memory_space<vmem>>
    %110 = tpu.memref_slice %arg7[%c2_i32_64] : memref<3x!tpu.dma_semaphore, #tpu.memory_space<semaphore_mem>> -> memref<1x!tpu.dma_semaphore, #tpu.memory_space<semaphore_mem>>
    %111 = tpu.memref_squeeze %110 : memref<1x!tpu.dma_semaphore, #tpu.memory_space<semaphore_mem>> -> memref<!tpu.dma_semaphore, #tpu.memory_space<semaphore_mem>>
    tpu.wait_dma2 semaphore(%111 : memref<!tpu.dma_semaphore, #tpu.memory_space<semaphore_mem>>) src(%107 : memref<256x768xbf16, #tpu.memory_space<any>>) dst(%109 : memref<256x768xbf16, #tpu.memory_space<vmem>>)
    %c2_69 = arith.constant 2 : index
    %c0_70 = arith.constant 0 : index
    %c0_71 = arith.constant 0 : index
    %112 = vector.load %arg6[%c2_69, %c0_70, %c0_71] : memref<3x256x768xbf16, #tpu.memory_space<vmem>>, vector<1x256x768xbf16>
    %113 = vector.shape_cast %112 : vector<1x256x768xbf16> to vector<256x768xbf16>
    %114 = arith.truncf %105 : vector<2x256xf32> to vector<2x256xbf16>
    %cst_72 = arith.constant dense<0.000000e+00> : vector<2x768xf32>
    %115 = tpu.matmul %114, %113, %cst_72 {dimension_numbers = #tpu.dot_dimension_numbers<[1], [0], [0], [1], [0, 0, 1, 1], [], []>} : vector<2x256xbf16>, vector<256x768xbf16>, vector<2x768xf32> -> vector<2x768xf32>
    %116 = vector.broadcast %22 : vector<1x768xf32> to vector<2x768xf32>
    %117 = arith.addf %115, %116 : vector<2x768xf32>
    %118 = vector.extract_strided_slice %117 {offsets = [0, 0], sizes = [2, 256], strides = [1, 1]} : vector<2x768xf32> to vector<2x256xf32>
    %119 = arith.negf %118 : vector<2x256xf32>
    %120 = math.exp %119 : vector<2x256xf32>
    %cst_73 = arith.constant 1.000000e+00 : f32
    %121 = vector.broadcast %cst_73 : f32 to vector<2x256xf32>
    %122 = arith.addf %121, %120 : vector<2x256xf32>
    %123 = arith.divf %121, %122 : vector<2x256xf32>
    %124 = vector.extract_strided_slice %117 {offsets = [0, 256], sizes = [2, 256], strides = [1, 1]} : vector<2x768xf32> to vector<2x256xf32>
    %125 = math.tanh %124 : vector<2x256xf32>
    %126 = vector.extract_strided_slice %117 {offsets = [0, 512], sizes = [2, 256], strides = [1, 1]} : vector<2x768xf32> to vector<2x256xf32>
    %127 = arith.negf %126 : vector<2x256xf32>
    %128 = math.exp %127 : vector<2x256xf32>
    %cst_74 = arith.constant 1.000000e+00 : f32
    %129 = vector.broadcast %cst_74 : f32 to vector<2x256xf32>
    %130 = arith.addf %129, %128 : vector<2x256xf32>
    %131 = arith.divf %129, %130 : vector<2x256xf32>
    %132 = arith.mulf %123, %125 : vector<2x256xf32>
    %133 = math.tanh %132 : vector<2x256xf32>
    %134 = arith.mulf %131, %133 : vector<2x256xf32>
    %135 = vector.broadcast %23 : vector<1x256xf32> to vector<2x256xf32>
    %136 = arith.mulf %134, %135 : vector<2x256xf32>
    %cst_75 = arith.constant dense<0.000000e+00> : vector<2xf32>
    %137 = vector.multi_reduction <add>, %136, %cst_75 [1] : vector<2x256xf32> to vector<2xf32>
    %138 = vector.shape_cast %137 : vector<2xf32> to vector<2x1xf32>
    %139 = vector.broadcast %24 : vector<1x1xf32> to vector<2x1xf32>
    %140 = arith.addf %138, %139 : vector<2x1xf32>
    %c0_76 = arith.constant 0 : index
    %c0_77 = arith.constant 0 : index
    %141 = vector.load %arg5[%c0_76, %c0_77] : memref<2x1xf32, #tpu.memory_space<vmem>>, vector<2x1xf32>
    tpu.vector_store %arg5[%c0_76, %c0_77], %140 {strides = array<i32>} : memref<2x1xf32, #tpu.memory_space<vmem>>, vector<2x1xf32>,
    return
  }
}

</mosaic_0001>

<llo_original>
// kernel: tpu_custom_call.1
$region0: #{tpu_custom_call.1}
  #allocation0 [shape = 'u32[]', space=smem, size = 0x4, offset = 0x4, fixed_abs, tag = 'smem constant byte address 0x4 - core index']
  #allocation1 [shape = 'u32[144,128]{1,0:T(1,128)}', space=vmem, size = 0x12000, scoped, tag = 'internal scratch']
  #allocation2 [shape = 'bf16[3,256,768]{2,1,0:T(8,128)(2,1)}', space=vmem, size = 0x120000, scoped, tag = 'scratch operand']
  #allocation3 [shape = 's32[3]{0}', space=sflag, size = 0xc, scoped, tag = 'scratch operand']
  #allocation11 [shape = 's32[]', space=sflag, size = 0x4, offset = 0, fixed_abs, tag = 'sflag constant byte address 0x0 - dummy sync flag']
  #allocation12 [shape = 's32[]', space=sflag, size = 0x4, offset = 0, fixed_abs, tag = 'sflag constant byte address 0x0 - dummy sync flag']
  #allocation13 [shape = 'u32[]', space=smem, size = 0x4, offset = 0x44, fixed_abs, tag = 'smem constant byte address 0x44 - assertion arg 0']
  #allocation14 [shape = 'u32[]', space=smem, size = 0x4, offset = 0x48, fixed_abs, tag = 'smem constant byte address 0x48 - assertion arg 1']
  #allocation15 [shape = 's32[]', space=sflag, size = 0x4, offset = 0, fixed_abs, tag = 'sflag constant byte address 0x0 - dummy sync flag']
  #allocation16 [shape = 's32[]', space=sflag, size = 0x4, offset = 0, fixed_abs, tag = 'sflag constant byte address 0x0 - dummy sync flag']
  #allocation17 [shape = 's32[]', space=sflag, size = 0x4, offset = 0, fixed_abs, tag = 'sflag constant byte address 0x0 - dummy sync flag']
  #allocation18 [shape = 's32[]', space=sflag, size = 0x4, offset = 0, fixed_abs, tag = 'sflag constant byte address 0x0 - dummy sync flag']
  %s0 = inlined_call_operand.hbm [shape: bf16[6,1024], index: 0, kind: input, shape index: {}]
  %s1 = inlined_call_operand.hbm [shape: bf16[1024,128], index: 1, kind: input, shape index: {}]
  %s2 = inlined_call_operand.hbm [shape: bf16[128,256], index: 2, kind: input, shape index: {}]
  %s3 = inlined_call_operand.hbm [shape: bf16[3,256,768], index: 3, kind: input, shape index: {}]
  %s4 = inlined_call_operand.hbm [shape: f32[6,768], index: 4, kind: input, shape index: {}]
  %s5 = inlined_call_operand.vmem [shape: f32[2,1], index: 5, kind: output, shape index: {}]
  %s6 = sld [smem:[#allocation0]]
  $region54: #{tpu_custom_call.1} parent=0
    _
  %s8 = ssub.s32 1, %s6
  %s9 = scalar_select 0, %s8, %s6
  $region1: #{tpu_custom_call.1} parent=0
    #allocation4 [shape = 'u8[16384]{0}', space=vmem, size = 0x4000, scoped, tag = 'input window, operand 0, single buffered']
    #allocation5 [shape = 's32[1]{0}', space=sflag, size = 0x4, scoped, tag = 'scoped memory for tpu_custom_call.1']
    #allocation6 [shape = 'u8[262144]{0}', space=vmem, size = 0x40000, scoped, tag = 'input window, operand 1, single buffered']
    #allocation7 [shape = 's32[1]{0}', space=sflag, size = 0x4, scoped, tag = 'scoped memory for tpu_custom_call.1']
    #allocation8 [shape = 'u8[65536]{0}', space=vmem, size = 0x10000, scoped, tag = 'input window, operand 2, single buffered']
    #allocation9 [shape = 'u8[24576]{0}', space=vmem, size = 0x6000, scoped, tag = 'input window, operand 4, single buffered']
    #allocation10 [shape = 's32[1]{0}', space=sflag, size = 0x4, scoped, tag = 'scoped memory for tpu_custom_call.1']
    %10 = vsyncpa [#allocation5], 0
    %11 = vsyncpa [#allocation7], 0
    %12 = vsyncpa [#allocation10], 0
    // Predicated region
    $region2: #{tpu_custom_call.1} parent=1 // pred_check
      _
    $region3: #{tpu_custom_call.1} parent=1 // pred_check_branch
      %14 = sbr.rel (0) target = $region5
    $region4: #{tpu_custom_call.1} parent=1 // pred_region
      %s16 = ssub.s32 512, 512
      %17 = vsyncadd [#allocation5], %s16
      %s19 = sshll.u32 [#allocation4], 4
      %s20 = int_to_ptr.vmem [resolvable:$true] %s19
      %22 = dma.hbm_to_vmem [thread:$0]  %s0, 512, %s20, [#allocation5]
    $region5: #{tpu_custom_call.1} parent=1 // pred_fallthru
      _
    // Predicated region
    $region6: #{tpu_custom_call.1} parent=1 // pred_check
      _
    $region7: #{tpu_custom_call.1} parent=1 // pred_check_branch
      %24 = sbr.rel (0) target = $region9
    $region8: #{tpu_custom_call.1} parent=1 // pred_region
      %s26 = ssub.s32 8192, 8192
      %27 = vsyncadd [#allocation7], %s26
      %s28 = sshll.u32 [#allocation6], 4
      %s29 = int_to_ptr.vmem [resolvable:$true] %s28
      %34 = dma.hbm_to_vmem [thread:$0]  %s1, 8192, %s29, [#allocation7], 64, 64, 4
    $region9: #{tpu_custom_call.1} parent=1 // pred_fallthru
      _
    // Predicated region
    $region10: #{tpu_custom_call.1} parent=1 // pred_check
      _
    $region11: #{tpu_custom_call.1} parent=1 // pred_check_branch
      %36 = sbr.rel (0) target = $region13
    $region12: #{tpu_custom_call.1} parent=1 // pred_region
      %s38 = ssub.s32 2048, 2048
      %39 = vsyncadd [#allocation7], %s38
      %s40 = sshll.u32 [#allocation8], 4
      %s41 = int_to_ptr.vmem [resolvable:$true] %s40
      %46 = dma.hbm_to_vmem [thread:$0]  %s2, 2048, %s41, [#allocation7], 128, 128, 8
    $region13: #{tpu_custom_call.1} parent=1 // pred_fallthru
      _
    // Predicated region
    $region14: #{tpu_custom_call.1} parent=1 // pred_check
      _
    $region15: #{tpu_custom_call.1} parent=1 // pred_check_branch
      %48 = sbr.rel (0) target = $region17
    $region16: #{tpu_custom_call.1} parent=1 // pred_region
      %s50 = ssub.s32 768, 768
      %51 = vsyncadd [#allocation10], %s50
      %s53 = sshll.u32 [#allocation9], 4
      %s54 = int_to_ptr.vmem [resolvable:$true] %s53
      %56 = dma.hbm_to_vmem [thread:$0]  %s4, 768, %s54, [#allocation10]
    $region17: #{tpu_custom_call.1} parent=1 // pred_fallthru
      _
    // Predicated region
    $region18: #{tpu_custom_call.1} parent=1 // pred_check
      _
    $region19: #{tpu_custom_call.1} parent=1 // pred_check_branch
      %58 = sbr.rel (0) target = $region21
    $region20: #{tpu_custom_call.1} parent=1 // pred_region
      %59 = dma.done [#allocation5], 512
    $region21: #{tpu_custom_call.1} parent=1 // pred_fallthru
      _
    // Predicated region
    $region22: #{tpu_custom_call.1} parent=1 // pred_check
      _
    $region23: #{tpu_custom_call.1} parent=1 // pred_check_branch
      %61 = sbr.rel (0) target = $region25
    $region24: #{tpu_custom_call.1} parent=1 // pred_region
      %62 = dma.done [#allocation7], 8192
    $region25: #{tpu_custom_call.1} parent=1 // pred_fallthru
      _
    // Predicated region
    $region26: #{tpu_custom_call.1} parent=1 // pred_check
      _
    $region27: #{tpu_custom_call.1} parent=1 // pred_check_branch
      %64 = sbr.rel (0) target = $region29
    $region28: #{tpu_custom_call.1} parent=1 // pred_region
      %65 = dma.done [#allocation7], 2048
    $region29: #{tpu_custom_call.1} parent=1 // pred_fallthru
      _
    // Predicated region
    $region30: #{tpu_custom_call.1} parent=1 // pred_check
      _
    $region31: #{tpu_custom_call.1} parent=1 // pred_check_branch
      %67 = sbr.rel (0) target = $region33
    $region32: #{tpu_custom_call.1} parent=1 // pred_region
      %68 = dma.done [#allocation10], 768
    $region33: #{tpu_custom_call.1} parent=1 // pred_fallthru
      _
    // Predicated region
    $region34: #{tpu_custom_call.1} parent=1 // pred_check
      _
    $region35: #{tpu_custom_call.1} parent=1 // pred_check_branch
      %71 = sbr.rel target = $region37
    $region36: #{tpu_custom_call.1} parent=1 // pred_region
      %72 = sst [smem:[#allocation13]] [#allocation12]
      %73 = sst [smem:[#allocation14]] [#allocation11]
    $region37: #{tpu_custom_call.1} parent=1 // pred_fallthru
      _
    %75 = shalt.err (0)
    %s77 = sshll.u32 [#allocation2], 4
    %s78 = int_to_ptr.vmem [resolvable:$true] %s77
    %80 = dma.hbm_to_vmem [thread:$0]  %s3, 12288, %s78, [#allocation3]
    %s81 = scalar_lea.hbm %s3, 12288
    %s82 = scalar_lea.vmem [#allocation2], 768
    %s83 = scalar_lea.sflag [#allocation3], 1
    // Predicated region
    $region38: #{tpu_custom_call.1} parent=1 // pred_check
      _
    $region39: #{tpu_custom_call.1} parent=1 // pred_check_branch
      %85 = sbr.rel target = $region41
    $region40: #{tpu_custom_call.1} parent=1 // pred_region
      %86 = sst [smem:[#allocation13]] [#allocation16]
      %87 = sst [smem:[#allocation14]] [#allocation15]
    $region41: #{tpu_custom_call.1} parent=1 // pred_fallthru
      _
    %89 = shalt.err (0)
    %s91 = sshll.u32 %s82, 4
    %s92 = int_to_ptr.vmem [resolvable:$true] %s91
    %94 = dma.hbm_to_vmem [thread:$0]  %s81, 12288, %s92, %s83
    %s95 = scalar_lea.hbm %s3, 24576
    %s96 = scalar_lea.vmem [#allocation2], 1536
    %s97 = scalar_lea.sflag [#allocation3], 2
    // Predicated region
    $region42: #{tpu_custom_call.1} parent=1 // pred_check
      _
    $region43: #{tpu_custom_call.1} parent=1 // pred_check_branch
      %99 = sbr.rel target = $region45
    $region44: #{tpu_custom_call.1} parent=1 // pred_region
      %100 = sst [smem:[#allocation13]] [#allocation18]
      %101 = sst [smem:[#allocation14]] [#allocation17]
    $region45: #{tpu_custom_call.1} parent=1 // pred_fallthru
      _
    %103 = shalt.err (0)
    %s105 = sshll.u32 %s96, 4
    %s106 = int_to_ptr.vmem [resolvable:$true] %s105
    %108 = dma.hbm_to_vmem [thread:$0]  %s95, 12288, %s106, %s97
    %v109 = vld [vmem:[#allocation9] ss:$0 sm:$0xff]
    %s110 = scalar_lea.vmem [#allocation9], 1
    %v111 = vld [vmem:[%s110] ss:$8 sm:$0x3]
    %s112 = scalar_lea.vmem [#allocation9], 2
    %v113 = vld [vmem:[%s112] ss:$8 sm:$0xf]
    %v114 = vld [vmem:[%s112] ss:$8 sm:$0x30]
    %v115 = vor.u32 %v113, %v114
    %s116 = scalar_lea.vmem [#allocation9], 3
    %v117 = vld [vmem:[%s116] ss:$8 sm:$0xf]
    %v118 = vld [vmem:[%s116] ss:$8 sm:$0x30]
    %v119 = vor.u32 %v117, %v118
    %s120 = scalar_lea.vmem [#allocation9], 4
    %v121 = vld [vmem:[%s120] ss:$8 sm:$0xf]
    %v122 = vld [vmem:[%s120] ss:$8 sm:$0x30]
    %v123 = vor.u32 %v121, %v122
    %s124 = scalar_lea.vmem [#allocation9], 5
    %v125 = vld [vmem:[%s124] ss:$8 sm:$0x3]
    %v126 = vld [vmem:[#allocation9 + $0x15] ss:$0 sm:$0xff]
    %v127 = vld [vmem:[#allocation4] sm:$0x77]
    %v128 = vld [vmem:[#allocation4 + $0x8] sm:$0x77]
    %v129 = vld [vmem:[#allocation4 + $0x10] sm:$0x77]
    %v130 = vld [vmem:[#allocation4 + $0x18] sm:$0x77]
    %v131 = vld [vmem:[#allocation6] sm:$0xf]
    %v132 = vld [vmem:[#allocation6 + $0x4] sm:$0xf]
    %v133 = vld [vmem:[#allocation6 + $0x8] sm:$0xf]
    %v134 = vld [vmem:[#allocation6 + $0xc] sm:$0xf]
    %v135 = vld [vmem:[#allocation6 + $0x10] sm:$0xf]
    %v136 = vld [vmem:[#allocation6 + $0x14] sm:$0xf]
    %v137 = vld [vmem:[#allocation6 + $0x18] sm:$0xf]
    %v138 = vld [vmem:[#allocation6 + $0x1c] sm:$0xf]
    %v139 = vld [vmem:[#allocation6 + $0x20] sm:$0xf]
    %v140 = vld [vmem:[#allocation6 + $0x24] sm:$0xf]
    %v141 = vld [vmem:[#allocation6 + $0x28] sm:$0xf]
    %v142 = vld [vmem:[#allocation6 + $0x2c] sm:$0xf]
    %v143 = vld [vmem:[#allocation6 + $0x30] sm:$0xf]
    %v144 = vld [vmem:[#allocation6 + $0x34] sm:$0xf]
    %v145 = vld [vmem:[#allocation6 + $0x38] sm:$0xf]
    %v146 = vld [vmem:[#allocation6 + $0x3c] sm:$0xf]
    %v147 = vld [vmem:[#allocation6 + $0x40] sm:$0xf]
    %v148 = vld [vmem:[#allocation6 + $0x44] sm:$0xf]
    %v149 = vld [vmem:[#allocation6 + $0x48] sm:$0xf]
    %v150 = vld [vmem:[#allocation6 + $0x4c] sm:$0xf]
    %v151 = vld [vmem:[#allocation6 + $0x50] sm:$0xf]
    %v152 = vld [vmem:[#allocation6 + $0x54] sm:$0xf]
    %v153 = vld [vmem:[#allocation6 + $0x58] sm:$0xf]
    %v154 = vld [vmem:[#allocation6 + $0x5c] sm:$0xf]
    %v155 = vld [vmem:[#allocation6 + $0x60] sm:$0xf]
    %v156 = vld [vmem:[#allocation6 + $0x64] sm:$0xf]
    %v157 = vld [vmem:[#allocation6 + $0x68] sm:$0xf]
    %v158 = vld [vmem:[#allocation6 + $0x6c] sm:$0xf]
    %v159 = vld [vmem:[#allocation6 + $0x70] sm:$0xf]
    %v160 = vld [vmem:[#allocation6 + $0x74] sm:$0xf]
    %v161 = vld [vmem:[#allocation6 + $0x78] sm:$0xf]
    %v162 = vld [vmem:[#allocation6 + $0x7c] sm:$0xf]
    %v163 = vld [vmem:[#allocation6 + $0x80] sm:$0xf]
    %v164 = vld [vmem:[#allocation6 + $0x84] sm:$0xf]
    %v165 = vld [vmem:[#allocation6 + $0x88] sm:$0xf]
    %v166 = vld [vmem:[#allocation6 + $0x8c] sm:$0xf]
    %v167 = vld [vmem:[#allocation6 + $0x90] sm:$0xf]
    %v168 = vld [vmem:[#allocation6 + $0x94] sm:$0xf]
    %v169 = vld [vmem:[#allocation6 + $0x98] sm:$0xf]
    %v170 = vld [vmem:[#allocation6 + $0x9c] sm:$0xf]
    %v171 = vld [vmem:[#allocation6 + $0xa0] sm:$0xf]
    %v172 = vld [vmem:[#allocation6 + $0xa4] sm:$0xf]
    %v173 = vld [vmem:[#allocation6 + $0xa8] sm:$0xf]
    %v174 = vld [vmem:[#allocation6 + $0xac] sm:$0xf]
    %v175 = vld [vmem:[#allocation6 + $0xb0] sm:$0xf]
    %v176 = vld [vmem:[#allocation6 + $0xb4] sm:$0xf]
    %v177 = vld [vmem:[#allocation6 + $0xb8] sm:$0xf]
    %v178 = vld [vmem:[#allocation6 + $0xbc] sm:$0xf]
    %v179 = vld [vmem:[#allocation6 + $0xc0] sm:$0xf]
    %v180 = vld [vmem:[#allocation6 + $0xc4] sm:$0xf]
    %v181 = vld [vmem:[#allocation6 + $0xc8] sm:$0xf]
    %v182 = vld [vmem:[#allocation6 + $0xcc] sm:$0xf]
    %v183 = vld [vmem:[#allocation6 + $0xd0] sm:$0xf]
    %v184 = vld [vmem:[#allocation6 + $0xd4] sm:$0xf]
    %v185 = vld [vmem:[#allocation6 + $0xd8] sm:$0xf]
    %v186 = vld [vmem:[#allocation6 + $0xdc] sm:$0xf]
    %v187 = vld [vmem:[#allocation6 + $0xe0] sm:$0xf]
    %v188 = vld [vmem:[#allocation6 + $0xe4] sm:$0xf]
    %v189 = vld [vmem:[#allocation6 + $0xe8] sm:$0xf]
    %v190 = vld [vmem:[#allocation6 + $0xec] sm:$0xf]
    %v191 = vld [vmem:[#allocation6 + $0xf0] sm:$0xf]
    %v192 = vld [vmem:[#allocation6 + $0xf4] sm:$0xf]
    %v193 = vld [vmem:[#allocation6 + $0xf8] sm:$0xf]
    %v194 = vld [vmem:[#allocation6 + $0xfc] sm:$0xf]
    %v195 = vld [vmem:[#allocation6 + $0x100] sm:$0xf]
    %v196 = vld [vmem:[#allocation6 + $0x104] sm:$0xf]
    %v197 = vld [vmem:[#allocation6 + $0x108] sm:$0xf]
    %v198 = vld [vmem:[#allocation6 + $0x10c] sm:$0xf]
    %v199 = vld [vmem:[#allocation6 + $0x110] sm:$0xf]
    %v200 = vld [vmem:[#allocation6 + $0x114] sm:$0xf]
    %v201 = vld [vmem:[#allocation6 + $0x118] sm:$0xf]
    %v202 = vld [vmem:[#allocation6 + $0x11c] sm:$0xf]
    %v203 = vld [vmem:[#allocation6 + $0x120] sm:$0xf]
    %v204 = vld [vmem:[#allocation6 + $0x124] sm:$0xf]
    %v205 = vld [vmem:[#allocation6 + $0x128] sm:$0xf]
    %v206 = vld [vmem:[#allocation6 + $0x12c] sm:$0xf]
    %v207 = vld [vmem:[#allocation6 + $0x130] sm:$0xf]
    %v208 = vld [vmem:[#allocation6 + $0x134] sm:$0xf]
    %v209 = vld [vmem:[#allocation6 + $0x138] sm:$0xf]
    %v210 = vld [vmem:[#allocation6 + $0x13c] sm:$0xf]
    %v211 = vld [vmem:[#allocation6 + $0x140] sm:$0xf]
    %v212 = vld [vmem:[#allocation6 + $0x144] sm:$0xf]
    %v213 = vld [vmem:[#allocation6 + $0x148] sm:$0xf]
    %v214 = vld [vmem:[#allocation6 + $0x14c] sm:$0xf]
    %v215 = vld [vmem:[#allocation6 + $0x150] sm:$0xf]
    %v216 = vld [vmem:[#allocation6 + $0x154] sm:$0xf]
    %v217 = vld [vmem:[#allocation6 + $0x158] sm:$0xf]
    %v218 = vld [vmem:[#allocation6 + $0x15c] sm:$0xf]
    %v219 = vld [vmem:[#allocation6 + $0x160] sm:$0xf]
    %v220 = vld [vmem:[#allocation6 + $0x164] sm:$0xf]
    %v221 = vld [vmem:[#allocation6 + $0x168] sm:$0xf]
    %v222 = vld [vmem:[#allocation6 + $0x16c] sm:$0xf]
    %v223 = vld [vmem:[#allocation6 + $0x170] sm:$0xf]
    %v224 = vld [vmem:[#allocation6 + $0x174] sm:$0xf]
    %v225 = vld [vmem:[#allocation6 + $0x178] sm:$0xf]
    %v226 = vld [vmem:[#allocation6 + $0x17c] sm:$0xf]
    %v227 = vld [vmem:[#allocation6 + $0x180] sm:$0xf]
    %v228 = vld [vmem:[#allocation6 + $0x184] sm:$0xf]
    %v229 = vld [vmem:[#allocation6 + $0x188] sm:$0xf]
    %v230 = vld [vmem:[#allocation6 + $0x18c] sm:$0xf]
    %v231 = vld [vmem:[#allocation6 + $0x190] sm:$0xf]
    %v232 = vld [vmem:[#allocation6 + $0x194] sm:$0xf]
    %v233 = vld [vmem:[#allocation6 + $0x198] sm:$0xf]
    %v234 = vld [vmem:[#allocation6 + $0x19c] sm:$0xf]
    %v235 = vld [vmem:[#allocation6 + $0x1a0] sm:$0xf]
    %v236 = vld [vmem:[#allocation6 + $0x1a4] sm:$0xf]
    %v237 = vld [vmem:[#allocation6 + $0x1a8] sm:$0xf]
    %v238 = vld [vmem:[#allocation6 + $0x1ac] sm:$0xf]
    %v239 = vld [vmem:[#allocation6 + $0x1b0] sm:$0xf]
    %v240 = vld [vmem:[#allocation6 + $0x1b4] sm:$0xf]
    %v241 = vld [vmem:[#allocation6 + $0x1b8] sm:$0xf]
    %v242 = vld [vmem:[#allocation6 + $0x1bc] sm:$0xf]
    %v243 = vld [vmem:[#allocation6 + $0x1c0] sm:$0xf]
    %v244 = vld [vmem:[#allocation6 + $0x1c4] sm:$0xf]
    %v245 = vld [vmem:[#allocation6 + $0x1c8] sm:$0xf]
    %v246 = vld [vmem:[#allocation6 + $0x1cc] sm:$0xf]
    %v247 = vld [vmem:[#allocation6 + $0x1d0] sm:$0xf]
    %v248 = vld [vmem:[#allocation6 + $0x1d4] sm:$0xf]
    %v249 = vld [vmem:[#allocation6 + $0x1d8] sm:$0xf]
    %v250 = vld [vmem:[#allocation6 + $0x1dc] sm:$0xf]
    %v251 = vld [vmem:[#allocation6 + $0x1e0] sm:$0xf]
    %v252 = vld [vmem:[#allocation6 + $0x1e4] sm:$0xf]
    %v253 = vld [vmem:[#allocation6 + $0x1e8] sm:$0xf]
    %v254 = vld [vmem:[#allocation6 + $0x1ec] sm:$0xf]
    %v255 = vld [vmem:[#allocation6 + $0x1f0] sm:$0xf]
    %v256 = vld [vmem:[#allocation6 + $0x1f4] sm:$0xf]
    %v257 = vld [vmem:[#allocation6 + $0x1f8] sm:$0xf]
    %v258 = vld [vmem:[#allocation6 + $0x1fc] sm:$0xf]
    %v263 = vunpack.c.l.b16 %v127
    %v264 = vunpack.c.h.b16 %v127
    %v265 = vunpack.c.l.b16 %v128
    %v266 = vunpack.c.h.b16 %v128
    %v267 = vunpack.c.l.b16 %v129
    %v268 = vunpack.c.h.b16 %v129
    %v269 = vunpack.c.l.b16 %v130
    %v270 = vunpack.c.h.b16 %v130
    %v271 = vpack.c.b16 %v263, %v263
    %v272 = vpack.c.b16 %v264, %v264
    %v273 = vpack.c.b16 %v265, %v265
    %v274 = vpack.c.b16 %v266, %v266
    %v275 = vpack.c.b16 %v267, %v267
    %v276 = vpack.c.b16 %v268, %v268
    %v277 = vpack.c.b16 %v269, %v269
    %v278 = vpack.c.b16 %v270, %v270
    %v415 = vunpack.c.l.b16 %v131
    %v416 = vunpack.c.l.b16 %v132
    %v417 = vunpack.c.l.b16 %v133
    %v418 = vunpack.c.l.b16 %v134
    %v419 = vunpack.c.l.b16 %v135
    %v420 = vunpack.c.l.b16 %v136
    %v421 = vunpack.c.l.b16 %v137
    %v422 = vunpack.c.l.b16 %v138
    %v423 = vunpack.c.l.b16 %v139
    %v424 = vunpack.c.l.b16 %v140
    %v425 = vunpack.c.l.b16 %v141
    %v426 = vunpack.c.l.b16 %v142
    %v427 = vunpack.c.l.b16 %v143
    %v428 = vunpack.c.l.b16 %v144
    %v429 = vunpack.c.l.b16 %v145
    %v430 = vunpack.c.l.b16 %v146
    %v431 = vunpack.c.l.b16 %v147
    %v432 = vunpack.c.l.b16 %v148
    %v433 = vunpack.c.l.b16 %v149
    %v434 = vunpack.c.l.b16 %v150
    %v435 = vunpack.c.l.b16 %v151
    %v436 = vunpack.c.l.b16 %v152
    %v437 = vunpack.c.l.b16 %v153
    %v438 = vunpack.c.l.b16 %v154
    %v439 = vunpack.c.l.b16 %v155
    %v440 = vunpack.c.l.b16 %v156
    %v441 = vunpack.c.l.b16 %v157
    %v442 = vunpack.c.l.b16 %v158
    %v443 = vunpack.c.l.b16 %v159
    %v444 = vunpack.c.l.b16 %v160
    %v445 = vunpack.c.l.b16 %v161
    %v446 = vunpack.c.l.b16 %v162
    %v447 = vunpack.c.l.b16 %v163
    %v448 = vunpack.c.l.b16 %v164
    %v449 = vunpack.c.l.b16 %v165
    %v450 = vunpack.c.l.b16 %v166
    %v451 = vunpack.c.l.b16 %v167
    %v452 = vunpack.c.l.b16 %v168
    %v453 = vunpack.c.l.b16 %v169
    %v454 = vunpack.c.l.b16 %v170
    %v455 = vunpack.c.l.b16 %v171
    %v456 = vunpack.c.l.b16 %v172
    %v457 = vunpack.c.l.b16 %v173
    %v458 = vunpack.c.l.b16 %v174
    %v459 = vunpack.c.l.b16 %v175
    %v460 = vunpack.c.l.b16 %v176
    %v461 = vunpack.c.l.b16 %v177
    %v462 = vunpack.c.l.b16 %v178
    %v463 = vunpack.c.l.b16 %v179
    %v464 = vunpack.c.l.b16 %v180
    %v465 = vunpack.c.l.b16 %v181
    %v466 = vunpack.c.l.b16 %v182
    %v467 = vunpack.c.l.b16 %v183
    %v468 = vunpack.c.l.b16 %v184
    %v469 = vunpack.c.l.b16 %v185
    %v470 = vunpack.c.l.b16 %v186
    %v471 = vunpack.c.l.b16 %v187
    %v472 = vunpack.c.l.b16 %v188
    %v473 = vunpack.c.l.b16 %v189
    %v474 = vunpack.c.l.b16 %v190
    %v475 = vunpack.c.l.b16 %v191
    %v476 = vunpack.c.l.b16 %v192
    %v477 = vunpack.c.l.b16 %v193
    %v478 = vunpack.c.l.b16 %v194
    %v479 = vunpack.c.l.b16 %v195
    %v480 = vunpack.c.l.b16 %v196
    %v481 = vunpack.c.l.b16 %v197
    %v482 = vunpack.c.l.b16 %v198
    %v483 = vunpack.c.l.b16 %v199
    %v484 = vunpack.c.l.b16 %v200
    %v485 = vunpack.c.l.b16 %v201
    %v486 = vunpack.c.l.b16 %v202
    %v487 = vunpack.c.l.b16 %v203
    %v488 = vunpack.c.l.b16 %v204
    %v489 = vunpack.c.l.b16 %v205
    %v490 = vunpack.c.l.b16 %v206
    %v491 = vunpack.c.l.b16 %v207
    %v492 = vunpack.c.l.b16 %v208
    %v493 = vunpack.c.l.b16 %v209
    %v494 = vunpack.c.l.b16 %v210
    %v495 = vunpack.c.l.b16 %v211
    %v496 = vunpack.c.l.b16 %v212
    %v497 = vunpack.c.l.b16 %v213
    %v498 = vunpack.c.l.b16 %v214
    %v499 = vunpack.c.l.b16 %v215
    %v500 = vunpack.c.l.b16 %v216
    %v501 = vunpack.c.l.b16 %v217
    %v502 = vunpack.c.l.b16 %v218
    %v503 = vunpack.c.l.b16 %v219
    %v504 = vunpack.c.l.b16 %v220
    %v505 = vunpack.c.l.b16 %v221
    %v506 = vunpack.c.l.b16 %v222
    %v507 = vunpack.c.l.b16 %v223
    %v508 = vunpack.c.l.b16 %v224
    %v509 = vunpack.c.l.b16 %v225
    %v510 = vunpack.c.l.b16 %v226
    %v511 = vunpack.c.l.b16 %v227
    %v512 = vunpack.c.l.b16 %v228
    %v513 = vunpack.c.l.b16 %v229
    %v514 = vunpack.c.l.b16 %v230
    %v515 = vunpack.c.l.b16 %v231
    %v516 = vunpack.c.l.b16 %v232
    %v517 = vunpack.c.l.b16 %v233
    %v518 = vunpack.c.l.b16 %v234
    %v519 = vunpack.c.l.b16 %v235
    %v520 = vunpack.c.l.b16 %v236
    %v521 = vunpack.c.l.b16 %v237
    %v522 = vunpack.c.l.b16 %v238
    %v523 = vunpack.c.l.b16 %v239
    %v524 = vunpack.c.l.b16 %v240
    %v525 = vunpack.c.l.b16 %v241
    %v526 = vunpack.c.l.b16 %v242
    %v527 = vunpack.c.l.b16 %v243
    %v528 = vunpack.c.l.b16 %v244
    %v529 = vunpack.c.l.b16 %v245
    %v530 = vunpack.c.l.b16 %v246
    %v531 = vunpack.c.l.b16 %v247
    %v532 = vunpack.c.l.b16 %v248
    %v533 = vunpack.c.l.b16 %v249
    %v534 = vunpack.c.l.b16 %v250
    %v535 = vunpack.c.l.b16 %v251
    %v536 = vunpack.c.l.b16 %v252
    %v537 = vunpack.c.l.b16 %v253
    %v538 = vunpack.c.l.b16 %v254
    %v539 = vunpack.c.l.b16 %v255
    %v540 = vunpack.c.l.b16 %v256
    %v541 = vunpack.c.l.b16 %v257
    %v542 = vunpack.c.l.b16 %v258
    %v543 = vpack.c.b16 %v416, %v415
    %v544 = vpack.c.b16 %v418, %v417
    %v545 = vpack.c.b16 %v420, %v419
    %v546 = vpack.c.b16 %v422, %v421
    %v547 = vpack.c.b16 %v424, %v423
    %v548 = vpack.c.b16 %v426, %v425
    %v549 = vpack.c.b16 %v428, %v427
    %v550 = vpack.c.b16 %v430, %v429
    %v551 = vpack.c.b16 %v432, %v431
    %v552 = vpack.c.b16 %v434, %v433
    %v553 = vpack.c.b16 %v436, %v435
    %v554 = vpack.c.b16 %v438, %v437
    %v555 = vpack.c.b16 %v440, %v439
    %v556 = vpack.c.b16 %v442, %v441
    %v557 = vpack.c.b16 %v444, %v443
    %v558 = vpack.c.b16 %v446, %v445
    %v559 = vpack.c.b16 %v448, %v447
    %v560 = vpack.c.b16 %v450, %v449
    %v561 = vpack.c.b16 %v452, %v451
    %v562 = vpack.c.b16 %v454, %v453
    %v563 = vpack.c.b16 %v456, %v455
    %v564 = vpack.c.b16 %v458, %v457
    %v565 = vpack.c.b16 %v460, %v459
    %v566 = vpack.c.b16 %v462, %v461
    %v567 = vpack.c.b16 %v464, %v463
    %v568 = vpack.c.b16 %v466, %v465
    %v569 = vpack.c.b16 %v468, %v467
    %v570 = vpack.c.b16 %v470, %v469
    %v571 = vpack.c.b16 %v472, %v471
    %v572 = vpack.c.b16 %v474, %v473
    %v573 = vpack.c.b16 %v476, %v475
    %v574 = vpack.c.b16 %v478, %v477
    %v575 = vpack.c.b16 %v480, %v479
    %v576 = vpack.c.b16 %v482, %v481
    %v577 = vpack.c.b16 %v484, %v483
    %v578 = vpack.c.b16 %v486, %v485
    %v579 = vpack.c.b16 %v488, %v487
    %v580 = vpack.c.b16 %v490, %v489
    %v581 = vpack.c.b16 %v492, %v491
    %v582 = vpack.c.b16 %v494, %v493
    %v583 = vpack.c.b16 %v496, %v495
    %v584 = vpack.c.b16 %v498, %v497
    %v585 = vpack.c.b16 %v500, %v499
    %v586 = vpack.c.b16 %v502, %v501
    %v587 = vpack.c.b16 %v504, %v503
    %v588 = vpack.c.b16 %v506, %v505
    %v589 = vpack.c.b16 %v508, %v507
    %v590 = vpack.c.b16 %v510, %v509
    %v591 = vpack.c.b16 %v512, %v511
    %v592 = vpack.c.b16 %v514, %v513
    %v593 = vpack.c.b16 %v516, %v515
    %v594 = vpack.c.b16 %v518, %v517
    %v595 = vpack.c.b16 %v520, %v519
    %v596 = vpack.c.b16 %v522, %v521
    %v597 = vpack.c.b16 %v524, %v523
    %v598 = vpack.c.b16 %v526, %v525
    %v599 = vpack.c.b16 %v528, %v527
    %v600 = vpack.c.b16 %v530, %v529
    %v601 = vpack.c.b16 %v532, %v531
    %v602 = vpack.c.b16 %v534, %v533
    %v603 = vpack.c.b16 %v536, %v535
    %v604 = vpack.c.b16 %v538, %v537
    %v605 = vpack.c.b16 %v540, %v539
    %v606 = vpack.c.b16 %v542, %v541
    %671 = vmatprep.subr.bf16.mxu0 0
    %672 = vmatpush1.bf16.msra.mxu0 %v550
    %673 = vmatprep.subr.bf16.mxu0 0
    %674 = vmatpush1.bf16.msra.mxu0 %v549
    %675 = vmatprep.subr.bf16.mxu0 0
    %676 = vmatpush1.bf16.msra.mxu0 %v548
    %677 = vmatprep.subr.bf16.mxu0 0
    %678 = vmatpush1.bf16.msra.mxu0 %v547
    %679 = vmatprep.subr.bf16.mxu0 0
    %680 = vmatpush1.bf16.msra.mxu0 %v546
    %681 = vmatprep.subr.bf16.mxu0 0
    %682 = vmatpush1.bf16.msra.mxu0 %v545
    %683 = vmatprep.subr.bf16.mxu0 0
    %684 = vmatpush1.bf16.msra.mxu0 %v544
    %685 = vmatprep.subr.bf16.mxu0 0
    %686 = vmatpush1.bf16.msra.mxu0 %v543
    %687 = vmatprep.subr.bf16.mxu0 0
    %688 = vmatpush2.bf16.msra.mxu0 %v558
    %689 = vmatprep.subr.bf16.mxu0 0
    %690 = vmatpush2.bf16.msra.mxu0 %v557
    %691 = vmatprep.subr.bf16.mxu0 0
    %692 = vmatpush2.bf16.msra.mxu0 %v556
    %693 = vmatprep.subr.bf16.mxu0 0
    %694 = vmatpush2.bf16.msra.mxu0 %v555
    %695 = vmatprep.subr.bf16.mxu0 0
    %696 = vmatpush2.bf16.msra.mxu0 %v554
    %697 = vmatprep.subr.bf16.mxu0 0
    %698 = vmatpush2.bf16.msra.mxu0 %v553
    %699 = vmatprep.subr.bf16.mxu0 0
    %700 = vmatpush2.bf16.msra.mxu0 %v552
    %701 = vmatprep.subr.bf16.mxu0 0
    %702 = vmatpush2.bf16.msra.mxu0 %v551
    %703 = vmatprep.mubr.bf16.mxu0 %v272
    %704 = vmatmul.mubr.bf16.gmra.mxu0 %v271
    %v705 = vpop.f32.mrf.mxu0
    %v706 = vadd.f32 %v109, %v705
    %v707 = vpop.f32.mrf.mxu0
    %v708 = vpop.f32.mrf.mxu0
    %v709 = vpop.f32.mrf.mxu0
    %710 = vdwg.mxu0
    %711 = vmatprep.subr.bf16.mxu0 0
    %712 = vmatpush1.bf16.msra.mxu0 %v566
    %713 = vmatprep.subr.bf16.mxu0 0
    %714 = vmatpush1.bf16.msra.mxu0 %v565
    %715 = vmatprep.subr.bf16.mxu0 0
    %716 = vmatpush1.bf16.msra.mxu0 %v564
    %717 = vmatprep.subr.bf16.mxu0 0
    %718 = vmatpush1.bf16.msra.mxu0 %v563
    %719 = vmatprep.subr.bf16.mxu0 0
    %720 = vmatpush1.bf16.msra.mxu0 %v562
    %721 = vmatprep.subr.bf16.mxu0 0
    %722 = vmatpush1.bf16.msra.mxu0 %v561
    %723 = vmatprep.subr.bf16.mxu0 0
    %724 = vmatpush1.bf16.msra.mxu0 %v560
    %725 = vmatprep.subr.bf16.mxu0 0
    %726 = vmatpush1.bf16.msra.mxu0 %v559
    %727 = vmatprep.subr.bf16.mxu0 0
    %728 = vmatpush2.bf16.msra.mxu0 %v574
    %729 = vmatprep.subr.bf16.mxu0 0
    %730 = vmatpush2.bf16.msra.mxu0 %v573
    %731 = vmatprep.subr.bf16.mxu0 0
    %732 = vmatpush2.bf16.msra.mxu0 %v572
    %733 = vmatprep.subr.bf16.mxu0 0
    %734 = vmatpush2.bf16.msra.mxu0 %v571
    %735 = vmatprep.subr.bf16.mxu0 0
    %736 = vmatpush2.bf16.msra.mxu0 %v570
    %737 = vmatprep.subr.bf16.mxu0 0
    %738 = vmatpush2.bf16.msra.mxu0 %v569
    %739 = vmatprep.subr.bf16.mxu0 0
    %740 = vmatpush2.bf16.msra.mxu0 %v568
    %741 = vmatprep.subr.bf16.mxu0 0
    %742 = vmatpush2.bf16.msra.mxu0 %v567
    %743 = vmatprep.mubr.bf16.mxu0 %v274
    %744 = vmatmul.mubr.bf16.gmra.mxu0 %v273
    %v745 = vpop.f32.mrf.mxu0
    %v746 = vadd.f32 %v706, %v745
    %v747 = vpop.f32.mrf.mxu0
    %v748 = vpop.f32.mrf.mxu0
    %v749 = vpop.f32.mrf.mxu0
    %750 = vdwg.mxu0
    %751 = vmatprep.subr.bf16.mxu0 0
    %752 = vmatpush1.bf16.msra.mxu0 %v582
    %753 = vmatprep.subr.bf16.mxu0 0
    %754 = vmatpush1.bf16.msra.mxu0 %v581
    %755 = vmatprep.subr.bf16.mxu0 0
    %756 = vmatpush1.bf16.msra.mxu0 %v580
    %757 = vmatprep.subr.bf16.mxu0 0
    %758 = vmatpush1.bf16.msra.mxu0 %v579
    %759 = vmatprep.subr.bf16.mxu0 0
    %760 = vmatpush1.bf16.msra.mxu0 %v578
    %761 = vmatprep.subr.bf16.mxu0 0
    %762 = vmatpush1.bf16.msra.mxu0 %v577
    %763 = vmatprep.subr.bf16.mxu0 0
    %764 = vmatpush1.bf16.msra.mxu0 %v576
    %765 = vmatprep.subr.bf16.mxu0 0
    %766 = vmatpush1.bf16.msra.mxu0 %v575
    %767 = vmatprep.subr.bf16.mxu0 0
    %768 = vmatpush2.bf16.msra.mxu0 %v590
    %769 = vmatprep.subr.bf16.mxu0 0
    %770 = vmatpush2.bf16.msra.mxu0 %v589
    %771 = vmatprep.subr.bf16.mxu0 0
    %772 = vmatpush2.bf16.msra.mxu0 %v588
    %773 = vmatprep.subr.bf16.mxu0 0
    %774 = vmatpush2.bf16.msra.mxu0 %v587
    %775 = vmatprep.subr.bf16.mxu0 0
    %776 = vmatpush2.bf16.msra.mxu0 %v586
    %777 = vmatprep.subr.bf16.mxu0 0
    %778 = vmatpush2.bf16.msra.mxu0 %v585
    %779 = vmatprep.subr.bf16.mxu0 0
    %780 = vmatpush2.bf16.msra.mxu0 %v584
    %781 = vmatprep.subr.bf16.mxu0 0
    %782 = vmatpush2.bf16.msra.mxu0 %v583
    %783 = vmatprep.mubr.bf16.mxu0 %v276
    %784 = vmatmul.mubr.bf16.gmra.mxu0 %v275
    %v785 = vpop.f32.mrf.mxu0
    %v786 = vadd.f32 %v746, %v785
    %v787 = vpop.f32.mrf.mxu0
    %v788 = vpop.f32.mrf.mxu0
    %v789 = vpop.f32.mrf.mxu0
    %790 = vdwg.mxu0
    %791 = vmatprep.subr.bf16.mxu0 0
    %792 = vmatpush1.bf16.msra.mxu0 %v598
    %793 = vmatprep.subr.bf16.mxu0 0
    %794 = vmatpush1.bf16.msra.mxu0 %v597
    %795 = vmatprep.subr.bf16.mxu0 0
    %796 = vmatpush1.bf16.msra.mxu0 %v596
    %797 = vmatprep.subr.bf16.mxu0 0
    %798 = vmatpush1.bf16.msra.mxu0 %v595
    %799 = vmatprep.subr.bf16.mxu0 0
    %800 = vmatpush1.bf16.msra.mxu0 %v594
    %801 = vmatprep.subr.bf16.mxu0 0
    %802 = vmatpush1.bf16.msra.mxu0 %v593
    %803 = vmatprep.subr.bf16.mxu0 0
    %804 = vmatpush1.bf16.msra.mxu0 %v592
    %805 = vmatprep.subr.bf16.mxu0 0
    %806 = vmatpush1.bf16.msra.mxu0 %v591
    %807 = vmatprep.subr.bf16.mxu0 0
    %808 = vmatpush2.bf16.msra.mxu0 %v606
    %809 = vmatprep.subr.bf16.mxu0 0
    %810 = vmatpush2.bf16.msra.mxu0 %v605
    %811 = vmatprep.subr.bf16.mxu0 0
    %812 = vmatpush2.bf16.msra.mxu0 %v604
    %813 = vmatprep.subr.bf16.mxu0 0
    %814 = vmatpush2.bf16.msra.mxu0 %v603
    %815 = vmatprep.subr.bf16.mxu0 0
    %816 = vmatpush2.bf16.msra.mxu0 %v602
    %817 = vmatprep.subr.bf16.mxu0 0
    %818 = vmatpush2.bf16.msra.mxu0 %v601
    %819 = vmatprep.subr.bf16.mxu0 0
    %820 = vmatpush2.bf16.msra.mxu0 %v600
    %821 = vmatprep.subr.bf16.mxu0 0
    %822 = vmatpush2.bf16.msra.mxu0 %v599
    %823 = vmatprep.mubr.bf16.mxu0 %v278
    %824 = vmatmul.mubr.bf16.gmra.mxu0 %v277
    %v825 = vpop.f32.mrf.mxu0
    %v826 = vadd.f32 %v786, %v825
    %v827 = vpop.f32.mrf.mxu0
    %v828 = vpop.f32.mrf.mxu0
    %v829 = vpop.f32.mrf.mxu0
    %830 = vdwg.mxu0
    %v831 = vmax.f32 %v826, 0.0
    %v832 = vmul.f32 %v831, 0.1
    %v833 = vmul.f32 %v831, 0.4
    %v835 = vrot.slane %v833, 2
    %v837 = vadd.f32 %v832, %v835
    %v838 = vmul.f32 %v831, 0.5
    %v840 = vrot.slane %v838, 4
    %v842 = vadd.f32 %v837, %v840
    %v843 = vld [vmem:[#allocation8] sm:$0xff]
    %v844 = vld [vmem:[#allocation8 + $0x8] sm:$0xff]
    %v845 = vld [vmem:[#allocation8 + $0x10] sm:$0xff]
    %v846 = vld [vmem:[#allocation8 + $0x18] sm:$0xff]
    %v847 = vld [vmem:[#allocation8 + $0x20] sm:$0xff]
    %v848 = vld [vmem:[#allocation8 + $0x28] sm:$0xff]
    %v849 = vld [vmem:[#allocation8 + $0x30] sm:$0xff]
    %v850 = vld [vmem:[#allocation8 + $0x38] sm:$0xff]
    %v851 = vld [vmem:[#allocation8 + $0x40] sm:$0xff]
    %v852 = vld [vmem:[#allocation8 + $0x48] sm:$0xff]
    %v853 = vld [vmem:[#allocation8 + $0x50] sm:$0xff]
    %v854 = vld [vmem:[#allocation8 + $0x58] sm:$0xff]
    %v855 = vld [vmem:[#allocation8 + $0x60] sm:$0xff]
    %v856 = vld [vmem:[#allocation8 + $0x68] sm:$0xff]
    %v857 = vld [vmem:[#allocation8 + $0x70] sm:$0xff]
    %v858 = vld [vmem:[#allocation8 + $0x78] sm:$0xff]
    %v859 = vpack.c.bf16 %v842, %v842
    %v861 = vlaneseq
    %v862 = vshrl.u32 %v861, 7
    %v863 = vsub.s32 0, %v862
    %v864 = vrot.slane %v111, %v863
    %v865 = vlaneseq
    %v866 = vshrl.u32 %v865, 7
    %v867 = vsub.s32 1, %v866
    %v868 = vrot.slane %v111, %v867
    %v887 = vunpack.c.l.b16 %v843
    %v888 = vunpack.c.h.b16 %v843
    %v889 = vunpack.c.l.b16 %v844
    %v890 = vunpack.c.h.b16 %v844
    %v891 = vunpack.c.l.b16 %v845
    %v892 = vunpack.c.h.b16 %v845
    %v893 = vunpack.c.l.b16 %v846
    %v894 = vunpack.c.h.b16 %v846
    %v895 = vunpack.c.l.b16 %v847
    %v896 = vunpack.c.h.b16 %v847
    %v897 = vunpack.c.l.b16 %v848
    %v898 = vunpack.c.h.b16 %v848
    %v899 = vunpack.c.l.b16 %v849
    %v900 = vunpack.c.h.b16 %v849
    %v901 = vunpack.c.l.b16 %v850
    %v902 = vunpack.c.h.b16 %v850
    %v903 = vunpack.c.l.b16 %v851
    %v904 = vunpack.c.h.b16 %v851
    %v905 = vunpack.c.l.b16 %v852
    %v906 = vunpack.c.h.b16 %v852
    %v907 = vunpack.c.l.b16 %v853
    %v908 = vunpack.c.h.b16 %v853
    %v909 = vunpack.c.l.b16 %v854
    %v910 = vunpack.c.h.b16 %v854
    %v911 = vunpack.c.l.b16 %v855
    %v912 = vunpack.c.h.b16 %v855
    %v913 = vunpack.c.l.b16 %v856
    %v914 = vunpack.c.h.b16 %v856
    %v915 = vunpack.c.l.b16 %v857
    %v916 = vunpack.c.h.b16 %v857
    %v917 = vunpack.c.l.b16 %v858
    %v918 = vunpack.c.h.b16 %v858
    %v919 = vpack.c.b16 %v889, %v887
    %v920 = vpack.c.b16 %v890, %v888
    %v921 = vpack.c.b16 %v893, %v891
    %v922 = vpack.c.b16 %v894, %v892
    %v923 = vpack.c.b16 %v897, %v895
    %v924 = vpack.c.b16 %v898, %v896
    %v925 = vpack.c.b16 %v901, %v899
    %v926 = vpack.c.b16 %v902, %v900
    %v927 = vpack.c.b16 %v905, %v903
    %v928 = vpack.c.b16 %v906, %v904
    %v929 = vpack.c.b16 %v909, %v907
    %v930 = vpack.c.b16 %v910, %v908
    %v931 = vpack.c.b16 %v913, %v911
    %v932 = vpack.c.b16 %v914, %v912
    %v933 = vpack.c.b16 %v917, %v915
    %v934 = vpack.c.b16 %v918, %v916
    %951 = vmatprep.subr.bf16.mxu0 %v934
    %952 = vmatpush1.bf16.msra.mxu0 %v933
    %953 = vmatprep.subr.bf16.mxu0 %v932
    %954 = vmatpush1.bf16.msra.mxu0 %v931
    %955 = vmatprep.subr.bf16.mxu0 %v930
    %956 = vmatpush1.bf16.msra.mxu0 %v929
    %957 = vmatprep.subr.bf16.mxu0 %v928
    %958 = vmatpush1.bf16.msra.mxu0 %v927
    %959 = vmatprep.subr.bf16.mxu0 %v926
    %960 = vmatpush1.bf16.msra.mxu0 %v925
    %961 = vmatprep.subr.bf16.mxu0 %v924
    %962 = vmatpush1.bf16.msra.mxu0 %v923
    %963 = vmatprep.subr.bf16.mxu0 %v922
    %964 = vmatpush1.bf16.msra.mxu0 %v921
    %965 = vmatprep.subr.bf16.mxu0 %v920
    %966 = vmatpush1.bf16.msra.mxu0 %v919
    %967 = vmatprep.subr.bf16.mxu0 0
    %968 = vmatpush2.bf16.msra.mxu0 0
    %969 = vmatprep.subr.bf16.mxu0 0
    %970 = vmatpush2.bf16.msra.mxu0 0
    %971 = vmatprep.subr.bf16.mxu0 0
    %972 = vmatpush2.bf16.msra.mxu0 0
    %973 = vmatprep.subr.bf16.mxu0 0
    %974 = vmatpush2.bf16.msra.mxu0 0
    %975 = vmatprep.subr.bf16.mxu0 0
    %976 = vmatpush2.bf16.msra.mxu0 0
    %977 = vmatprep.subr.bf16.mxu0 0
    %978 = vmatpush2.bf16.msra.mxu0 0
    %979 = vmatprep.subr.bf16.mxu0 0
    %980 = vmatpush2.bf16.msra.mxu0 0
    %981 = vmatprep.subr.bf16.mxu0 0
    %982 = vmatpush2.bf16.msra.mxu0 0
    %983 = vmatprep.mubr.bf16.mxu0 0
    %984 = vmatmul.mubr.bf16.gmra.mxu0 %v859
    %v985 = vpop.f32.mrf.mxu0
    %v986 = vadd.f32 %v864, %v985
    %v987 = vpop.f32.mrf.mxu0
    %v988 = vadd.f32 %v868, %v987
    %v989 = vpop.f32.mrf.mxu0
    %v990 = vpop.f32.mrf.mxu0
    %991 = vdwg.mxu0
    %s992 = smul.u32 4, 32
    %s993 = smul.u32 %s992, 6
    %s994 = sshll.u32 %s993, 4
    %995 = dma.done [#allocation3], %s994
    %v996 = vld [vmem:[#allocation2] sm:$0xff]
    %v997 = vld [vmem:[#allocation2 + $0x8] sm:$0xff]
    %v998 = vld [vmem:[#allocation2 + $0x10] sm:$0xff]
    %v999 = vld [vmem:[#allocation2 + $0x18] sm:$0xff]
    %v1000 = vld [vmem:[#allocation2 + $0x20] sm:$0xff]
    %v1001 = vld [vmem:[#allocation2 + $0x28] sm:$0xff]
    %v1002 = vld [vmem:[#allocation2 + $0x30] sm:$0xff]
    %v1003 = vld [vmem:[#allocation2 + $0x38] sm:$0xff]
    %v1004 = vld [vmem:[#allocation2 + $0x40] sm:$0xff]
    %v1005 = vld [vmem:[#allocation2 + $0x48] sm:$0xff]
    %v1006 = vld [vmem:[#allocation2 + $0x50] sm:$0xff]
    %v1007 = vld [vmem:[#allocation2 + $0x58] sm:$0xff]
    %v1008 = vld [vmem:[#allocation2 + $0x60] sm:$0xff]
    %v1009 = vld [vmem:[#allocation2 + $0x68] sm:$0xff]
    %v1010 = vld [vmem:[#allocation2 + $0x70] sm:$0xff]
    %v1011 = vld [vmem:[#allocation2 + $0x78] sm:$0xff]
    %v1012 = vld [vmem:[#allocation2 + $0x80] sm:$0xff]
    %v1013 = vld [vmem:[#allocation2 + $0x88] sm:$0xff]
    %v1014 = vld [vmem:[#allocation2 + $0x90] sm:$0xff]
    %v1015 = vld [vmem:[#allocation2 + $0x98] sm:$0xff]
    %v1016 = vld [vmem:[#allocation2 + $0xa0] sm:$0xff]
    %v1017 = vld [vmem:[#allocation2 + $0xa8] sm:$0xff]
    %v1018 = vld [vmem:[#allocation2 + $0xb0] sm:$0xff]
    %v1019 = vld [vmem:[#allocation2 + $0xb8] sm:$0xff]
    %v1020 = vld [vmem:[#allocation2 + $0xc0] sm:$0xff]
    %v1021 = vld [vmem:[#allocation2 + $0xc8] sm:$0xff]
    %v1022 = vld [vmem:[#allocation2 + $0xd0] sm:$0xff]
    %v1023 = vld [vmem:[#allocation2 + $0xd8] sm:$0xff]
    %v1024 = vld [vmem:[#allocation2 + $0xe0] sm:$0xff]
    %v1025 = vld [vmem:[#allocation2 + $0xe8] sm:$0xff]
    %v1026 = vld [vmem:[#allocation2 + $0xf0] sm:$0xff]
    %v1027 = vld [vmem:[#allocation2 + $0xf8] sm:$0xff]
    %v1028 = vld [vmem:[#allocation2 + $0x100] sm:$0xff]
    %v1029 = vld [vmem:[#allocation2 + $0x108] sm:$0xff]
    %v1030 = vld [vmem:[#allocation2 + $0x110] sm:$0xff]
    %v1031 = vld [vmem:[#allocation2 + $0x118] sm:$0xff]
    %v1032 = vld [vmem:[#allocation2 + $0x120] sm:$0xff]
    %v1033 = vld [vmem:[#allocation2 + $0x128] sm:$0xff]
    %v1034 = vld [vmem:[#allocation2 + $0x130] sm:$0xff]
    %v1035 = vld [vmem:[#allocation2 + $0x138] sm:$0xff]
    %v1036 = vld [vmem:[#allocation2 + $0x140] sm:$0xff]
    %v1037 = vld [vmem:[#allocation2 + $0x148] sm:$0xff]
    %v1038 = vld [vmem:[#allocation2 + $0x150] sm:$0xff]
    %v1039 = vld [vmem:[#allocation2 + $0x158] sm:$0xff]
    %v1040 = vld [vmem:[#allocation2 + $0x160] sm:$0xff]
    %v1041 = vld [vmem:[#allocation2 + $0x168] sm:$0xff]
    %v1042 = vld [vmem:[#allocation2 + $0x170] sm:$0xff]
    %v1043 = vld [vmem:[#allocation2 + $0x178] sm:$0xff]
    %v1044 = vld [vmem:[#allocation2 + $0x180] sm:$0xff]
    %v1045 = vld [vmem:[#allocation2 + $0x188] sm:$0xff]
    %v1046 = vld [vmem:[#allocation2 + $0x190] sm:$0xff]
    %v1047 = vld [vmem:[#allocation2 + $0x198] sm:$0xff]
    %v1048 = vld [vmem:[#allocation2 + $0x1a0] sm:$0xff]
    %v1049 = vld [vmem:[#allocation2 + $0x1a8] sm:$0xff]
    %v1050 = vld [vmem:[#allocation2 + $0x1b0] sm:$0xff]
    %v1051 = vld [vmem:[#allocation2 + $0x1b8] sm:$0xff]
    %v1052 = vld [vmem:[#allocation2 + $0x1c0] sm:$0xff]
    %v1053 = vld [vmem:[#allocation2 + $0x1c8] sm:$0xff]
    %v1054 = vld [vmem:[#allocation2 + $0x1d0] sm:$0xff]
    %v1055 = vld [vmem:[#allocation2 + $0x1d8] sm:$0xff]
    %v1056 = vld [vmem:[#allocation2 + $0x1e0] sm:$0xff]
    %v1057 = vld [vmem:[#allocation2 + $0x1e8] sm:$0xff]
    %v1058 = vld [vmem:[#allocation2 + $0x1f0] sm:$0xff]
    %v1059 = vld [vmem:[#allocation2 + $0x1f8] sm:$0xff]
    %v1060 = vld [vmem:[#allocation2 + $0x200] sm:$0xff]
    %v1061 = vld [vmem:[#allocation2 + $0x208] sm:$0xff]
    %v1062 = vld [vmem:[#allocation2 + $0x210] sm:$0xff]
    %v1063 = vld [vmem:[#allocation2 + $0x218] sm:$0xff]
    %v1064 = vld [vmem:[#allocation2 + $0x220] sm:$0xff]
    %v1065 = vld [vmem:[#allocation2 + $0x228] sm:$0xff]
    %v1066 = vld [vmem:[#allocation2 + $0x230] sm:$0xff]
    %v1067 = vld [vmem:[#allocation2 + $0x238] sm:$0xff]
    %v1068 = vld [vmem:[#allocation2 + $0x240] sm:$0xff]
    %v1069 = vld [vmem:[#allocation2 + $0x248] sm:$0xff]
    %v1070 = vld [vmem:[#allocation2 + $0x250] sm:$0xff]
    %v1071 = vld [vmem:[#allocation2 + $0x258] sm:$0xff]
    %v1072 = vld [vmem:[#allocation2 + $0x260] sm:$0xff]
    %v1073 = vld [vmem:[#allocation2 + $0x268] sm:$0xff]
    %v1074 = vld [vmem:[#allocation2 + $0x270] sm:$0xff]
    %v1075 = vld [vmem:[#allocation2 + $0x278] sm:$0xff]
    %v1076 = vld [vmem:[#allocation2 + $0x280] sm:$0xff]
    %v1077 = vld [vmem:[#allocation2 + $0x288] sm:$0xff]
    %v1078 = vld [vmem:[#allocation2 + $0x290] sm:$0xff]
    %v1079 = vld [vmem:[#allocation2 + $0x298] sm:$0xff]
    %v1080 = vld [vmem:[#allocation2 + $0x2a0] sm:$0xff]
    %v1081 = vld [vmem:[#allocation2 + $0x2a8] sm:$0xff]
    %v1082 = vld [vmem:[#allocation2 + $0x2b0] sm:$0xff]
    %v1083 = vld [vmem:[#allocation2 + $0x2b8] sm:$0xff]
    %v1084 = vld [vmem:[#allocation2 + $0x2c0] sm:$0xff]
    %v1085 = vld [vmem:[#allocation2 + $0x2c8] sm:$0xff]
    %v1086 = vld [vmem:[#allocation2 + $0x2d0] sm:$0xff]
    %v1087 = vld [vmem:[#allocation2 + $0x2d8] sm:$0xff]
    %v1088 = vld [vmem:[#allocation2 + $0x2e0] sm:$0xff]
    %v1089 = vld [vmem:[#allocation2 + $0x2e8] sm:$0xff]
    %v1090 = vld [vmem:[#allocation2 + $0x2f0] sm:$0xff]
    %v1091 = vld [vmem:[#allocation2 + $0x2f8] sm:$0xff]
    %v1092 = vpack.c.bf16 %v986, %v986
    %v1093 = vpack.c.bf16 %v988, %v988
    %v1095 = vlaneseq
    %v1096 = vshrl.u32 %v1095, 7
    %v1097 = vsub.s32 0, %v1096
    %v1098 = vrot.slane %v115, %v1097
    %v1099 = vlaneseq
    %v1100 = vshrl.u32 %v1099, 7
    %v1101 = vsub.s32 1, %v1100
    %v1102 = vrot.slane %v115, %v1101
    %v1103 = vlaneseq
    %v1104 = vshrl.u32 %v1103, 7
    %v1105 = vsub.s32 2, %v1104
    %v1106 = vrot.slane %v115, %v1105
    %v1107 = vlaneseq
    %v1108 = vshrl.u32 %v1107, 7
    %v1109 = vsub.s32 3, %v1108
    %v1110 = vrot.slane %v115, %v1109
    %v1111 = vlaneseq
    %v1112 = vshrl.u32 %v1111, 7
    %v1113 = vsub.s32 4, %v1112
    %v1114 = vrot.slane %v115, %v1113
    %v1115 = vlaneseq
    %v1116 = vshrl.u32 %v1115, 7
    %v1117 = vsub.s32 5, %v1116
    %v1118 = vrot.slane %v115, %v1117
    %v1221 = vunpack.c.l.b16 %v996
    %v1222 = vunpack.c.h.b16 %v996
    %v1223 = vunpack.c.l.b16 %v997
    %v1224 = vunpack.c.h.b16 %v997
    %v1225 = vunpack.c.l.b16 %v998
    %v1226 = vunpack.c.h.b16 %v998
    %v1227 = vunpack.c.l.b16 %v999
    %v1228 = vunpack.c.h.b16 %v999
    %v1229 = vunpack.c.l.b16 %v1000
    %v1230 = vunpack.c.h.b16 %v1000
    %v1231 = vunpack.c.l.b16 %v1001
    %v1232 = vunpack.c.h.b16 %v1001
    %v1233 = vunpack.c.l.b16 %v1002
    %v1234 = vunpack.c.h.b16 %v1002
    %v1235 = vunpack.c.l.b16 %v1003
    %v1236 = vunpack.c.h.b16 %v1003
    %v1237 = vunpack.c.l.b16 %v1004
    %v1238 = vunpack.c.h.b16 %v1004
    %v1239 = vunpack.c.l.b16 %v1005
    %v1240 = vunpack.c.h.b16 %v1005
    %v1241 = vunpack.c.l.b16 %v1006
    %v1242 = vunpack.c.h.b16 %v1006
    %v1243 = vunpack.c.l.b16 %v1007
    %v1244 = vunpack.c.h.b16 %v1007
    %v1245 = vunpack.c.l.b16 %v1008
    %v1246 = vunpack.c.h.b16 %v1008
    %v1247 = vunpack.c.l.b16 %v1009
    %v1248 = vunpack.c.h.b16 %v1009
    %v1249 = vunpack.c.l.b16 %v1010
    %v1250 = vunpack.c.h.b16 %v1010
    %v1251 = vunpack.c.l.b16 %v1011
    %v1252 = vunpack.c.h.b16 %v1011
    %v1253 = vunpack.c.l.b16 %v1012
    %v1254 = vunpack.c.h.b16 %v1012
    %v1255 = vunpack.c.l.b16 %v1013
    %v1256 = vunpack.c.h.b16 %v1013
    %v1257 = vunpack.c.l.b16 %v1014
    %v1258 = vunpack.c.h.b16 %v1014
    %v1259 = vunpack.c.l.b16 %v1015
    %v1260 = vunpack.c.h.b16 %v1015
    %v1261 = vunpack.c.l.b16 %v1016
    %v1262 = vunpack.c.h.b16 %v1016
    %v1263 = vunpack.c.l.b16 %v1017
    %v1264 = vunpack.c.h.b16 %v1017
    %v1265 = vunpack.c.l.b16 %v1018
    %v1266 = vunpack.c.h.b16 %v1018
    %v1267 = vunpack.c.l.b16 %v1019
    %v1268 = vunpack.c.h.b16 %v1019
    %v1269 = vunpack.c.l.b16 %v1020
    %v1270 = vunpack.c.h.b16 %v1020
    %v1271 = vunpack.c.l.b16 %v1021
    %v1272 = vunpack.c.h.b16 %v1021
    %v1273 = vunpack.c.l.b16 %v1022
    %v1274 = vunpack.c.h.b16 %v1022
    %v1275 = vunpack.c.l.b16 %v1023
    %v1276 = vunpack.c.h.b16 %v1023
    %v1277 = vunpack.c.l.b16 %v1024
    %v1278 = vunpack.c.h.b16 %v1024
    %v1279 = vunpack.c.l.b16 %v1025
    %v1280 = vunpack.c.h.b16 %v1025
    %v1281 = vunpack.c.l.b16 %v1026
    %v1282 = vunpack.c.h.b16 %v1026
    %v1283 = vunpack.c.l.b16 %v1027
    %v1284 = vunpack.c.h.b16 %v1027
    %v1285 = vunpack.c.l.b16 %v1028
    %v1286 = vunpack.c.h.b16 %v1028
    %v1287 = vunpack.c.l.b16 %v1029
    %v1288 = vunpack.c.h.b16 %v1029
    %v1289 = vunpack.c.l.b16 %v1030
    %v1290 = vunpack.c.h.b16 %v1030
    %v1291 = vunpack.c.l.b16 %v1031
    %v1292 = vunpack.c.h.b16 %v1031
    %v1293 = vunpack.c.l.b16 %v1032
    %v1294 = vunpack.c.h.b16 %v1032
    %v1295 = vunpack.c.l.b16 %v1033
    %v1296 = vunpack.c.h.b16 %v1033
    %v1297 = vunpack.c.l.b16 %v1034
    %v1298 = vunpack.c.h.b16 %v1034
    %v1299 = vunpack.c.l.b16 %v1035
    %v1300 = vunpack.c.h.b16 %v1035
    %v1301 = vunpack.c.l.b16 %v1036
    %v1302 = vunpack.c.h.b16 %v1036
    %v1303 = vunpack.c.l.b16 %v1037
    %v1304 = vunpack.c.h.b16 %v1037
    %v1305 = vunpack.c.l.b16 %v1038
    %v1306 = vunpack.c.h.b16 %v1038
    %v1307 = vunpack.c.l.b16 %v1039
    %v1308 = vunpack.c.h.b16 %v1039
    %v1309 = vunpack.c.l.b16 %v1040
    %v1310 = vunpack.c.h.b16 %v1040
    %v1311 = vunpack.c.l.b16 %v1041
    %v1312 = vunpack.c.h.b16 %v1041
    %v1313 = vunpack.c.l.b16 %v1042
    %v1314 = vunpack.c.h.b16 %v1042
    %v1315 = vunpack.c.l.b16 %v1043
    %v1316 = vunpack.c.h.b16 %v1043
    %v1317 = vunpack.c.l.b16 %v1044
    %v1318 = vunpack.c.h.b16 %v1044
    %v1319 = vunpack.c.l.b16 %v1045
    %v1320 = vunpack.c.h.b16 %v1045
    %v1321 = vunpack.c.l.b16 %v1046
    %v1322 = vunpack.c.h.b16 %v1046
    %v1323 = vunpack.c.l.b16 %v1047
    %v1324 = vunpack.c.h.b16 %v1047
    %v1325 = vunpack.c.l.b16 %v1048
    %v1326 = vunpack.c.h.b16 %v1048
    %v1327 = vunpack.c.l.b16 %v1049
    %v1328 = vunpack.c.h.b16 %v1049
    %v1329 = vunpack.c.l.b16 %v1050
    %v1330 = vunpack.c.h.b16 %v1050
    %v1331 = vunpack.c.l.b16 %v1051
    %v1332 = vunpack.c.h.b16 %v1051
    %v1333 = vunpack.c.l.b16 %v1052
    %v1334 = vunpack.c.h.b16 %v1052
    %v1335 = vunpack.c.l.b16 %v1053
    %v1336 = vunpack.c.h.b16 %v1053
    %v1337 = vunpack.c.l.b16 %v1054
    %v1338 = vunpack.c.h.b16 %v1054
    %v1339 = vunpack.c.l.b16 %v1055
    %v1340 = vunpack.c.h.b16 %v1055
    %v1341 = vunpack.c.l.b16 %v1056
    %v1342 = vunpack.c.h.b16 %v1056
    %v1343 = vunpack.c.l.b16 %v1057
    %v1344 = vunpack.c.h.b16 %v1057
    %v1345 = vunpack.c.l.b16 %v1058
    %v1346 = vunpack.c.h.b16 %v1058
    %v1347 = vunpack.c.l.b16 %v1059
    %v1348 = vunpack.c.h.b16 %v1059
    %v1349 = vunpack.c.l.b16 %v1060
    %v1350 = vunpack.c.h.b16 %v1060
    %v1351 = vunpack.c.l.b16 %v1061
    %v1352 = vunpack.c.h.b16 %v1061
    %v1353 = vunpack.c.l.b16 %v1062
    %v1354 = vunpack.c.h.b16 %v1062
    %v1355 = vunpack.c.l.b16 %v1063
    %v1356 = vunpack.c.h.b16 %v1063
    %v1357 = vunpack.c.l.b16 %v1064
    %v1358 = vunpack.c.h.b16 %v1064
    %v1359 = vunpack.c.l.b16 %v1065
    %v1360 = vunpack.c.h.b16 %v1065
    %v1361 = vunpack.c.l.b16 %v1066
    %v1362 = vunpack.c.h.b16 %v1066
    %v1363 = vunpack.c.l.b16 %v1067
    %v1364 = vunpack.c.h.b16 %v1067
    %v1365 = vunpack.c.l.b16 %v1068
    %v1366 = vunpack.c.h.b16 %v1068
    %v1367 = vunpack.c.l.b16 %v1069
    %v1368 = vunpack.c.h.b16 %v1069
    %v1369 = vunpack.c.l.b16 %v1070
    %v1370 = vunpack.c.h.b16 %v1070
    %v1371 = vunpack.c.l.b16 %v1071
    %v1372 = vunpack.c.h.b16 %v1071
    %v1373 = vunpack.c.l.b16 %v1072
    %v1374 = vunpack.c.h.b16 %v1072
    %v1375 = vunpack.c.l.b16 %v1073
    %v1376 = vunpack.c.h.b16 %v1073
    %v1377 = vunpack.c.l.b16 %v1074
    %v1378 = vunpack.c.h.b16 %v1074
    %v1379 = vunpack.c.l.b16 %v1075
    %v1380 = vunpack.c.h.b16 %v1075
    %v1381 = vunpack.c.l.b16 %v1076
    %v1382 = vunpack.c.h.b16 %v1076
    %v1383 = vunpack.c.l.b16 %v1077
    %v1384 = vunpack.c.h.b16 %v1077
    %v1385 = vunpack.c.l.b16 %v1078
    %v1386 = vunpack.c.h.b16 %v1078
    %v1387 = vunpack.c.l.b16 %v1079
    %v1388 = vunpack.c.h.b16 %v1079
    %v1389 = vunpack.c.l.b16 %v1080
    %v1390 = vunpack.c.h.b16 %v1080
    %v1391 = vunpack.c.l.b16 %v1081
    %v1392 = vunpack.c.h.b16 %v1081
    %v1393 = vunpack.c.l.b16 %v1082
    %v1394 = vunpack.c.h.b16 %v1082
    %v1395 = vunpack.c.l.b16 %v1083
    %v1396 = vunpack.c.h.b16 %v1083
    %v1397 = vunpack.c.l.b16 %v1084
    %v1398 = vunpack.c.h.b16 %v1084
    %v1399 = vunpack.c.l.b16 %v1085
    %v1400 = vunpack.c.h.b16 %v1085
    %v1401 = vunpack.c.l.b16 %v1086
    %v1402 = vunpack.c.h.b16 %v1086
    %v1403 = vunpack.c.l.b16 %v1087
    %v1404 = vunpack.c.h.b16 %v1087
    %v1405 = vunpack.c.l.b16 %v1088
    %v1406 = vunpack.c.h.b16 %v1088
    %v1407 = vunpack.c.l.b16 %v1089
    %v1408 = vunpack.c.h.b16 %v1089
    %v1409 = vunpack.c.l.b16 %v1090
    %v1410 = vunpack.c.h.b16 %v1090
    %v1411 = vunpack.c.l.b16 %v1091
    %v1412 = vunpack.c.h.b16 %v1091
    %v1413 = vpack.c.b16 %v1227, %v1221
    %v1414 = vpack.c.b16 %v1228, %v1222
    %v1415 = vpack.c.b16 %v1229, %v1223
    %v1416 = vpack.c.b16 %v1230, %v1224
    %v1417 = vpack.c.b16 %v1231, %v1225
    %v1418 = vpack.c.b16 %v1232, %v1226
    %v1419 = vpack.c.b16 %v1239, %v1233
    %v1420 = vpack.c.b16 %v1240, %v1234
    %v1421 = vpack.c.b16 %v1241, %v1235
    %v1422 = vpack.c.b16 %v1242, %v1236
    %v1423 = vpack.c.b16 %v1243, %v1237
    %v1424 = vpack.c.b16 %v1244, %v1238
    %v1425 = vpack.c.b16 %v1251, %v1245
    %v1426 = vpack.c.b16 %v1252, %v1246
    %v1427 = vpack.c.b16 %v1253, %v1247
    %v1428 = vpack.c.b16 %v1254, %v1248
    %v1429 = vpack.c.b16 %v1255, %v1249
    %v1430 = vpack.c.b16 %v1256, %v1250
    %v1431 = vpack.c.b16 %v1263, %v1257
    %v1432 = vpack.c.b16 %v1264, %v1258
    %v1433 = vpack.c.b16 %v1265, %v1259
    %v1434 = vpack.c.b16 %v1266, %v1260
    %v1435 = vpack.c.b16 %v1267, %v1261
    %v1436 = vpack.c.b16 %v1268, %v1262
    %v1437 = vpack.c.b16 %v1275, %v1269
    %v1438 = vpack.c.b16 %v1276, %v1270
    %v1439 = vpack.c.b16 %v1277, %v1271
    %v1440 = vpack.c.b16 %v1278, %v1272
    %v1441 = vpack.c.b16 %v1279, %v1273
    %v1442 = vpack.c.b16 %v1280, %v1274
    %v1443 = vpack.c.b16 %v1287, %v1281
    %v1444 = vpack.c.b16 %v1288, %v1282
    %v1445 = vpack.c.b16 %v1289, %v1283
    %v1446 = vpack.c.b16 %v1290, %v1284
    %v1447 = vpack.c.b16 %v1291, %v1285
    %v1448 = vpack.c.b16 %v1292, %v1286
    %v1449 = vpack.c.b16 %v1299, %v1293
    %v1450 = vpack.c.b16 %v1300, %v1294
    %v1451 = vpack.c.b16 %v1301, %v1295
    %v1452 = vpack.c.b16 %v1302, %v1296
    %v1453 = vpack.c.b16 %v1303, %v1297
    %v1454 = vpack.c.b16 %v1304, %v1298
    %v1455 = vpack.c.b16 %v1311, %v1305
    %v1456 = vpack.c.b16 %v1312, %v1306
    %v1457 = vpack.c.b16 %v1313, %v1307
    %v1458 = vpack.c.b16 %v1314, %v1308
    %v1459 = vpack.c.b16 %v1315, %v1309
    %v1460 = vpack.c.b16 %v1316, %v1310
    %v1461 = vpack.c.b16 %v1323, %v1317
    %v1462 = vpack.c.b16 %v1324, %v1318
    %v1463 = vpack.c.b16 %v1325, %v1319
    %v1464 = vpack.c.b16 %v1326, %v1320
    %v1465 = vpack.c.b16 %v1327, %v1321
    %v1466 = vpack.c.b16 %v1328, %v1322
    %v1467 = vpack.c.b16 %v1335, %v1329
    %v1468 = vpack.c.b16 %v1336, %v1330
    %v1469 = vpack.c.b16 %v1337, %v1331
    %v1470 = vpack.c.b16 %v1338, %v1332
    %v1471 = vpack.c.b16 %v1339, %v1333
    %v1472 = vpack.c.b16 %v1340, %v1334
    %v1473 = vpack.c.b16 %v1347, %v1341
    %v1474 = vpack.c.b16 %v1348, %v1342
    %v1475 = vpack.c.b16 %v1349, %v1343
    %v1476 = vpack.c.b16 %v1350, %v1344
    %v1477 = vpack.c.b16 %v1351, %v1345
    %v1478 = vpack.c.b16 %v1352, %v1346
    %v1479 = vpack.c.b16 %v1359, %v1353
    %v1480 = vpack.c.b16 %v1360, %v1354
    %v1481 = vpack.c.b16 %v1361, %v1355
    %v1482 = vpack.c.b16 %v1362, %v1356
    %v1483 = vpack.c.b16 %v1363, %v1357
    %v1484 = vpack.c.b16 %v1364, %v1358
    %v1485 = vpack.c.b16 %v1371, %v1365
    %v1486 = vpack.c.b16 %v1372, %v1366
    %v1487 = vpack.c.b16 %v1373, %v1367
    %v1488 = vpack.c.b16 %v1374, %v1368
    %v1489 = vpack.c.b16 %v1375, %v1369
    %v1490 = vpack.c.b16 %v1376, %v1370
    %v1491 = vpack.c.b16 %v1383, %v1377
    %v1492 = vpack.c.b16 %v1384, %v1378
    %v1493 = vpack.c.b16 %v1385, %v1379
    %v1494 = vpack.c.b16 %v1386, %v1380
    %v1495 = vpack.c.b16 %v1387, %v1381
    %v1496 = vpack.c.b16 %v1388, %v1382
    %v1497 = vpack.c.b16 %v1395, %v1389
    %v1498 = vpack.c.b16 %v1396, %v1390
    %v1499 = vpack.c.b16 %v1397, %v1391
    %v1500 = vpack.c.b16 %v1398, %v1392
    %v1501 = vpack.c.b16 %v1399, %v1393
    %v1502 = vpack.c.b16 %v1400, %v1394
    %v1503 = vpack.c.b16 %v1407, %v1401
    %v1504 = vpack.c.b16 %v1408, %v1402
    %v1505 = vpack.c.b16 %v1409, %v1403
    %v1506 = vpack.c.b16 %v1410, %v1404
    %v1507 = vpack.c.b16 %v1411, %v1405
    %v1508 = vpack.c.b16 %v1412, %v1406
    %1605 = vmatprep.subr.bf16.mxu0 %v1456
    %1606 = vmatpush1.bf16.msra.mxu0 %v1455
    %1607 = vmatprep.subr.bf16.mxu0 %v1450
    %1608 = vmatpush1.bf16.msra.mxu0 %v1449
    %1609 = vmatprep.subr.bf16.mxu0 %v1444
    %1610 = vmatpush1.bf16.msra.mxu0 %v1443
    %1611 = vmatprep.subr.bf16.mxu0 %v1438
    %1612 = vmatpush1.bf16.msra.mxu0 %v1437
    %1613 = vmatprep.subr.bf16.mxu0 %v1432
    %1614 = vmatpush1.bf16.msra.mxu0 %v1431
    %1615 = vmatprep.subr.bf16.mxu0 %v1426
    %1616 = vmatpush1.bf16.msra.mxu0 %v1425
    %1617 = vmatprep.subr.bf16.mxu0 %v1420
    %1618 = vmatpush1.bf16.msra.mxu0 %v1419
    %1619 = vmatprep.subr.bf16.mxu0 %v1414
    %1620 = vmatpush1.bf16.msra.mxu0 %v1413
    %1621 = vmatprep.subr.bf16.mxu0 %v1504
    %1622 = vmatpush2.bf16.msra.mxu0 %v1503
    %1623 = vmatprep.subr.bf16.mxu0 %v1498
    %1624 = vmatpush2.bf16.msra.mxu0 %v1497
    %1625 = vmatprep.subr.bf16.mxu0 %v1492
    %1626 = vmatpush2.bf16.msra.mxu0 %v1491
    %1627 = vmatprep.subr.bf16.mxu0 %v1486
    %1628 = vmatpush2.bf16.msra.mxu0 %v1485
    %1629 = vmatprep.subr.bf16.mxu0 %v1480
    %1630 = vmatpush2.bf16.msra.mxu0 %v1479
    %1631 = vmatprep.subr.bf16.mxu0 %v1474
    %1632 = vmatpush2.bf16.msra.mxu0 %v1473
    %1633 = vmatprep.subr.bf16.mxu0 %v1468
    %1634 = vmatpush2.bf16.msra.mxu0 %v1467
    %1635 = vmatprep.subr.bf16.mxu0 %v1462
    %1636 = vmatpush2.bf16.msra.mxu0 %v1461
    %1637 = vmatprep.mubr.bf16.mxu0 %v1093
    %1638 = vmatmul.mubr.bf16.gmra.mxu0 %v1092
    %v1639 = vpop.f32.mrf.mxu0
    %v1640 = vadd.f32 %v1098, %v1639
    %v1641 = vpop.f32.mrf.mxu0
    %v1642 = vadd.f32 %v1102, %v1641
    %v1643 = vpop.f32.mrf.mxu0
    %v1644 = vpop.f32.mrf.mxu0
    %1645 = vdwg.mxu0
    %1646 = vmatprep.subr.bf16.mxu0 %v1458
    %1647 = vmatpush1.bf16.msra.mxu0 %v1457
    %1648 = vmatprep.subr.bf16.mxu0 %v1452
    %1649 = vmatpush1.bf16.msra.mxu0 %v1451
    %1650 = vmatprep.subr.bf16.mxu0 %v1446
    %1651 = vmatpush1.bf16.msra.mxu0 %v1445
    %1652 = vmatprep.subr.bf16.mxu0 %v1440
    %1653 = vmatpush1.bf16.msra.mxu0 %v1439
    %1654 = vmatprep.subr.bf16.mxu0 %v1434
    %1655 = vmatpush1.bf16.msra.mxu0 %v1433
    %1656 = vmatprep.subr.bf16.mxu0 %v1428
    %1657 = vmatpush1.bf16.msra.mxu0 %v1427
    %1658 = vmatprep.subr.bf16.mxu0 %v1422
    %1659 = vmatpush1.bf16.msra.mxu0 %v1421
    %1660 = vmatprep.subr.bf16.mxu0 %v1416
    %1661 = vmatpush1.bf16.msra.mxu0 %v1415
    %1662 = vmatprep.subr.bf16.mxu0 %v1506
    %1663 = vmatpush2.bf16.msra.mxu0 %v1505
    %1664 = vmatprep.subr.bf16.mxu0 %v1500
    %1665 = vmatpush2.bf16.msra.mxu0 %v1499
    %1666 = vmatprep.subr.bf16.mxu0 %v1494
    %1667 = vmatpush2.bf16.msra.mxu0 %v1493
    %1668 = vmatprep.subr.bf16.mxu0 %v1488
    %1669 = vmatpush2.bf16.msra.mxu0 %v1487
    %1670 = vmatprep.subr.bf16.mxu0 %v1482
    %1671 = vmatpush2.bf16.msra.mxu0 %v1481
    %1672 = vmatprep.subr.bf16.mxu0 %v1476
    %1673 = vmatpush2.bf16.msra.mxu0 %v1475
    %1674 = vmatprep.subr.bf16.mxu0 %v1470
    %1675 = vmatpush2.bf16.msra.mxu0 %v1469
    %1676 = vmatprep.subr.bf16.mxu0 %v1464
    %1677 = vmatpush2.bf16.msra.mxu0 %v1463
    %1678 = vmatprep.mubr.bf16.mxu0 %v1093
    %1679 = vmatmul.mubr.bf16.gmra.mxu0 %v1092
    %v1680 = vpop.f32.mrf.mxu0
    %v1681 = vadd.f32 %v1106, %v1680
    %v1682 = vpop.f32.mrf.mxu0
    %v1683 = vadd.f32 %v1110, %v1682
    %v1684 = vpop.f32.mrf.mxu0
    %v1685 = vpop.f32.mrf.mxu0
    %1686 = vdwg.mxu0
    %1687 = vmatprep.subr.bf16.mxu0 %v1460
    %1688 = vmatpush1.bf16.msra.mxu0 %v1459
    %1689 = vmatprep.subr.bf16.mxu0 %v1454
    %1690 = vmatpush1.bf16.msra.mxu0 %v1453
    %1691 = vmatprep.subr.bf16.mxu0 %v1448
    %1692 = vmatpush1.bf16.msra.mxu0 %v1447
    %1693 = vmatprep.subr.bf16.mxu0 %v1442
    %1694 = vmatpush1.bf16.msra.mxu0 %v1441
    %1695 = vmatprep.subr.bf16.mxu0 %v1436
    %1696 = vmatpush1.bf16.msra.mxu0 %v1435
    %1697 = vmatprep.subr.bf16.mxu0 %v1430
    %1698 = vmatpush1.bf16.msra.mxu0 %v1429
    %1699 = vmatprep.subr.bf16.mxu0 %v1424
    %1700 = vmatpush1.bf16.msra.mxu0 %v1423
    %1701 = vmatprep.subr.bf16.mxu0 %v1418
    %1702 = vmatpush1.bf16.msra.mxu0 %v1417
    %1703 = vmatprep.subr.bf16.mxu0 %v1508
    %1704 = vmatpush2.bf16.msra.mxu0 %v1507
    %1705 = vmatprep.subr.bf16.mxu0 %v1502
    %1706 = vmatpush2.bf16.msra.mxu0 %v1501
    %1707 = vmatprep.subr.bf16.mxu0 %v1496
    %1708 = vmatpush2.bf16.msra.mxu0 %v1495
    %1709 = vmatprep.subr.bf16.mxu0 %v1490
    %1710 = vmatpush2.bf16.msra.mxu0 %v1489
    %1711 = vmatprep.subr.bf16.mxu0 %v1484
    %1712 = vmatpush2.bf16.msra.mxu0 %v1483
    %1713 = vmatprep.subr.bf16.mxu0 %v1478
    %1714 = vmatpush2.bf16.msra.mxu0 %v1477
    %1715 = vmatprep.subr.bf16.mxu0 %v1472
    %1716 = vmatpush2.bf16.msra.mxu0 %v1471
    %1717 = vmatprep.subr.bf16.mxu0 %v1466
    %1718 = vmatpush2.bf16.msra.mxu0 %v1465
    %1719 = vmatprep.mubr.bf16.mxu0 %v1093
    %1720 = vmatmul.mubr.bf16.gmra.mxu0 %v1092
    %v1721 = vpop.f32.mrf.mxu0
    %v1722 = vadd.f32 %v1114, %v1721
    %v1723 = vpop.f32.mrf.mxu0
    %v1724 = vadd.f32 %v1118, %v1723
    %v1725 = vpop.f32.mrf.mxu0
    %v1726 = vpop.f32.mrf.mxu0
    %1727 = vdwg.mxu0
    %v1728 = vxor.u32 %v1640, 2147483648
    %v1729 = vxor.u32 %v1642, 2147483648
    %v1730 = vmul.f32 %v1728, 1.442695
    %v1731 = vpow.pop %v1730
    %v1732 = vmul.f32 %v1729, 1.442695
    %v1733 = vpow.pop %v1732
    %v1734 = vadd.f32 %v1731, 1.0
    %v1735 = vadd.f32 %v1733, 1.0
    %v1736 = vrcp.pop %v1734
    %v1737 = vmul.f32 1.0, %v1736
    %v1738 = vrcp.pop %v1735
    %v1739 = vmul.f32 1.0, %v1738
    %v1740 = vtanh.pop %v1681
    %v1741 = vtanh.pop %v1683
    %v1742 = vxor.u32 %v1722, 2147483648
    %v1743 = vxor.u32 %v1724, 2147483648
    %v1744 = vmul.f32 %v1742, 1.442695
    %v1745 = vpow.pop %v1744
    %v1746 = vmul.f32 %v1743, 1.442695
    %v1747 = vpow.pop %v1746
    %v1748 = vadd.f32 %v1745, 1.0
    %v1749 = vadd.f32 %v1747, 1.0
    %v1750 = vrcp.pop %v1748
    %v1751 = vmul.f32 1.0, %v1750
    %v1752 = vrcp.pop %v1749
    %v1753 = vmul.f32 1.0, %v1752
    %v1754 = vmul.f32 %v1737, %v1740
    %v1755 = vmul.f32 %v1739, %v1741
    %v1756 = vtanh.pop %v1754
    %v1757 = vtanh.pop %v1755
    %v1758 = vmul.f32 %v1751, %v1756
    %v1759 = vmul.f32 %v1753, %v1757
    %s1760 = sshll.u32 %s993, 4
    %1761 = dma.done %s83, %s1760
    %v1762 = vld [vmem:[%s82] sm:$0xff]
    %v1763 = vld [vmem:[%s82 + $0x8] sm:$0xff]
    %v1764 = vld [vmem:[%s82 + $0x10] sm:$0xff]
    %v1765 = vld [vmem:[%s82 + $0x18] sm:$0xff]
    %v1766 = vld [vmem:[%s82 + $0x20] sm:$0xff]
    %v1767 = vld [vmem:[%s82 + $0x28] sm:$0xff]
    %v1768 = vld [vmem:[%s82 + $0x30] sm:$0xff]
    %v1769 = vld [vmem:[%s82 + $0x38] sm:$0xff]
    %v1770 = vld [vmem:[%s82 + $0x40] sm:$0xff]
    %v1771 = vld [vmem:[%s82 + $0x48] sm:$0xff]
    %v1772 = vld [vmem:[%s82 + $0x50] sm:$0xff]
    %v1773 = vld [vmem:[%s82 + $0x58] sm:$0xff]
    %v1774 = vld [vmem:[%s82 + $0x60] sm:$0xff]
    %v1775 = vld [vmem:[%s82 + $0x68] sm:$0xff]
    %v1776 = vld [vmem:[%s82 + $0x70] sm:$0xff]
    %v1777 = vld [vmem:[%s82 + $0x78] sm:$0xff]
    %v1778 = vld [vmem:[%s82 + $0x80] sm:$0xff]
    %v1779 = vld [vmem:[%s82 + $0x88] sm:$0xff]
    %v1780 = vld [vmem:[%s82 + $0x90] sm:$0xff]
    %v1781 = vld [vmem:[%s82 + $0x98] sm:$0xff]
    %v1782 = vld [vmem:[%s82 + $0xa0] sm:$0xff]
    %v1783 = vld [vmem:[%s82 + $0xa8] sm:$0xff]
    %v1784 = vld [vmem:[%s82 + $0xb0] sm:$0xff]
    %v1785 = vld [vmem:[%s82 + $0xb8] sm:$0xff]
    %v1786 = vld [vmem:[%s82 + $0xc0] sm:$0xff]
    %v1787 = vld [vmem:[%s82 + $0xc8] sm:$0xff]
    %v1788 = vld [vmem:[%s82 + $0xd0] sm:$0xff]
    %v1789 = vld [vmem:[%s82 + $0xd8] sm:$0xff]
    %v1790 = vld [vmem:[%s82 + $0xe0] sm:$0xff]
    %v1791 = vld [vmem:[%s82 + $0xe8] sm:$0xff]
    %v1792 = vld [vmem:[%s82 + $0xf0] sm:$0xff]
    %v1793 = vld [vmem:[%s82 + $0xf8] sm:$0xff]
    %v1794 = vld [vmem:[%s82 + $0x100] sm:$0xff]
    %v1795 = vld [vmem:[%s82 + $0x108] sm:$0xff]
    %v1796 = vld [vmem:[%s82 + $0x110] sm:$0xff]
    %v1797 = vld [vmem:[%s82 + $0x118] sm:$0xff]
    %v1798 = vld [vmem:[%s82 + $0x120] sm:$0xff]
    %v1799 = vld [vmem:[%s82 + $0x128] sm:$0xff]
    %v1800 = vld [vmem:[%s82 + $0x130] sm:$0xff]
    %v1801 = vld [vmem:[%s82 + $0x138] sm:$0xff]
    %v1802 = vld [vmem:[%s82 + $0x140] sm:$0xff]
    %v1803 = vld [vmem:[%s82 + $0x148] sm:$0xff]
    %v1804 = vld [vmem:[%s82 + $0x150] sm:$0xff]
    %v1805 = vld [vmem:[%s82 + $0x158] sm:$0xff]
    %v1806 = vld [vmem:[%s82 + $0x160] sm:$0xff]
    %v1807 = vld [vmem:[%s82 + $0x168] sm:$0xff]
    %v1808 = vld [vmem:[%s82 + $0x170] sm:$0xff]
    %v1809 = vld [vmem:[%s82 + $0x178] sm:$0xff]
    %v1810 = vld [vmem:[%s82 + $0x180] sm:$0xff]
    %v1811 = vld [vmem:[%s82 + $0x188] sm:$0xff]
    %v1812 = vld [vmem:[%s82 + $0x190] sm:$0xff]
    %v1813 = vld [vmem:[%s82 + $0x198] sm:$0xff]
    %v1814 = vld [vmem:[%s82 + $0x1a0] sm:$0xff]
    %v1815 = vld [vmem:[%s82 + $0x1a8] sm:$0xff]
    %v1816 = vld [vmem:[%s82 + $0x1b0] sm:$0xff]
    %v1817 = vld [vmem:[%s82 + $0x1b8] sm:$0xff]
    %v1818 = vld [vmem:[%s82 + $0x1c0] sm:$0xff]
    %v1819 = vld [vmem:[%s82 + $0x1c8] sm:$0xff]
    %v1820 = vld [vmem:[%s82 + $0x1d0] sm:$0xff]
    %v1821 = vld [vmem:[%s82 + $0x1d8] sm:$0xff]
    %v1822 = vld [vmem:[%s82 + $0x1e0] sm:$0xff]
    %v1823 = vld [vmem:[%s82 + $0x1e8] sm:$0xff]
    %v1824 = vld [vmem:[%s82 + $0x1f0] sm:$0xff]
    %v1825 = vld [vmem:[%s82 + $0x1f8] sm:$0xff]
    %v1826 = vld [vmem:[%s82 + $0x200] sm:$0xff]
    %v1827 = vld [vmem:[%s82 + $0x208] sm:$0xff]
    %v1828 = vld [vmem:[%s82 + $0x210] sm:$0xff]
    %v1829 = vld [vmem:[%s82 + $0x218] sm:$0xff]
    %v1830 = vld [vmem:[%s82 + $0x220] sm:$0xff]
    %v1831 = vld [vmem:[%s82 + $0x228] sm:$0xff]
    %v1832 = vld [vmem:[%s82 + $0x230] sm:$0xff]
    %v1833 = vld [vmem:[%s82 + $0x238] sm:$0xff]
    %v1834 = vld [vmem:[%s82 + $0x240] sm:$0xff]
    %v1835 = vld [vmem:[%s82 + $0x248] sm:$0xff]
    %v1836 = vld [vmem:[%s82 + $0x250] sm:$0xff]
    %v1837 = vld [vmem:[%s82 + $0x258] sm:$0xff]
    %v1838 = vld [vmem:[%s82 + $0x260] sm:$0xff]
    %v1839 = vld [vmem:[%s82 + $0x268] sm:$0xff]
    %v1840 = vld [vmem:[%s82 + $0x270] sm:$0xff]
    %v1841 = vld [vmem:[%s82 + $0x278] sm:$0xff]
    %v1842 = vld [vmem:[%s82 + $0x280] sm:$0xff]
    %v1843 = vld [vmem:[%s82 + $0x288] sm:$0xff]
    %v1844 = vld [vmem:[%s82 + $0x290] sm:$0xff]
    %v1845 = vld [vmem:[%s82 + $0x298] sm:$0xff]
    %v1846 = vld [vmem:[%s82 + $0x2a0] sm:$0xff]
    %v1847 = vld [vmem:[%s82 + $0x2a8] sm:$0xff]
    %v1848 = vld [vmem:[%s82 + $0x2b0] sm:$0xff]
    %v1849 = vld [vmem:[%s82 + $0x2b8] sm:$0xff]
    %v1850 = vld [vmem:[%s82 + $0x2c0] sm:$0xff]
    %v1851 = vld [vmem:[%s82 + $0x2c8] sm:$0xff]
    %v1852 = vld [vmem:[%s82 + $0x2d0] sm:$0xff]
    %v1853 = vld [vmem:[%s82 + $0x2d8] sm:$0xff]
    %v1854 = vld [vmem:[%s82 + $0x2e0] sm:$0xff]
    %v1855 = vld [vmem:[%s82 + $0x2e8] sm:$0xff]
    %v1856 = vld [vmem:[%s82 + $0x2f0] sm:$0xff]
    %v1857 = vld [vmem:[%s82 + $0x2f8] sm:$0xff]
    %v1858 = vpack.c.bf16 %v1758, %v1758
    %v1859 = vpack.c.bf16 %v1759, %v1759
    %v1861 = vlaneseq
    %v1862 = vshrl.u32 %v1861, 7
    %v1863 = vsub.s32 0, %v1862
    %v1864 = vrot.slane %v119, %v1863
    %v1865 = vlaneseq
    %v1866 = vshrl.u32 %v1865, 7
    %v1867 = vsub.s32 1, %v1866
    %v1868 = vrot.slane %v119, %v1867
    %v1869 = vlaneseq
    %v1870 = vshrl.u32 %v1869, 7
    %v1871 = vsub.s32 2, %v1870
    %v1872 = vrot.slane %v119, %v1871
    %v1873 = vlaneseq
    %v1874 = vshrl.u32 %v1873, 7
    %v1875 = vsub.s32 3, %v1874
    %v1876 = vrot.slane %v119, %v1875
    %v1877 = vlaneseq
    %v1878 = vshrl.u32 %v1877, 7
    %v1879 = vsub.s32 4, %v1878
    %v1880 = vrot.slane %v119, %v1879
    %v1881 = vlaneseq
    %v1882 = vshrl.u32 %v1881, 7
    %v1883 = vsub.s32 5, %v1882
    %v1884 = vrot.slane %v119, %v1883
    %v1987 = vunpack.c.l.b16 %v1762
    %v1988 = vunpack.c.h.b16 %v1762
    %v1989 = vunpack.c.l.b16 %v1763
    %v1990 = vunpack.c.h.b16 %v1763
    %v1991 = vunpack.c.l.b16 %v1764
    %v1992 = vunpack.c.h.b16 %v1764
    %v1993 = vunpack.c.l.b16 %v1765
    %v1994 = vunpack.c.h.b16 %v1765
    %v1995 = vunpack.c.l.b16 %v1766
    %v1996 = vunpack.c.h.b16 %v1766
    %v1997 = vunpack.c.l.b16 %v1767
    %v1998 = vunpack.c.h.b16 %v1767
    %v1999 = vunpack.c.l.b16 %v1768
    %v2000 = vunpack.c.h.b16 %v1768
    %v2001 = vunpack.c.l.b16 %v1769
    %v2002 = vunpack.c.h.b16 %v1769
    %v2003 = vunpack.c.l.b16 %v1770
    %v2004 = vunpack.c.h.b16 %v1770
    %v2005 = vunpack.c.l.b16 %v1771
    %v2006 = vunpack.c.h.b16 %v1771
    %v2007 = vunpack.c.l.b16 %v1772
    %v2008 = vunpack.c.h.b16 %v1772
    %v2009 = vunpack.c.l.b16 %v1773
    %v2010 = vunpack.c.h.b16 %v1773
    %v2011 = vunpack.c.l.b16 %v1774
    %v2012 = vunpack.c.h.b16 %v1774
    %v2013 = vunpack.c.l.b16 %v1775
    %v2014 = vunpack.c.h.b16 %v1775
    %v2015 = vunpack.c.l.b16 %v1776
    %v2016 = vunpack.c.h.b16 %v1776
    %v2017 = vunpack.c.l.b16 %v1777
    %v2018 = vunpack.c.h.b16 %v1777
    %v2019 = vunpack.c.l.b16 %v1778
    %v2020 = vunpack.c.h.b16 %v1778
    %v2021 = vunpack.c.l.b16 %v1779
    %v2022 = vunpack.c.h.b16 %v1779
    %v2023 = vunpack.c.l.b16 %v1780
    %v2024 = vunpack.c.h.b16 %v1780
    %v2025 = vunpack.c.l.b16 %v1781
    %v2026 = vunpack.c.h.b16 %v1781
    %v2027 = vunpack.c.l.b16 %v1782
    %v2028 = vunpack.c.h.b16 %v1782
    %v2029 = vunpack.c.l.b16 %v1783
    %v2030 = vunpack.c.h.b16 %v1783
    %v2031 = vunpack.c.l.b16 %v1784
    %v2032 = vunpack.c.h.b16 %v1784
    %v2033 = vunpack.c.l.b16 %v1785
    %v2034 = vunpack.c.h.b16 %v1785
    %v2035 = vunpack.c.l.b16 %v1786
    %v2036 = vunpack.c.h.b16 %v1786
    %v2037 = vunpack.c.l.b16 %v1787
    %v2038 = vunpack.c.h.b16 %v1787
    %v2039 = vunpack.c.l.b16 %v1788
    %v2040 = vunpack.c.h.b16 %v1788
    %v2041 = vunpack.c.l.b16 %v1789
    %v2042 = vunpack.c.h.b16 %v1789
    %v2043 = vunpack.c.l.b16 %v1790
    %v2044 = vunpack.c.h.b16 %v1790
    %v2045 = vunpack.c.l.b16 %v1791
    %v2046 = vunpack.c.h.b16 %v1791
    %v2047 = vunpack.c.l.b16 %v1792
    %v2048 = vunpack.c.h.b16 %v1792
    %v2049 = vunpack.c.l.b16 %v1793
    %v2050 = vunpack.c.h.b16 %v1793
    %v2051 = vunpack.c.l.b16 %v1794
    %v2052 = vunpack.c.h.b16 %v1794
    %v2053 = vunpack.c.l.b16 %v1795
    %v2054 = vunpack.c.h.b16 %v1795
    %v2055 = vunpack.c.l.b16 %v1796
    %v2056 = vunpack.c.h.b16 %v1796
    %v2057 = vunpack.c.l.b16 %v1797
    %v2058 = vunpack.c.h.b16 %v1797
    %v2059 = vunpack.c.l.b16 %v1798
    %v2060 = vunpack.c.h.b16 %v1798
    %v2061 = vunpack.c.l.b16 %v1799
    %v2062 = vunpack.c.h.b16 %v1799
    %v2063 = vunpack.c.l.b16 %v1800
    %v2064 = vunpack.c.h.b16 %v1800
    %v2065 = vunpack.c.l.b16 %v1801
    %v2066 = vunpack.c.h.b16 %v1801
    %v2067 = vunpack.c.l.b16 %v1802
    %v2068 = vunpack.c.h.b16 %v1802
    %v2069 = vunpack.c.l.b16 %v1803
    %v2070 = vunpack.c.h.b16 %v1803
    %v2071 = vunpack.c.l.b16 %v1804
    %v2072 = vunpack.c.h.b16 %v1804
    %v2073 = vunpack.c.l.b16 %v1805
    %v2074 = vunpack.c.h.b16 %v1805
    %v2075 = vunpack.c.l.b16 %v1806
    %v2076 = vunpack.c.h.b16 %v1806
    %v2077 = vunpack.c.l.b16 %v1807
    %v2078 = vunpack.c.h.b16 %v1807
    %v2079 = vunpack.c.l.b16 %v1808
    %v2080 = vunpack.c.h.b16 %v1808
    %v2081 = vunpack.c.l.b16 %v1809
    %v2082 = vunpack.c.h.b16 %v1809
    %v2083 = vunpack.c.l.b16 %v1810
    %v2084 = vunpack.c.h.b16 %v1810
    %v2085 = vunpack.c.l.b16 %v1811
    %v2086 = vunpack.c.h.b16 %v1811
    %v2087 = vunpack.c.l.b16 %v1812
    %v2088 = vunpack.c.h.b16 %v1812
    %v2089 = vunpack.c.l.b16 %v1813
    %v2090 = vunpack.c.h.b16 %v1813
    %v2091 = vunpack.c.l.b16 %v1814
    %v2092 = vunpack.c.h.b16 %v1814
    %v2093 = vunpack.c.l.b16 %v1815
    %v2094 = vunpack.c.h.b16 %v1815
    %v2095 = vunpack.c.l.b16 %v1816
    %v2096 = vunpack.c.h.b16 %v1816
    %v2097 = vunpack.c.l.b16 %v1817
    %v2098 = vunpack.c.h.b16 %v1817
    %v2099 = vunpack.c.l.b16 %v1818
    %v2100 = vunpack.c.h.b16 %v1818
    %v2101 = vunpack.c.l.b16 %v1819
    %v2102 = vunpack.c.h.b16 %v1819
    %v2103 = vunpack.c.l.b16 %v1820
    %v2104 = vunpack.c.h.b16 %v1820
    %v2105 = vunpack.c.l.b16 %v1821
    %v2106 = vunpack.c.h.b16 %v1821
    %v2107 = vunpack.c.l.b16 %v1822
    %v2108 = vunpack.c.h.b16 %v1822
    %v2109 = vunpack.c.l.b16 %v1823
    %v2110 = vunpack.c.h.b16 %v1823
    %v2111 = vunpack.c.l.b16 %v1824
    %v2112 = vunpack.c.h.b16 %v1824
    %v2113 = vunpack.c.l.b16 %v1825
    %v2114 = vunpack.c.h.b16 %v1825
    %v2115 = vunpack.c.l.b16 %v1826
    %v2116 = vunpack.c.h.b16 %v1826
    %v2117 = vunpack.c.l.b16 %v1827
    %v2118 = vunpack.c.h.b16 %v1827
    %v2119 = vunpack.c.l.b16 %v1828
    %v2120 = vunpack.c.h.b16 %v1828
    %v2121 = vunpack.c.l.b16 %v1829
    %v2122 = vunpack.c.h.b16 %v1829
    %v2123 = vunpack.c.l.b16 %v1830
    %v2124 = vunpack.c.h.b16 %v1830
    %v2125 = vunpack.c.l.b16 %v1831
    %v2126 = vunpack.c.h.b16 %v1831
    %v2127 = vunpack.c.l.b16 %v1832
    %v2128 = vunpack.c.h.b16 %v1832
    %v2129 = vunpack.c.l.b16 %v1833
    %v2130 = vunpack.c.h.b16 %v1833
    %v2131 = vunpack.c.l.b16 %v1834
    %v2132 = vunpack.c.h.b16 %v1834
    %v2133 = vunpack.c.l.b16 %v1835
    %v2134 = vunpack.c.h.b16 %v1835
    %v2135 = vunpack.c.l.b16 %v1836
    %v2136 = vunpack.c.h.b16 %v1836
    %v2137 = vunpack.c.l.b16 %v1837
    %v2138 = vunpack.c.h.b16 %v1837
    %v2139 = vunpack.c.l.b16 %v1838
    %v2140 = vunpack.c.h.b16 %v1838
    %v2141 = vunpack.c.l.b16 %v1839
    %v2142 = vunpack.c.h.b16 %v1839
    %v2143 = vunpack.c.l.b16 %v1840
    %v2144 = vunpack.c.h.b16 %v1840
    %v2145 = vunpack.c.l.b16 %v1841
    %v2146 = vunpack.c.h.b16 %v1841
    %v2147 = vunpack.c.l.b16 %v1842
    %v2148 = vunpack.c.h.b16 %v1842
    %v2149 = vunpack.c.l.b16 %v1843
    %v2150 = vunpack.c.h.b16 %v1843
    %v2151 = vunpack.c.l.b16 %v1844
    %v2152 = vunpack.c.h.b16 %v1844
    %v2153 = vunpack.c.l.b16 %v1845
    %v2154 = vunpack.c.h.b16 %v1845
    %v2155 = vunpack.c.l.b16 %v1846
    %v2156 = vunpack.c.h.b16 %v1846
    %v2157 = vunpack.c.l.b16 %v1847
    %v2158 = vunpack.c.h.b16 %v1847
    %v2159 = vunpack.c.l.b16 %v1848
    %v2160 = vunpack.c.h.b16 %v1848
    %v2161 = vunpack.c.l.b16 %v1849
    %v2162 = vunpack.c.h.b16 %v1849
    %v2163 = vunpack.c.l.b16 %v1850
    %v2164 = vunpack.c.h.b16 %v1850
    %v2165 = vunpack.c.l.b16 %v1851
    %v2166 = vunpack.c.h.b16 %v1851
    %v2167 = vunpack.c.l.b16 %v1852
    %v2168 = vunpack.c.h.b16 %v1852
    %v2169 = vunpack.c.l.b16 %v1853
    %v2170 = vunpack.c.h.b16 %v1853
    %v2171 = vunpack.c.l.b16 %v1854
    %v2172 = vunpack.c.h.b16 %v1854
    %v2173 = vunpack.c.l.b16 %v1855
    %v2174 = vunpack.c.h.b16 %v1855
    %v2175 = vunpack.c.l.b16 %v1856
    %v2176 = vunpack.c.h.b16 %v1856
    %v2177 = vunpack.c.l.b16 %v1857
    %v2178 = vunpack.c.h.b16 %v1857
    %v2179 = vpack.c.b16 %v1993, %v1987
    %v2180 = vpack.c.b16 %v1994, %v1988
    %v2181 = vpack.c.b16 %v1995, %v1989
    %v2182 = vpack.c.b16 %v1996, %v1990
    %v2183 = vpack.c.b16 %v1997, %v1991
    %v2184 = vpack.c.b16 %v1998, %v1992
    %v2185 = vpack.c.b16 %v2005, %v1999
    %v2186 = vpack.c.b16 %v2006, %v2000
    %v2187 = vpack.c.b16 %v2007, %v2001
    %v2188 = vpack.c.b16 %v2008, %v2002
    %v2189 = vpack.c.b16 %v2009, %v2003
    %v2190 = vpack.c.b16 %v2010, %v2004
    %v2191 = vpack.c.b16 %v2017, %v2011
    %v2192 = vpack.c.b16 %v2018, %v2012
    %v2193 = vpack.c.b16 %v2019, %v2013
    %v2194 = vpack.c.b16 %v2020, %v2014
    %v2195 = vpack.c.b16 %v2021, %v2015
    %v2196 = vpack.c.b16 %v2022, %v2016
    %v2197 = vpack.c.b16 %v2029, %v2023
    %v2198 = vpack.c.b16 %v2030, %v2024
    %v2199 = vpack.c.b16 %v2031, %v2025
    %v2200 = vpack.c.b16 %v2032, %v2026
    %v2201 = vpack.c.b16 %v2033, %v2027
    %v2202 = vpack.c.b16 %v2034, %v2028
    %v2203 = vpack.c.b16 %v2041, %v2035
    %v2204 = vpack.c.b16 %v2042, %v2036
    %v2205 = vpack.c.b16 %v2043, %v2037
    %v2206 = vpack.c.b16 %v2044, %v2038
    %v2207 = vpack.c.b16 %v2045, %v2039
    %v2208 = vpack.c.b16 %v2046, %v2040
    %v2209 = vpack.c.b16 %v2053, %v2047
    %v2210 = vpack.c.b16 %v2054, %v2048
    %v2211 = vpack.c.b16 %v2055, %v2049
    %v2212 = vpack.c.b16 %v2056, %v2050
    %v2213 = vpack.c.b16 %v2057, %v2051
    %v2214 = vpack.c.b16 %v2058, %v2052
    %v2215 = vpack.c.b16 %v2065, %v2059
    %v2216 = vpack.c.b16 %v2066, %v2060
    %v2217 = vpack.c.b16 %v2067, %v2061
    %v2218 = vpack.c.b16 %v2068, %v2062
    %v2219 = vpack.c.b16 %v2069, %v2063
    %v2220 = vpack.c.b16 %v2070, %v2064
    %v2221 = vpack.c.b16 %v2077, %v2071
    %v2222 = vpack.c.b16 %v2078, %v2072
    %v2223 = vpack.c.b16 %v2079, %v2073
    %v2224 = vpack.c.b16 %v2080, %v2074
    %v2225 = vpack.c.b16 %v2081, %v2075
    %v2226 = vpack.c.b16 %v2082, %v2076
    %v2227 = vpack.c.b16 %v2089, %v2083
    %v2228 = vpack.c.b16 %v2090, %v2084
    %v2229 = vpack.c.b16 %v2091, %v2085
    %v2230 = vpack.c.b16 %v2092, %v2086
    %v2231 = vpack.c.b16 %v2093, %v2087
    %v2232 = vpack.c.b16 %v2094, %v2088
    %v2233 = vpack.c.b16 %v2101, %v2095
    %v2234 = vpack.c.b16 %v2102, %v2096
    %v2235 = vpack.c.b16 %v2103, %v2097
    %v2236 = vpack.c.b16 %v2104, %v2098
    %v2237 = vpack.c.b16 %v2105, %v2099
    %v2238 = vpack.c.b16 %v2106, %v2100
    %v2239 = vpack.c.b16 %v2113, %v2107
    %v2240 = vpack.c.b16 %v2114, %v2108
    %v2241 = vpack.c.b16 %v2115, %v2109
    %v2242 = vpack.c.b16 %v2116, %v2110
    %v2243 = vpack.c.b16 %v2117, %v2111
    %v2244 = vpack.c.b16 %v2118, %v2112
    %v2245 = vpack.c.b16 %v2125, %v2119
    %v2246 = vpack.c.b16 %v2126, %v2120
    %v2247 = vpack.c.b16 %v2127, %v2121
    %v2248 = vpack.c.b16 %v2128, %v2122
    %v2249 = vpack.c.b16 %v2129, %v2123
    %v2250 = vpack.c.b16 %v2130, %v2124
    %v2251 = vpack.c.b16 %v2137, %v2131
    %v2252 = vpack.c.b16 %v2138, %v2132
    %v2253 = vpack.c.b16 %v2139, %v2133
    %v2254 = vpack.c.b16 %v2140, %v2134
    %v2255 = vpack.c.b16 %v2141, %v2135
    %v2256 = vpack.c.b16 %v2142, %v2136
    %v2257 = vpack.c.b16 %v2149, %v2143
    %v2258 = vpack.c.b16 %v2150, %v2144
    %v2259 = vpack.c.b16 %v2151, %v2145
    %v2260 = vpack.c.b16 %v2152, %v2146
    %v2261 = vpack.c.b16 %v2153, %v2147
    %v2262 = vpack.c.b16 %v2154, %v2148
    %v2263 = vpack.c.b16 %v2161, %v2155
    %v2264 = vpack.c.b16 %v2162, %v2156
    %v2265 = vpack.c.b16 %v2163, %v2157
    %v2266 = vpack.c.b16 %v2164, %v2158
    %v2267 = vpack.c.b16 %v2165, %v2159
    %v2268 = vpack.c.b16 %v2166, %v2160
    %v2269 = vpack.c.b16 %v2173, %v2167
    %v2270 = vpack.c.b16 %v2174, %v2168
    %v2271 = vpack.c.b16 %v2175, %v2169
    %v2272 = vpack.c.b16 %v2176, %v2170
    %v2273 = vpack.c.b16 %v2177, %v2171
    %v2274 = vpack.c.b16 %v2178, %v2172
    %2371 = vmatprep.subr.bf16.mxu0 %v2222
    %2372 = vmatpush1.bf16.msra.mxu0 %v2221
    %2373 = vmatprep.subr.bf16.mxu0 %v2216
    %2374 = vmatpush1.bf16.msra.mxu0 %v2215
    %2375 = vmatprep.subr.bf16.mxu0 %v2210
    %2376 = vmatpush1.bf16.msra.mxu0 %v2209
    %2377 = vmatprep.subr.bf16.mxu0 %v2204
    %2378 = vmatpush1.bf16.msra.mxu0 %v2203
    %2379 = vmatprep.subr.bf16.mxu0 %v2198
    %2380 = vmatpush1.bf16.msra.mxu0 %v2197
    %2381 = vmatprep.subr.bf16.mxu0 %v2192
    %2382 = vmatpush1.bf16.msra.mxu0 %v2191
    %2383 = vmatprep.subr.bf16.mxu0 %v2186
    %2384 = vmatpush1.bf16.msra.mxu0 %v2185
    %2385 = vmatprep.subr.bf16.mxu0 %v2180
    %2386 = vmatpush1.bf16.msra.mxu0 %v2179
    %2387 = vmatprep.subr.bf16.mxu0 %v2270
    %2388 = vmatpush2.bf16.msra.mxu0 %v2269
    %2389 = vmatprep.subr.bf16.mxu0 %v2264
    %2390 = vmatpush2.bf16.msra.mxu0 %v2263
    %2391 = vmatprep.subr.bf16.mxu0 %v2258
    %2392 = vmatpush2.bf16.msra.mxu0 %v2257
    %2393 = vmatprep.subr.bf16.mxu0 %v2252
    %2394 = vmatpush2.bf16.msra.mxu0 %v2251
    %2395 = vmatprep.subr.bf16.mxu0 %v2246
    %2396 = vmatpush2.bf16.msra.mxu0 %v2245
    %2397 = vmatprep.subr.bf16.mxu0 %v2240
    %2398 = vmatpush2.bf16.msra.mxu0 %v2239
    %2399 = vmatprep.subr.bf16.mxu0 %v2234
    %2400 = vmatpush2.bf16.msra.mxu0 %v2233
    %2401 = vmatprep.subr.bf16.mxu0 %v2228
    %2402 = vmatpush2.bf16.msra.mxu0 %v2227
    %2403 = vmatprep.mubr.bf16.mxu0 %v1859
    %2404 = vmatmul.mubr.bf16.gmra.mxu0 %v1858
    %v2405 = vpop.f32.mrf.mxu0
    %v2406 = vadd.f32 %v1864, %v2405
    %v2407 = vpop.f32.mrf.mxu0
    %v2408 = vadd.f32 %v1868, %v2407
    %v2409 = vpop.f32.mrf.mxu0
    %v2410 = vpop.f32.mrf.mxu0
    %2411 = vdwg.mxu0
    %2412 = vmatprep.subr.bf16.mxu0 %v2224
    %2413 = vmatpush1.bf16.msra.mxu0 %v2223
    %2414 = vmatprep.subr.bf16.mxu0 %v2218
    %2415 = vmatpush1.bf16.msra.mxu0 %v2217
    %2416 = vmatprep.subr.bf16.mxu0 %v2212
    %2417 = vmatpush1.bf16.msra.mxu0 %v2211
    %2418 = vmatprep.subr.bf16.mxu0 %v2206
    %2419 = vmatpush1.bf16.msra.mxu0 %v2205
    %2420 = vmatprep.subr.bf16.mxu0 %v2200
    %2421 = vmatpush1.bf16.msra.mxu0 %v2199
    %2422 = vmatprep.subr.bf16.mxu0 %v2194
    %2423 = vmatpush1.bf16.msra.mxu0 %v2193
    %2424 = vmatprep.subr.bf16.mxu0 %v2188
    %2425 = vmatpush1.bf16.msra.mxu0 %v2187
    %2426 = vmatprep.subr.bf16.mxu0 %v2182
    %2427 = vmatpush1.bf16.msra.mxu0 %v2181
    %2428 = vmatprep.subr.bf16.mxu0 %v2272
    %2429 = vmatpush2.bf16.msra.mxu0 %v2271
    %2430 = vmatprep.subr.bf16.mxu0 %v2266
    %2431 = vmatpush2.bf16.msra.mxu0 %v2265
    %2432 = vmatprep.subr.bf16.mxu0 %v2260
    %2433 = vmatpush2.bf16.msra.mxu0 %v2259
    %2434 = vmatprep.subr.bf16.mxu0 %v2254
    %2435 = vmatpush2.bf16.msra.mxu0 %v2253
    %2436 = vmatprep.subr.bf16.mxu0 %v2248
    %2437 = vmatpush2.bf16.msra.mxu0 %v2247
    %2438 = vmatprep.subr.bf16.mxu0 %v2242
    %2439 = vmatpush2.bf16.msra.mxu0 %v2241
    %2440 = vmatprep.subr.bf16.mxu0 %v2236
    %2441 = vmatpush2.bf16.msra.mxu0 %v2235
    %2442 = vmatprep.subr.bf16.mxu0 %v2230
    %2443 = vmatpush2.bf16.msra.mxu0 %v2229
    %2444 = vmatprep.mubr.bf16.mxu0 %v1859
    %2445 = vmatmul.mubr.bf16.gmra.mxu0 %v1858
    %v2446 = vpop.f32.mrf.mxu0
    %v2447 = vadd.f32 %v1872, %v2446
    %v2448 = vpop.f32.mrf.mxu0
    %v2449 = vadd.f32 %v1876, %v2448
    %v2450 = vpop.f32.mrf.mxu0
    %v2451 = vpop.f32.mrf.mxu0
    %2452 = vdwg.mxu0
    %2453 = vmatprep.subr.bf16.mxu0 %v2226
    %2454 = vmatpush1.bf16.msra.mxu0 %v2225
    %2455 = vmatprep.subr.bf16.mxu0 %v2220
    %2456 = vmatpush1.bf16.msra.mxu0 %v2219
    %2457 = vmatprep.subr.bf16.mxu0 %v2214
    %2458 = vmatpush1.bf16.msra.mxu0 %v2213
    %2459 = vmatprep.subr.bf16.mxu0 %v2208
    %2460 = vmatpush1.bf16.msra.mxu0 %v2207
    %2461 = vmatprep.subr.bf16.mxu0 %v2202
    %2462 = vmatpush1.bf16.msra.mxu0 %v2201
    %2463 = vmatprep.subr.bf16.mxu0 %v2196
    %2464 = vmatpush1.bf16.msra.mxu0 %v2195
    %2465 = vmatprep.subr.bf16.mxu0 %v2190
    %2466 = vmatpush1.bf16.msra.mxu0 %v2189
    %2467 = vmatprep.subr.bf16.mxu0 %v2184
    %2468 = vmatpush1.bf16.msra.mxu0 %v2183
    %2469 = vmatprep.subr.bf16.mxu0 %v2274
    %2470 = vmatpush2.bf16.msra.mxu0 %v2273
    %2471 = vmatprep.subr.bf16.mxu0 %v2268
    %2472 = vmatpush2.bf16.msra.mxu0 %v2267
    %2473 = vmatprep.subr.bf16.mxu0 %v2262
    %2474 = vmatpush2.bf16.msra.mxu0 %v2261
    %2475 = vmatprep.subr.bf16.mxu0 %v2256
    %2476 = vmatpush2.bf16.msra.mxu0 %v2255
    %2477 = vmatprep.subr.bf16.mxu0 %v2250
    %2478 = vmatpush2.bf16.msra.mxu0 %v2249
    %2479 = vmatprep.subr.bf16.mxu0 %v2244
    %2480 = vmatpush2.bf16.msra.mxu0 %v2243
    %2481 = vmatprep.subr.bf16.mxu0 %v2238
    %2482 = vmatpush2.bf16.msra.mxu0 %v2237
    %2483 = vmatprep.subr.bf16.mxu0 %v2232
    %2484 = vmatpush2.bf16.msra.mxu0 %v2231
    %2485 = vmatprep.mubr.bf16.mxu0 %v1859
    %2486 = vmatmul.mubr.bf16.gmra.mxu0 %v1858
    %v2487 = vpop.f32.mrf.mxu0
    %v2488 = vadd.f32 %v1880, %v2487
    %v2489 = vpop.f32.mrf.mxu0
    %v2490 = vadd.f32 %v1884, %v2489
    %v2491 = vpop.f32.mrf.mxu0
    %v2492 = vpop.f32.mrf.mxu0
    %2493 = vdwg.mxu0
    %v2494 = vxor.u32 %v2406, 2147483648
    %v2495 = vxor.u32 %v2408, 2147483648
    %v2496 = vmul.f32 %v2494, 1.442695
    %v2497 = vpow.pop %v2496
    %v2498 = vmul.f32 %v2495, 1.442695
    %v2499 = vpow.pop %v2498
    %v2500 = vadd.f32 %v2497, 1.0
    %v2501 = vadd.f32 %v2499, 1.0
    %v2502 = vrcp.pop %v2500
    %v2503 = vmul.f32 1.0, %v2502
    %v2504 = vrcp.pop %v2501
    %v2505 = vmul.f32 1.0, %v2504
    %v2506 = vtanh.pop %v2447
    %v2507 = vtanh.pop %v2449
    %v2508 = vxor.u32 %v2488, 2147483648
    %v2509 = vxor.u32 %v2490, 2147483648
    %v2510 = vmul.f32 %v2508, 1.442695
    %v2511 = vpow.pop %v2510
    %v2512 = vmul.f32 %v2509, 1.442695
    %v2513 = vpow.pop %v2512
    %v2514 = vadd.f32 %v2511, 1.0
    %v2515 = vadd.f32 %v2513, 1.0
    %v2516 = vrcp.pop %v2514
    %v2517 = vmul.f32 1.0, %v2516
    %v2518 = vrcp.pop %v2515
    %v2519 = vmul.f32 1.0, %v2518
    %v2520 = vmul.f32 %v2503, %v2506
    %v2521 = vmul.f32 %v2505, %v2507
    %v2522 = vtanh.pop %v2520
    %v2523 = vtanh.pop %v2521
    %v2524 = vmul.f32 %v2517, %v2522
    %v2525 = vmul.f32 %v2519, %v2523
    %s2526 = sshll.u32 %s993, 4
    %2527 = dma.done %s97, %s2526
    %v2528 = vld [vmem:[%s96] sm:$0xff]
    %v2529 = vld [vmem:[%s96 + $0x8] sm:$0xff]
    %v2530 = vld [vmem:[%s96 + $0x10] sm:$0xff]
    %v2531 = vld [vmem:[%s96 + $0x18] sm:$0xff]
    %v2532 = vld [vmem:[%s96 + $0x20] sm:$0xff]
    %v2533 = vld [vmem:[%s96 + $0x28] sm:$0xff]
    %v2534 = vld [vmem:[%s96 + $0x30] sm:$0xff]
    %v2535 = vld [vmem:[%s96 + $0x38] sm:$0xff]
    %v2536 = vld [vmem:[%s96 + $0x40] sm:$0xff]
    %v2537 = vld [vmem:[%s96 + $0x48] sm:$0xff]
    %v2538 = vld [vmem:[%s96 + $0x50] sm:$0xff]
    %v2539 = vld [vmem:[%s96 + $0x58] sm:$0xff]
    %v2540 = vld [vmem:[%s96 + $0x60] sm:$0xff]
    %v2541 = vld [vmem:[%s96 + $0x68] sm:$0xff]
    %v2542 = vld [vmem:[%s96 + $0x70] sm:$0xff]
    %v2543 = vld [vmem:[%s96 + $0x78] sm:$0xff]
    %v2544 = vld [vmem:[%s96 + $0x80] sm:$0xff]
    %v2545 = vld [vmem:[%s96 + $0x88] sm:$0xff]
    %v2546 = vld [vmem:[%s96 + $0x90] sm:$0xff]
    %v2547 = vld [vmem:[%s96 + $0x98] sm:$0xff]
    %v2548 = vld [vmem:[%s96 + $0xa0] sm:$0xff]
    %v2549 = vld [vmem:[%s96 + $0xa8] sm:$0xff]
    %v2550 = vld [vmem:[%s96 + $0xb0] sm:$0xff]
    %v2551 = vld [vmem:[%s96 + $0xb8] sm:$0xff]
    %v2552 = vld [vmem:[%s96 + $0xc0] sm:$0xff]
    %v2553 = vld [vmem:[%s96 + $0xc8] sm:$0xff]
    %v2554 = vld [vmem:[%s96 + $0xd0] sm:$0xff]
    %v2555 = vld [vmem:[%s96 + $0xd8] sm:$0xff]
    %v2556 = vld [vmem:[%s96 + $0xe0] sm:$0xff]
    %v2557 = vld [vmem:[%s96 + $0xe8] sm:$0xff]
    %v2558 = vld [vmem:[%s96 + $0xf0] sm:$0xff]
    %v2559 = vld [vmem:[%s96 + $0xf8] sm:$0xff]
    %v2560 = vld [vmem:[%s96 + $0x100] sm:$0xff]
    %v2561 = vld [vmem:[%s96 + $0x108] sm:$0xff]
    %v2562 = vld [vmem:[%s96 + $0x110] sm:$0xff]
    %v2563 = vld [vmem:[%s96 + $0x118] sm:$0xff]
    %v2564 = vld [vmem:[%s96 + $0x120] sm:$0xff]
    %v2565 = vld [vmem:[%s96 + $0x128] sm:$0xff]
    %v2566 = vld [vmem:[%s96 + $0x130] sm:$0xff]
    %v2567 = vld [vmem:[%s96 + $0x138] sm:$0xff]
    %v2568 = vld [vmem:[%s96 + $0x140] sm:$0xff]
    %v2569 = vld [vmem:[%s96 + $0x148] sm:$0xff]
    %v2570 = vld [vmem:[%s96 + $0x150] sm:$0xff]
    %v2571 = vld [vmem:[%s96 + $0x158] sm:$0xff]
    %v2572 = vld [vmem:[%s96 + $0x160] sm:$0xff]
    %v2573 = vld [vmem:[%s96 + $0x168] sm:$0xff]
    %v2574 = vld [vmem:[%s96 + $0x170] sm:$0xff]
    %v2575 = vld [vmem:[%s96 + $0x178] sm:$0xff]
    %v2576 = vld [vmem:[%s96 + $0x180] sm:$0xff]
    %v2577 = vld [vmem:[%s96 + $0x188] sm:$0xff]
    %v2578 = vld [vmem:[%s96 + $0x190] sm:$0xff]
    %v2579 = vld [vmem:[%s96 + $0x198] sm:$0xff]
    %v2580 = vld [vmem:[%s96 + $0x1a0] sm:$0xff]
    %v2581 = vld [vmem:[%s96 + $0x1a8] sm:$0xff]
    %v2582 = vld [vmem:[%s96 + $0x1b0] sm:$0xff]
    %v2583 = vld [vmem:[%s96 + $0x1b8] sm:$0xff]
    %v2584 = vld [vmem:[%s96 + $0x1c0] sm:$0xff]
    %v2585 = vld [vmem:[%s96 + $0x1c8] sm:$0xff]
    %v2586 = vld [vmem:[%s96 + $0x1d0] sm:$0xff]
    %v2587 = vld [vmem:[%s96 + $0x1d8] sm:$0xff]
    %v2588 = vld [vmem:[%s96 + $0x1e0] sm:$0xff]
    %v2589 = vld [vmem:[%s96 + $0x1e8] sm:$0xff]
    %v2590 = vld [vmem:[%s96 + $0x1f0] sm:$0xff]
    %v2591 = vld [vmem:[%s96 + $0x1f8] sm:$0xff]
    %v2592 = vld [vmem:[%s96 + $0x200] sm:$0xff]
    %v2593 = vld [vmem:[%s96 + $0x208] sm:$0xff]
    %v2594 = vld [vmem:[%s96 + $0x210] sm:$0xff]
    %v2595 = vld [vmem:[%s96 + $0x218] sm:$0xff]
    %v2596 = vld [vmem:[%s96 + $0x220] sm:$0xff]
    %v2597 = vld [vmem:[%s96 + $0x228] sm:$0xff]
    %v2598 = vld [vmem:[%s96 + $0x230] sm:$0xff]
    %v2599 = vld [vmem:[%s96 + $0x238] sm:$0xff]
    %v2600 = vld [vmem:[%s96 + $0x240] sm:$0xff]
    %v2601 = vld [vmem:[%s96 + $0x248] sm:$0xff]
    %v2602 = vld [vmem:[%s96 + $0x250] sm:$0xff]
    %v2603 = vld [vmem:[%s96 + $0x258] sm:$0xff]
    %v2604 = vld [vmem:[%s96 + $0x260] sm:$0xff]
    %v2605 = vld [vmem:[%s96 + $0x268] sm:$0xff]
    %v2606 = vld [vmem:[%s96 + $0x270] sm:$0xff]
    %v2607 = vld [vmem:[%s96 + $0x278] sm:$0xff]
    %v2608 = vld [vmem:[%s96 + $0x280] sm:$0xff]
    %v2609 = vld [vmem:[%s96 + $0x288] sm:$0xff]
    %v2610 = vld [vmem:[%s96 + $0x290] sm:$0xff]
    %v2611 = vld [vmem:[%s96 + $0x298] sm:$0xff]
    %v2612 = vld [vmem:[%s96 + $0x2a0] sm:$0xff]
    %v2613 = vld [vmem:[%s96 + $0x2a8] sm:$0xff]
    %v2614 = vld [vmem:[%s96 + $0x2b0] sm:$0xff]
    %v2615 = vld [vmem:[%s96 + $0x2b8] sm:$0xff]
    %v2616 = vld [vmem:[%s96 + $0x2c0] sm:$0xff]
    %v2617 = vld [vmem:[%s96 + $0x2c8] sm:$0xff]
    %v2618 = vld [vmem:[%s96 + $0x2d0] sm:$0xff]
    %v2619 = vld [vmem:[%s96 + $0x2d8] sm:$0xff]
    %v2620 = vld [vmem:[%s96 + $0x2e0] sm:$0xff]
    %v2621 = vld [vmem:[%s96 + $0x2e8] sm:$0xff]
    %v2622 = vld [vmem:[%s96 + $0x2f0] sm:$0xff]
    %v2623 = vld [vmem:[%s96 + $0x2f8] sm:$0xff]
    %v2624 = vpack.c.bf16 %v2524, %v2524
    %v2625 = vpack.c.bf16 %v2525, %v2525
    %v2627 = vlaneseq
    %v2628 = vshrl.u32 %v2627, 7
    %v2629 = vsub.s32 0, %v2628
    %v2630 = vrot.slane %v123, %v2629
    %v2631 = vlaneseq
    %v2632 = vshrl.u32 %v2631, 7
    %v2633 = vsub.s32 1, %v2632
    %v2634 = vrot.slane %v123, %v2633
    %v2635 = vlaneseq
    %v2636 = vshrl.u32 %v2635, 7
    %v2637 = vsub.s32 2, %v2636
    %v2638 = vrot.slane %v123, %v2637
    %v2639 = vlaneseq
    %v2640 = vshrl.u32 %v2639, 7
    %v2641 = vsub.s32 3, %v2640
    %v2642 = vrot.slane %v123, %v2641
    %v2643 = vlaneseq
    %v2644 = vshrl.u32 %v2643, 7
    %v2645 = vsub.s32 4, %v2644
    %v2646 = vrot.slane %v123, %v2645
    %v2647 = vlaneseq
    %v2648 = vshrl.u32 %v2647, 7
    %v2649 = vsub.s32 5, %v2648
    %v2650 = vrot.slane %v123, %v2649
    %v2753 = vunpack.c.l.b16 %v2528
    %v2754 = vunpack.c.h.b16 %v2528
    %v2755 = vunpack.c.l.b16 %v2529
    %v2756 = vunpack.c.h.b16 %v2529
    %v2757 = vunpack.c.l.b16 %v2530
    %v2758 = vunpack.c.h.b16 %v2530
    %v2759 = vunpack.c.l.b16 %v2531
    %v2760 = vunpack.c.h.b16 %v2531
    %v2761 = vunpack.c.l.b16 %v2532
    %v2762 = vunpack.c.h.b16 %v2532
    %v2763 = vunpack.c.l.b16 %v2533
    %v2764 = vunpack.c.h.b16 %v2533
    %v2765 = vunpack.c.l.b16 %v2534
    %v2766 = vunpack.c.h.b16 %v2534
    %v2767 = vunpack.c.l.b16 %v2535
    %v2768 = vunpack.c.h.b16 %v2535
    %v2769 = vunpack.c.l.b16 %v2536
    %v2770 = vunpack.c.h.b16 %v2536
    %v2771 = vunpack.c.l.b16 %v2537
    %v2772 = vunpack.c.h.b16 %v2537
    %v2773 = vunpack.c.l.b16 %v2538
    %v2774 = vunpack.c.h.b16 %v2538
    %v2775 = vunpack.c.l.b16 %v2539
    %v2776 = vunpack.c.h.b16 %v2539
    %v2777 = vunpack.c.l.b16 %v2540
    %v2778 = vunpack.c.h.b16 %v2540
    %v2779 = vunpack.c.l.b16 %v2541
    %v2780 = vunpack.c.h.b16 %v2541
    %v2781 = vunpack.c.l.b16 %v2542
    %v2782 = vunpack.c.h.b16 %v2542
    %v2783 = vunpack.c.l.b16 %v2543
    %v2784 = vunpack.c.h.b16 %v2543
    %v2785 = vunpack.c.l.b16 %v2544
    %v2786 = vunpack.c.h.b16 %v2544
    %v2787 = vunpack.c.l.b16 %v2545
    %v2788 = vunpack.c.h.b16 %v2545
    %v2789 = vunpack.c.l.b16 %v2546
    %v2790 = vunpack.c.h.b16 %v2546
    %v2791 = vunpack.c.l.b16 %v2547
    %v2792 = vunpack.c.h.b16 %v2547
    %v2793 = vunpack.c.l.b16 %v2548
    %v2794 = vunpack.c.h.b16 %v2548
    %v2795 = vunpack.c.l.b16 %v2549
    %v2796 = vunpack.c.h.b16 %v2549
    %v2797 = vunpack.c.l.b16 %v2550
    %v2798 = vunpack.c.h.b16 %v2550
    %v2799 = vunpack.c.l.b16 %v2551
    %v2800 = vunpack.c.h.b16 %v2551
    %v2801 = vunpack.c.l.b16 %v2552
    %v2802 = vunpack.c.h.b16 %v2552
    %v2803 = vunpack.c.l.b16 %v2553
    %v2804 = vunpack.c.h.b16 %v2553
    %v2805 = vunpack.c.l.b16 %v2554
    %v2806 = vunpack.c.h.b16 %v2554
    %v2807 = vunpack.c.l.b16 %v2555
    %v2808 = vunpack.c.h.b16 %v2555
    %v2809 = vunpack.c.l.b16 %v2556
    %v2810 = vunpack.c.h.b16 %v2556
    %v2811 = vunpack.c.l.b16 %v2557
    %v2812 = vunpack.c.h.b16 %v2557
    %v2813 = vunpack.c.l.b16 %v2558
    %v2814 = vunpack.c.h.b16 %v2558
    %v2815 = vunpack.c.l.b16 %v2559
    %v2816 = vunpack.c.h.b16 %v2559
    %v2817 = vunpack.c.l.b16 %v2560
    %v2818 = vunpack.c.h.b16 %v2560
    %v2819 = vunpack.c.l.b16 %v2561
    %v2820 = vunpack.c.h.b16 %v2561
    %v2821 = vunpack.c.l.b16 %v2562
    %v2822 = vunpack.c.h.b16 %v2562
    %v2823 = vunpack.c.l.b16 %v2563
    %v2824 = vunpack.c.h.b16 %v2563
    %v2825 = vunpack.c.l.b16 %v2564
    %v2826 = vunpack.c.h.b16 %v2564
    %v2827 = vunpack.c.l.b16 %v2565
    %v2828 = vunpack.c.h.b16 %v2565
    %v2829 = vunpack.c.l.b16 %v2566
    %v2830 = vunpack.c.h.b16 %v2566
    %v2831 = vunpack.c.l.b16 %v2567
    %v2832 = vunpack.c.h.b16 %v2567
    %v2833 = vunpack.c.l.b16 %v2568
    %v2834 = vunpack.c.h.b16 %v2568
    %v2835 = vunpack.c.l.b16 %v2569
    %v2836 = vunpack.c.h.b16 %v2569
    %v2837 = vunpack.c.l.b16 %v2570
    %v2838 = vunpack.c.h.b16 %v2570
    %v2839 = vunpack.c.l.b16 %v2571
    %v2840 = vunpack.c.h.b16 %v2571
    %v2841 = vunpack.c.l.b16 %v2572
    %v2842 = vunpack.c.h.b16 %v2572
    %v2843 = vunpack.c.l.b16 %v2573
    %v2844 = vunpack.c.h.b16 %v2573
    %v2845 = vunpack.c.l.b16 %v2574
    %v2846 = vunpack.c.h.b16 %v2574
    %v2847 = vunpack.c.l.b16 %v2575
    %v2848 = vunpack.c.h.b16 %v2575
    %v2849 = vunpack.c.l.b16 %v2576
    %v2850 = vunpack.c.h.b16 %v2576
    %v2851 = vunpack.c.l.b16 %v2577
    %v2852 = vunpack.c.h.b16 %v2577
    %v2853 = vunpack.c.l.b16 %v2578
    %v2854 = vunpack.c.h.b16 %v2578
    %v2855 = vunpack.c.l.b16 %v2579
    %v2856 = vunpack.c.h.b16 %v2579
    %v2857 = vunpack.c.l.b16 %v2580
    %v2858 = vunpack.c.h.b16 %v2580
    %v2859 = vunpack.c.l.b16 %v2581
    %v2860 = vunpack.c.h.b16 %v2581
    %v2861 = vunpack.c.l.b16 %v2582
    %v2862 = vunpack.c.h.b16 %v2582
    %v2863 = vunpack.c.l.b16 %v2583
    %v2864 = vunpack.c.h.b16 %v2583
    %v2865 = vunpack.c.l.b16 %v2584
    %v2866 = vunpack.c.h.b16 %v2584
    %v2867 = vunpack.c.l.b16 %v2585
    %v2868 = vunpack.c.h.b16 %v2585
    %v2869 = vunpack.c.l.b16 %v2586
    %v2870 = vunpack.c.h.b16 %v2586
    %v2871 = vunpack.c.l.b16 %v2587
    %v2872 = vunpack.c.h.b16 %v2587
    %v2873 = vunpack.c.l.b16 %v2588
    %v2874 = vunpack.c.h.b16 %v2588
    %v2875 = vunpack.c.l.b16 %v2589
    %v2876 = vunpack.c.h.b16 %v2589
    %v2877 = vunpack.c.l.b16 %v2590
    %v2878 = vunpack.c.h.b16 %v2590
    %v2879 = vunpack.c.l.b16 %v2591
    %v2880 = vunpack.c.h.b16 %v2591
    %v2881 = vunpack.c.l.b16 %v2592
    %v2882 = vunpack.c.h.b16 %v2592
    %v2883 = vunpack.c.l.b16 %v2593
    %v2884 = vunpack.c.h.b16 %v2593
    %v2885 = vunpack.c.l.b16 %v2594
    %v2886 = vunpack.c.h.b16 %v2594
    %v2887 = vunpack.c.l.b16 %v2595
    %v2888 = vunpack.c.h.b16 %v2595
    %v2889 = vunpack.c.l.b16 %v2596
    %v2890 = vunpack.c.h.b16 %v2596
    %v2891 = vunpack.c.l.b16 %v2597
    %v2892 = vunpack.c.h.b16 %v2597
    %v2893 = vunpack.c.l.b16 %v2598
    %v2894 = vunpack.c.h.b16 %v2598
    %v2895 = vunpack.c.l.b16 %v2599
    %v2896 = vunpack.c.h.b16 %v2599
    %v2897 = vunpack.c.l.b16 %v2600
    %v2898 = vunpack.c.h.b16 %v2600
    %v2899 = vunpack.c.l.b16 %v2601
    %v2900 = vunpack.c.h.b16 %v2601
    %v2901 = vunpack.c.l.b16 %v2602
    %v2902 = vunpack.c.h.b16 %v2602
    %v2903 = vunpack.c.l.b16 %v2603
    %v2904 = vunpack.c.h.b16 %v2603
    %v2905 = vunpack.c.l.b16 %v2604
    %v2906 = vunpack.c.h.b16 %v2604
    %v2907 = vunpack.c.l.b16 %v2605
    %v2908 = vunpack.c.h.b16 %v2605
    %v2909 = vunpack.c.l.b16 %v2606
    %v2910 = vunpack.c.h.b16 %v2606
    %v2911 = vunpack.c.l.b16 %v2607
    %v2912 = vunpack.c.h.b16 %v2607
    %v2913 = vunpack.c.l.b16 %v2608
    %v2914 = vunpack.c.h.b16 %v2608
    %v2915 = vunpack.c.l.b16 %v2609
    %v2916 = vunpack.c.h.b16 %v2609
    %v2917 = vunpack.c.l.b16 %v2610
    %v2918 = vunpack.c.h.b16 %v2610
    %v2919 = vunpack.c.l.b16 %v2611
    %v2920 = vunpack.c.h.b16 %v2611
    %v2921 = vunpack.c.l.b16 %v2612
    %v2922 = vunpack.c.h.b16 %v2612
    %v2923 = vunpack.c.l.b16 %v2613
    %v2924 = vunpack.c.h.b16 %v2613
    %v2925 = vunpack.c.l.b16 %v2614
    %v2926 = vunpack.c.h.b16 %v2614
    %v2927 = vunpack.c.l.b16 %v2615
    %v2928 = vunpack.c.h.b16 %v2615
    %v2929 = vunpack.c.l.b16 %v2616
    %v2930 = vunpack.c.h.b16 %v2616
    %v2931 = vunpack.c.l.b16 %v2617
    %v2932 = vunpack.c.h.b16 %v2617
    %v2933 = vunpack.c.l.b16 %v2618
    %v2934 = vunpack.c.h.b16 %v2618
    %v2935 = vunpack.c.l.b16 %v2619
    %v2936 = vunpack.c.h.b16 %v2619
    %v2937 = vunpack.c.l.b16 %v2620
    %v2938 = vunpack.c.h.b16 %v2620
    %v2939 = vunpack.c.l.b16 %v2621
    %v2940 = vunpack.c.h.b16 %v2621
    %v2941 = vunpack.c.l.b16 %v2622
    %v2942 = vunpack.c.h.b16 %v2622
    %v2943 = vunpack.c.l.b16 %v2623
    %v2944 = vunpack.c.h.b16 %v2623
    %v2945 = vpack.c.b16 %v2759, %v2753
    %v2946 = vpack.c.b16 %v2760, %v2754
    %v2947 = vpack.c.b16 %v2761, %v2755
    %v2948 = vpack.c.b16 %v2762, %v2756
    %v2949 = vpack.c.b16 %v2763, %v2757
    %v2950 = vpack.c.b16 %v2764, %v2758
    %v2951 = vpack.c.b16 %v2771, %v2765
    %v2952 = vpack.c.b16 %v2772, %v2766
    %v2953 = vpack.c.b16 %v2773, %v2767
    %v2954 = vpack.c.b16 %v2774, %v2768
    %v2955 = vpack.c.b16 %v2775, %v2769
    %v2956 = vpack.c.b16 %v2776, %v2770
    %v2957 = vpack.c.b16 %v2783, %v2777
    %v2958 = vpack.c.b16 %v2784, %v2778
    %v2959 = vpack.c.b16 %v2785, %v2779
    %v2960 = vpack.c.b16 %v2786, %v2780
    %v2961 = vpack.c.b16 %v2787, %v2781
    %v2962 = vpack.c.b16 %v2788, %v2782
    %v2963 = vpack.c.b16 %v2795, %v2789
    %v2964 = vpack.c.b16 %v2796, %v2790
    %v2965 = vpack.c.b16 %v2797, %v2791
    %v2966 = vpack.c.b16 %v2798, %v2792
    %v2967 = vpack.c.b16 %v2799, %v2793
    %v2968 = vpack.c.b16 %v2800, %v2794
    %v2969 = vpack.c.b16 %v2807, %v2801
    %v2970 = vpack.c.b16 %v2808, %v2802
    %v2971 = vpack.c.b16 %v2809, %v2803
    %v2972 = vpack.c.b16 %v2810, %v2804
    %v2973 = vpack.c.b16 %v2811, %v2805
    %v2974 = vpack.c.b16 %v2812, %v2806
    %v2975 = vpack.c.b16 %v2819, %v2813
    %v2976 = vpack.c.b16 %v2820, %v2814
    %v2977 = vpack.c.b16 %v2821, %v2815
    %v2978 = vpack.c.b16 %v2822, %v2816
    %v2979 = vpack.c.b16 %v2823, %v2817
    %v2980 = vpack.c.b16 %v2824, %v2818
    %v2981 = vpack.c.b16 %v2831, %v2825
    %v2982 = vpack.c.b16 %v2832, %v2826
    %v2983 = vpack.c.b16 %v2833, %v2827
    %v2984 = vpack.c.b16 %v2834, %v2828
    %v2985 = vpack.c.b16 %v2835, %v2829
    %v2986 = vpack.c.b16 %v2836, %v2830
    %v2987 = vpack.c.b16 %v2843, %v2837
    %v2988 = vpack.c.b16 %v2844, %v2838
    %v2989 = vpack.c.b16 %v2845, %v2839
    %v2990 = vpack.c.b16 %v2846, %v2840
    %v2991 = vpack.c.b16 %v2847, %v2841
    %v2992 = vpack.c.b16 %v2848, %v2842
    %v2993 = vpack.c.b16 %v2855, %v2849
    %v2994 = vpack.c.b16 %v2856, %v2850
    %v2995 = vpack.c.b16 %v2857, %v2851
    %v2996 = vpack.c.b16 %v2858, %v2852
    %v2997 = vpack.c.b16 %v2859, %v2853
    %v2998 = vpack.c.b16 %v2860, %v2854
    %v2999 = vpack.c.b16 %v2867, %v2861
    %v3000 = vpack.c.b16 %v2868, %v2862
    %v3001 = vpack.c.b16 %v2869, %v2863
    %v3002 = vpack.c.b16 %v2870, %v2864
    %v3003 = vpack.c.b16 %v2871, %v2865
    %v3004 = vpack.c.b16 %v2872, %v2866
    %v3005 = vpack.c.b16 %v2879, %v2873
    %v3006 = vpack.c.b16 %v2880, %v2874
    %v3007 = vpack.c.b16 %v2881, %v2875
    %v3008 = vpack.c.b16 %v2882, %v2876
    %v3009 = vpack.c.b16 %v2883, %v2877
    %v3010 = vpack.c.b16 %v2884, %v2878
    %v3011 = vpack.c.b16 %v2891, %v2885
    %v3012 = vpack.c.b16 %v2892, %v2886
    %v3013 = vpack.c.b16 %v2893, %v2887
    %v3014 = vpack.c.b16 %v2894, %v2888
    %v3015 = vpack.c.b16 %v2895, %v2889
    %v3016 = vpack.c.b16 %v2896, %v2890
    %v3017 = vpack.c.b16 %v2903, %v2897
    %v3018 = vpack.c.b16 %v2904, %v2898
    %v3019 = vpack.c.b16 %v2905, %v2899
    %v3020 = vpack.c.b16 %v2906, %v2900
    %v3021 = vpack.c.b16 %v2907, %v2901
    %v3022 = vpack.c.b16 %v2908, %v2902
    %v3023 = vpack.c.b16 %v2915, %v2909
    %v3024 = vpack.c.b16 %v2916, %v2910
    %v3025 = vpack.c.b16 %v2917, %v2911
    %v3026 = vpack.c.b16 %v2918, %v2912
    %v3027 = vpack.c.b16 %v2919, %v2913
    %v3028 = vpack.c.b16 %v2920, %v2914
    %v3029 = vpack.c.b16 %v2927, %v2921
    %v3030 = vpack.c.b16 %v2928, %v2922
    %v3031 = vpack.c.b16 %v2929, %v2923
    %v3032 = vpack.c.b16 %v2930, %v2924
    %v3033 = vpack.c.b16 %v2931, %v2925
    %v3034 = vpack.c.b16 %v2932, %v2926
    %v3035 = vpack.c.b16 %v2939, %v2933
    %v3036 = vpack.c.b16 %v2940, %v2934
    %v3037 = vpack.c.b16 %v2941, %v2935
    %v3038 = vpack.c.b16 %v2942, %v2936
    %v3039 = vpack.c.b16 %v2943, %v2937
    %v3040 = vpack.c.b16 %v2944, %v2938
    %3137 = vmatprep.subr.bf16.mxu0 %v2988
    %3138 = vmatpush1.bf16.msra.mxu0 %v2987
    %3139 = vmatprep.subr.bf16.mxu0 %v2982
    %3140 = vmatpush1.bf16.msra.mxu0 %v2981
    %3141 = vmatprep.subr.bf16.mxu0 %v2976
    %3142 = vmatpush1.bf16.msra.mxu0 %v2975
    %3143 = vmatprep.subr.bf16.mxu0 %v2970
    %3144 = vmatpush1.bf16.msra.mxu0 %v2969
    %3145 = vmatprep.subr.bf16.mxu0 %v2964
    %3146 = vmatpush1.bf16.msra.mxu0 %v2963
    %3147 = vmatprep.subr.bf16.mxu0 %v2958
    %3148 = vmatpush1.bf16.msra.mxu0 %v2957
    %3149 = vmatprep.subr.bf16.mxu0 %v2952
    %3150 = vmatpush1.bf16.msra.mxu0 %v2951
    %3151 = vmatprep.subr.bf16.mxu0 %v2946
    %3152 = vmatpush1.bf16.msra.mxu0 %v2945
    %3153 = vmatprep.subr.bf16.mxu0 %v3036
    %3154 = vmatpush2.bf16.msra.mxu0 %v3035
    %3155 = vmatprep.subr.bf16.mxu0 %v3030
    %3156 = vmatpush2.bf16.msra.mxu0 %v3029
    %3157 = vmatprep.subr.bf16.mxu0 %v3024
    %3158 = vmatpush2.bf16.msra.mxu0 %v3023
    %3159 = vmatprep.subr.bf16.mxu0 %v3018
    %3160 = vmatpush2.bf16.msra.mxu0 %v3017
    %3161 = vmatprep.subr.bf16.mxu0 %v3012
    %3162 = vmatpush2.bf16.msra.mxu0 %v3011
    %3163 = vmatprep.subr.bf16.mxu0 %v3006
    %3164 = vmatpush2.bf16.msra.mxu0 %v3005
    %3165 = vmatprep.subr.bf16.mxu0 %v3000
    %3166 = vmatpush2.bf16.msra.mxu0 %v2999
    %3167 = vmatprep.subr.bf16.mxu0 %v2994
    %3168 = vmatpush2.bf16.msra.mxu0 %v2993
    %3169 = vmatprep.mubr.bf16.mxu0 %v2625
    %3170 = vmatmul.mubr.bf16.gmra.mxu0 %v2624
    %v3171 = vpop.f32.mrf.mxu0
    %v3172 = vadd.f32 %v2630, %v3171
    %v3173 = vpop.f32.mrf.mxu0
    %v3174 = vadd.f32 %v2634, %v3173
    %v3175 = vpop.f32.mrf.mxu0
    %v3176 = vpop.f32.mrf.mxu0
    %3177 = vdwg.mxu0
    %3178 = vmatprep.subr.bf16.mxu0 %v2990
    %3179 = vmatpush1.bf16.msra.mxu0 %v2989
    %3180 = vmatprep.subr.bf16.mxu0 %v2984
    %3181 = vmatpush1.bf16.msra.mxu0 %v2983
    %3182 = vmatprep.subr.bf16.mxu0 %v2978
    %3183 = vmatpush1.bf16.msra.mxu0 %v2977
    %3184 = vmatprep.subr.bf16.mxu0 %v2972
    %3185 = vmatpush1.bf16.msra.mxu0 %v2971
    %3186 = vmatprep.subr.bf16.mxu0 %v2966
    %3187 = vmatpush1.bf16.msra.mxu0 %v2965
    %3188 = vmatprep.subr.bf16.mxu0 %v2960
    %3189 = vmatpush1.bf16.msra.mxu0 %v2959
    %3190 = vmatprep.subr.bf16.mxu0 %v2954
    %3191 = vmatpush1.bf16.msra.mxu0 %v2953
    %3192 = vmatprep.subr.bf16.mxu0 %v2948
    %3193 = vmatpush1.bf16.msra.mxu0 %v2947
    %3194 = vmatprep.subr.bf16.mxu0 %v3038
    %3195 = vmatpush2.bf16.msra.mxu0 %v3037
    %3196 = vmatprep.subr.bf16.mxu0 %v3032
    %3197 = vmatpush2.bf16.msra.mxu0 %v3031
    %3198 = vmatprep.subr.bf16.mxu0 %v3026
    %3199 = vmatpush2.bf16.msra.mxu0 %v3025
    %3200 = vmatprep.subr.bf16.mxu0 %v3020
    %3201 = vmatpush2.bf16.msra.mxu0 %v3019
    %3202 = vmatprep.subr.bf16.mxu0 %v3014
    %3203 = vmatpush2.bf16.msra.mxu0 %v3013
    %3204 = vmatprep.subr.bf16.mxu0 %v3008
    %3205 = vmatpush2.bf16.msra.mxu0 %v3007
    %3206 = vmatprep.subr.bf16.mxu0 %v3002
    %3207 = vmatpush2.bf16.msra.mxu0 %v3001
    %3208 = vmatprep.subr.bf16.mxu0 %v2996
    %3209 = vmatpush2.bf16.msra.mxu0 %v2995
    %3210 = vmatprep.mubr.bf16.mxu0 %v2625
    %3211 = vmatmul.mubr.bf16.gmra.mxu0 %v2624
    %v3212 = vpop.f32.mrf.mxu0
    %v3213 = vadd.f32 %v2638, %v3212
    %v3214 = vpop.f32.mrf.mxu0
    %v3215 = vadd.f32 %v2642, %v3214
    %v3216 = vpop.f32.mrf.mxu0
    %v3217 = vpop.f32.mrf.mxu0
    %3218 = vdwg.mxu0
    %3219 = vmatprep.subr.bf16.mxu0 %v2992
    %3220 = vmatpush1.bf16.msra.mxu0 %v2991
    %3221 = vmatprep.subr.bf16.mxu0 %v2986
    %3222 = vmatpush1.bf16.msra.mxu0 %v2985
    %3223 = vmatprep.subr.bf16.mxu0 %v2980
    %3224 = vmatpush1.bf16.msra.mxu0 %v2979
    %3225 = vmatprep.subr.bf16.mxu0 %v2974
    %3226 = vmatpush1.bf16.msra.mxu0 %v2973
    %3227 = vmatprep.subr.bf16.mxu0 %v2968
    %3228 = vmatpush1.bf16.msra.mxu0 %v2967
    %3229 = vmatprep.subr.bf16.mxu0 %v2962
    %3230 = vmatpush1.bf16.msra.mxu0 %v2961
    %3231 = vmatprep.subr.bf16.mxu0 %v2956
    %3232 = vmatpush1.bf16.msra.mxu0 %v2955
    %3233 = vmatprep.subr.bf16.mxu0 %v2950
    %3234 = vmatpush1.bf16.msra.mxu0 %v2949
    %3235 = vmatprep.subr.bf16.mxu0 %v3040
    %3236 = vmatpush2.bf16.msra.mxu0 %v3039
    %3237 = vmatprep.subr.bf16.mxu0 %v3034
    %3238 = vmatpush2.bf16.msra.mxu0 %v3033
    %3239 = vmatprep.subr.bf16.mxu0 %v3028
    %3240 = vmatpush2.bf16.msra.mxu0 %v3027
    %3241 = vmatprep.subr.bf16.mxu0 %v3022
    %3242 = vmatpush2.bf16.msra.mxu0 %v3021
    %3243 = vmatprep.subr.bf16.mxu0 %v3016
    %3244 = vmatpush2.bf16.msra.mxu0 %v3015
    %3245 = vmatprep.subr.bf16.mxu0 %v3010
    %3246 = vmatpush2.bf16.msra.mxu0 %v3009
    %3247 = vmatprep.subr.bf16.mxu0 %v3004
    %3248 = vmatpush2.bf16.msra.mxu0 %v3003
    %3249 = vmatprep.subr.bf16.mxu0 %v2998
    %3250 = vmatpush2.bf16.msra.mxu0 %v2997
    %3251 = vmatprep.mubr.bf16.mxu0 %v2625
    %3252 = vmatmul.mubr.bf16.gmra.mxu0 %v2624
    %v3253 = vpop.f32.mrf.mxu0
    %v3254 = vadd.f32 %v2646, %v3253
    %v3255 = vpop.f32.mrf.mxu0
    %v3256 = vadd.f32 %v2650, %v3255
    %v3257 = vpop.f32.mrf.mxu0
    %v3258 = vpop.f32.mrf.mxu0
    %3259 = vdwg.mxu0
    %v3260 = vxor.u32 %v3172, 2147483648
    %v3261 = vxor.u32 %v3174, 2147483648
    %v3262 = vmul.f32 %v3260, 1.442695
    %v3263 = vpow.pop %v3262
    %v3264 = vmul.f32 %v3261, 1.442695
    %v3265 = vpow.pop %v3264
    %v3266 = vadd.f32 %v3263, 1.0
    %v3267 = vadd.f32 %v3265, 1.0
    %v3268 = vrcp.pop %v3266
    %v3269 = vmul.f32 1.0, %v3268
    %v3270 = vrcp.pop %v3267
    %v3271 = vmul.f32 1.0, %v3270
    %v3272 = vtanh.pop %v3213
    %v3273 = vtanh.pop %v3215
    %v3274 = vxor.u32 %v3254, 2147483648
    %v3275 = vxor.u32 %v3256, 2147483648
    %v3276 = vmul.f32 %v3274, 1.442695
    %v3277 = vpow.pop %v3276
    %v3278 = vmul.f32 %v3275, 1.442695
    %v3279 = vpow.pop %v3278
    %v3280 = vadd.f32 %v3277, 1.0
    %v3281 = vadd.f32 %v3279, 1.0
    %v3282 = vrcp.pop %v3280
    %v3283 = vmul.f32 1.0, %v3282
    %v3284 = vrcp.pop %v3281
    %v3285 = vmul.f32 1.0, %v3284
    %v3286 = vmul.f32 %v3269, %v3272
    %v3287 = vmul.f32 %v3271, %v3273
    %v3288 = vtanh.pop %v3286
    %v3289 = vtanh.pop %v3287
    %v3290 = vmul.f32 %v3283, %v3288
    %v3291 = vmul.f32 %v3285, %v3289
    %v3293 = vlaneseq
    %v3294 = vshrl.u32 %v3293, 7
    %v3295 = vsub.s32 0, %v3294
    %v3296 = vrot.slane %v125, %v3295
    %v3297 = vlaneseq
    %v3298 = vshrl.u32 %v3297, 7
    %v3299 = vsub.s32 1, %v3298
    %v3300 = vrot.slane %v125, %v3299
    %v3303 = vmul.f32 %v3290, %v3296
    %v3304 = vmul.f32 %v3291, %v3300
    %vm3305 = vcmask 1041408
    %v3306 = vsel %vm3305, %v3303, 0.0
    %v3307 = vsel %vm3305, %v3304, 0.0
    %v3308 = vadd.f32 %v3306, %v3307
    %3309 = vadd.xlane.f32.xlu0 %v3308
    %v3310 = vpop.xlane.xlu0 %3309
    %v3311 = vadd.f32 %v3310, %v126
    %vm3312 = vcmask 1024
    %3313 = vst.msk [vmem:[%s5] sm:$0x3] %vm3312, %v3311
    // Predicated region
    $region46: #{tpu_custom_call.1} parent=1 // pred_check
      _
    $region47: #{tpu_custom_call.1} parent=1 // pred_check_branch
      %3315 = sbr.rel (0) target = $region49
    $region48: #{tpu_custom_call.1} parent=1 // pred_region
      _
    $region49: #{tpu_custom_call.1} parent=1 // pred_fallthru
      _
    // Predicated region
    $region50: #{tpu_custom_call.1} parent=1 // pred_check
      _
    $region51: #{tpu_custom_call.1} parent=1 // pred_check_branch
      %3317 = sbr.rel (0) target = $region53
    $region52: #{tpu_custom_call.1} parent=1 // pred_region
      _
    $region53: #{tpu_custom_call.1} parent=1 // pred_fallthru
      _
    %3318 = vsyncpa [#allocation5], 1
    %3319 = vsyncpa [#allocation7], 1
    %3320 = vsyncpa [#allocation10], 1
  %3321 = vsyncmov [#allocation3]
  %s3322 = vpop.sfrf %3321
  %p3323 = scmp.eq.s32.totalorder %s3322, 0
  %p3324 = pneg %p3323
  %3326 = shalt.err (%p3324)
  %s3327 = scalar_lea.sflag [#allocation3], 1
  %3328 = vsyncmov %s3327
  %s3329 = vpop.sfrf %3328
  %p3330 = scmp.eq.s32.totalorder %s3329, 0
  %p3331 = pneg %p3330
  %3333 = shalt.err (%p3331)
  %s3334 = scalar_lea.sflag [#allocation3], 2
  %3335 = vsyncmov %s3334
  %s3336 = vpop.sfrf %3335
  %p3337 = scmp.eq.s32.totalorder %s3336, 0
  %p3338 = pneg %p3337
  %3340 = shalt.err (%p3338)

</llo_original>
